<compile_context>
chip_gen: v6e
topology: v6e:2x2x1
jax: 0.10.0
libtpu: 0.0.40
codegen_flags: <defaults>
</compile_context>

<pallas_src>
import jax
import jax.numpy as jnp
from jax.experimental import pallas as pl
from jax.experimental.pallas import tpu as pltpu


# ----------------------------------------------------------------------------
# Fused conv kernel:
#   [optional 2x2 maxpool] -> [optional BN-apply + ReLU] -> im2col ->
#   single 3x3-conv matmul + bias
#   + per-channel (pre-bias) sum / sum-of-squares for the following BatchNorm.
# ----------------------------------------------------------------------------
def _make_conv_kernel(nb, hp, wp, cin, cout, do_pool, do_bn_relu):
    m = nb * hp * wp

    def kernel(x_ref, scale_ref, shift_ref, w_ref, b_ref,
               out_ref, sum_ref, sumsq_ref, xpad_ref):
        # ---- prologue: fused 2x2 max-pool and/or BN-apply + ReLU -----------
        if do_pool:
            # x_ref is pool-packed: (nb*hp, 2, wp, 2*cin); lane j = s*cin + c
            # holds x[n, 2*h + r, 2*w + s, c], so the 2x2 max is two maxima.
            x4 = x_ref[...]                                    # bf16
            rows = jnp.maximum(x4[:, 0], x4[:, 1])             # (nb*hp, wp, 2*cin)
            h = jnp.maximum(rows[..., :cin], rows[..., cin:])  # (nb*hp, wp, cin)
            h = h.reshape(nb, hp, wp, cin)
        else:
            h = x_ref[...]                                     # (nb, hp, wp, cin) bf16
        if do_bn_relu:
            s = scale_ref[...].reshape(1, 1, 1, cin)
            t = shift_ref[...].reshape(1, 1, 1, cin)
            h = jnp.maximum(h.astype(jnp.float32) * s + t, 0.0)
        h = h.astype(jnp.bfloat16)

        # ---- 1-pixel halo in bf16 VMEM; zero ring written only once --------
        @pl.when(pl.program_id(0) == 0)
        def _zero_halo():
            xpad_ref[...] = jnp.zeros_like(xpad_ref)

        xpad_ref[:, 1:hp + 1, 1:wp + 1, :] = h

        # ---- im2col: (m, 9*cin) bf16 patch matrix -> ONE MXU matmul --------
        parts = []
        for ky in range(3):
            for kx in range(3):
                parts.append(
                    xpad_ref[:, ky:ky + hp, kx:kx + wp, :].reshape(m, cin))
        patches = jnp.concatenate(parts, axis=-1)              # (m, 9*cin) bf16
        acc = jnp.dot(patches, w_ref[...],
                      preferred_element_type=jnp.float32)      # (m, cout) f32, in vregs

        out_ref[...] = (acc + b_ref[...]).astype(out_ref.dtype)

        # ---- per-channel pre-bias batch statistics for the following BN ----
        @pl.when(pl.program_id(0) == 0)
        def _init_stats():
            sum_ref[...] = jnp.zeros_like(sum_ref)
            sumsq_ref[...] = jnp.zeros_like(sumsq_ref)

        sum_ref[...] += jnp.sum(acc, axis=0, keepdims=True)
        sumsq_ref[...] += jnp.sum(acc * acc, axis=0, keepdims=True)

    return kernel


def _pick_batch_tile(n, rows_per_image, target_rows=256):
    """Largest divisor of n keeping M = nb*rows_per_image near target_rows."""
    nb = max(1, min(n, target_rows // max(rows_per_image, 1)))
    while n % nb:
        nb -= 1
    return nb


def fused_conv3x3(x, w, b, scale, shift, *, batch, pooled_hw,
                  do_pool, do_bn_relu, out_dtype=jnp.bfloat16):
    """Returns (conv_out_flat (N*Hp*Wp, Cout), sum, sumsq) — sums are pre-bias f32."""
    n = batch
    hp, wp = pooled_hw
    cin, cout = w.shape[2], w.shape[3]
    nb = _pick_batch_tile(n, hp * wp)
    m = nb * hp * wp
    grid = (n // nb,)

    w2d = w.reshape(9 * cin, cout).astype(jnp.bfloat16)   # im2col weight layout
    b2d = b.reshape(1, cout).astype(jnp.float32)

    if do_pool:
        x_spec = pl.BlockSpec((nb * hp, 2, wp, 2 * cin), lambda i: (i, 0, 0, 0))
    else:
        x_spec = pl.BlockSpec((nb, hp, wp, cin), lambda i: (i, 0, 0, 0))

    kernel = _make_conv_kernel(nb, hp, wp, cin, cout, do_pool, do_bn_relu)

    out, s, ss = pl.pallas_call(
        kernel,
        out_shape=(
            jax.ShapeDtypeStruct((n * hp * wp, cout), out_dtype),
            jax.ShapeDtypeStruct((1, cout), jnp.float32),
            jax.ShapeDtypeStruct((1, cout), jnp.float32),
        ),
        grid=grid,
        in_specs=[
            x_spec,
            pl.BlockSpec((1, cin), lambda i: (0, 0)),
            pl.BlockSpec((1, cin), lambda i: (0, 0)),
            pl.BlockSpec((9 * cin, cout), lambda i: (0, 0)),
            pl.BlockSpec((1, cout), lambda i: (0, 0)),
        ],
        out_specs=(
            pl.BlockSpec((m, cout), lambda i: (i, 0)),
            pl.BlockSpec((1, cout), lambda i: (0, 0)),   # stats accumulate over grid
            pl.BlockSpec((1, cout), lambda i: (0, 0)),
        ),
        scratch_shapes=[
            pltpu.VMEM((nb, hp + 2, wp + 2, cin), jnp.bfloat16),  # bf16 halo tile
        ],
        compiler_params=pltpu.CompilerParams(
            dimension_semantics=("arbitrary",),   # stats accumulate across batch tiles
            vmem_limit_bytes=32 * 1024 * 1024,
        ),
    )(x, scale, shift, w2d, b2d)
    return out, s[0], ss[0]


# ----------------------------------------------------------------------------
# Final BatchNorm-apply + ReLU (the only BN with no following conv to fuse into)
# Lane-dense: (M, C) with C < 128 is viewed as (M/f, 128) so stores are unmasked.
# ----------------------------------------------------------------------------
def _bn_relu_kernel(x_ref, scale_ref, shift_ref, o_ref):
    o_ref[...] = jnp.maximum(
        x_ref[...].astype(jnp.float32) * scale_ref[...] + shift_ref[...], 0.0)


def bn_relu_apply(x_flat, scale, shift):
    m_total, c = x_flat.shape
    fold = 1
    if c < 128 and 128 % c == 0 and m_total % (128 // c) == 0:
        fold = 128 // c
    md, cd = m_total // fold, c * fold
    x_d = x_flat.reshape(md, cd)                      # free reshape (same layout)
    scale_d = jnp.tile(scale.reshape(1, c), (1, fold))
    shift_d = jnp.tile(shift.reshape(1, c), (1, fold))

    tile_m = md
    for cand in (2048, 1024, 512, 256):
        if md > cand and md % cand == 0:
            tile_m = cand
            break

    out = pl.pallas_call(
        _bn_relu_kernel,
        out_shape=jax.ShapeDtypeStruct((md, cd), jnp.float32),
        grid=(md // tile_m,),
        in_specs=[
            pl.BlockSpec((tile_m, cd), lambda i: (i, 0)),
            pl.BlockSpec((1, cd), lambda i: (0, 0)),
            pl.BlockSpec((1, cd), lambda i: (0, 0)),
        ],
        out_specs=pl.BlockSpec((tile_m, cd), lambda i: (i, 0)),
        compiler_params=pltpu.CompilerParams(
            dimension_semantics=("parallel",),
            vmem_limit_bytes=32 * 1024 * 1024,
        ),
    )(x_d, scale_d, shift_d)
    return out.reshape(m_total, c)


# ----------------------------------------------------------------------------
# Module glue (plain JAX: per-channel scalar math + free reshapes only)
# ----------------------------------------------------------------------------
def _fold_bn(mean, var, gamma, beta, eps=1e-5):
    inv = jax.lax.rsqrt(jnp.maximum(var, 0.0) + eps)
    scale = (gamma * inv).reshape(1, -1).astype(jnp.float32)
    shift = (beta - mean * gamma * inv).reshape(1, -1).astype(jnp.float32)
    return scale, shift


@jax.jit
def downsample_forward(x_nchw, params):
    # NCHW -> NHWC, bf16 (MXU dtype; max-pool commutes with the monotone cast).
    x = jnp.transpose(x_nchw, (0, 2, 3, 1)).astype(jnp.bfloat16)
    n, h, w, cin = x.shape
    assert h % 2 == 0 and w % 2 == 0, "MaxPool2d(2) path assumes even H, W"
    hp, wp = h // 2, w // 2
    # Pool-packed layout (free contiguous reshape): the kernel finishes the
    # 2x2 max on-chip, so no separate maxpool pass over HBM.
    x_packed = x.reshape(n * hp, 2, wp, 2 * cin)

    p1, p2 = params["conv1"], params["conv2"]
    c1, c2 = p1["w"].shape[3], p2["w"].shape[3]
    cnt = float(n * hp * wp)

    # --- conv1: fused maxpool -> conv3x3 + bias, batch stats for BN1 ---------
    dummy = jnp.zeros((1, cin), jnp.float32)
    y1, s1, ss1 = fused_conv3x3(x_packed, p1["w"], p1["b"], dummy, dummy,
                                batch=n, pooled_hw=(hp, wp),
                                do_pool=True, do_bn_relu=False)
    mean1 = s1 / cnt + p1["b"]                        # stats are pre-bias
    var1 = jnp.maximum(ss1 / cnt - (s1 / cnt) ** 2, 0.0)
    scale1, shift1 = _fold_bn(mean1, var1, p1["gamma"], p1["beta"])

    # --- conv2: fused BN1-apply + ReLU -> conv3x3 + bias, stats for BN2 ------
    h1 = y1.reshape(n, hp, wp, c1)                    # free reshape, bf16 acts
    y2, s2, ss2 = fused_conv3x3(h1, p2["w"], p2["b"], scale1, shift1,
                                batch=n, pooled_hw=(hp, wp),
                                do_pool=False, do_bn_relu=True)
    mean2 = s2 / cnt + p2["b"]
    var2 = jnp.maximum(ss2 / cnt - (s2 / cnt) ** 2, 0.0)
    scale2, shift2 = _fold_bn(mean2, var2, p2["gamma"], p2["beta"])

    # --- final BN2-apply + ReLU (lane-dense elementwise pass) ----------------
    out_flat = bn_relu_apply(y2, scale2, shift2)      # (n*hp*wp, c2) f32
    out = out_flat.reshape(n, hp, wp, c2)
    return jnp.transpose(out, (0, 3, 1, 2))           # back to NCHW


def init_params(in_channels, out_channels, key):
    """Deterministic synthetic init (Kaiming-ish conv weights, BN gamma=1, beta=0)."""
    def conv_p(k, cin, cout):
        kw, kb = jax.random.split(k)
        std = (2.0 / (9.0 * cin)) ** 0.5
        return dict(
            w=jax.random.normal(kw, (3, 3, cin, cout), jnp.float32) * std,
            b=jax.random.normal(kb, (cout,), jnp.float32) * 0.01,
            gamma=jnp.ones((cout,), jnp.float32),
            beta=jnp.zeros((cout,), jnp.float32),
        )

    k1, k2 = jax.random.split(key)
    return {"conv1": conv_p(k1, in_channels, out_channels),
            "conv2": conv_p(k2, out_channels, out_channels)}


if __name__ == "__main__":
    key = jax.random.PRNGKey(0)
    k_x, k_p = jax.random.split(key)

    N, Cin, H, W = 2, 4, 16, 16
    Cout = 64                                  # DownSample(4, 64)
    x = jax.random.normal(k_x, (N, Cin, H, W), jnp.float32)
    params = init_params(Cin, Cout, k_p)

    out = downsample_forward(x, params)
    out = jax.block_until_ready(out)

    assert out.shape == (N, Cout, H // 2, W // 2), out.shape
    assert bool(jnp.all(jnp.isfinite(out)))
    print("KERNEL_OK")
</pallas_src>

<mosaic_0001>
module attributes {stable_mosaic.version = 11 : i64} {
  func.func @kernel(%arg0: i32, %arg1: memref<16x2x8x8xbf16, #tpu.memory_space<vmem>>, %arg2: memref<1x4xf32, #tpu.memory_space<vmem>>, %arg3: memref<1x4xf32, #tpu.memory_space<vmem>>, %arg4: memref<36x64xbf16, #tpu.memory_space<vmem>>, %arg5: memref<1x64xf32, #tpu.memory_space<vmem>>, %arg6: memref<128x64xbf16, #tpu.memory_space<vmem>>, %arg7: memref<1x64xf32, #tpu.memory_space<vmem>>, %arg8: memref<1x64xf32, #tpu.memory_space<vmem>>, %arg9: memref<2x10x10x4xbf16, #tpu.memory_space<vmem>>) attributes {dimension_semantics = [#tpu.dimension_semantics<arbitrary>], iteration_bounds = array<i64: 1>, scalar_prefetch = 0 : i64, scratch_operands = 1 : i64, tpu.core_type = #tpu.core_type<tc>, window_params = [{transform_indices = @transform_0, window_bounds = array<i64: 16, 2, 8, 8>}, {pipeline_mode = #tpu.pipeline_mode<synchronous>, transform_indices = @transform_1, window_bounds = array<i64: 1, 4>}, {pipeline_mode = #tpu.pipeline_mode<synchronous>, transform_indices = @transform_2, window_bounds = array<i64: 1, 4>}, {pipeline_mode = #tpu.pipeline_mode<synchronous>, transform_indices = @transform_3, window_bounds = array<i64: 36, 64>}, {pipeline_mode = #tpu.pipeline_mode<synchronous>, transform_indices = @transform_4, window_bounds = array<i64: 1, 64>}, {transform_indices = @transform_5, window_bounds = array<i64: 128, 64>}, {pipeline_mode = #tpu.pipeline_mode<synchronous>, transform_indices = @transform_6, window_bounds = array<i64: 1, 64>}, {pipeline_mode = #tpu.pipeline_mode<synchronous>, transform_indices = @transform_7, window_bounds = array<i64: 1, 64>}]} {
    %c0 = arith.constant 0 : index
    %c0_0 = arith.constant 0 : index
    %c0_1 = arith.constant 0 : index
    %c0_2 = arith.constant 0 : index
    %0 = vector.load %arg1[%c0, %c0_0, %c0_1, %c0_2] : memref<16x2x8x8xbf16, #tpu.memory_space<vmem>>, vector<16x2x8x8xbf16>
    %1 = vector.extract_strided_slice %0 {offsets = [0, 0, 0, 0], sizes = [16, 1, 8, 8], strides = [1, 1, 1, 1]} : vector<16x2x8x8xbf16> to vector<16x1x8x8xbf16>
    %2 = vector.shape_cast %1 : vector<16x1x8x8xbf16> to vector<16x8x8xbf16>
    %3 = vector.extract_strided_slice %0 {offsets = [0, 1, 0, 0], sizes = [16, 1, 8, 8], strides = [1, 1, 1, 1]} : vector<16x2x8x8xbf16> to vector<16x1x8x8xbf16>
    %4 = vector.shape_cast %3 : vector<16x1x8x8xbf16> to vector<16x8x8xbf16>
    %5 = arith.maximumf %2, %4 : vector<16x8x8xbf16>
    %6 = vector.extract_strided_slice %5 {offsets = [0, 0, 0], sizes = [16, 8, 4], strides = [1, 1, 1]} : vector<16x8x8xbf16> to vector<16x8x4xbf16>
    %7 = vector.extract_strided_slice %5 {offsets = [0, 0, 4], sizes = [16, 8, 4], strides = [1, 1, 1]} : vector<16x8x8xbf16> to vector<16x8x4xbf16>
    %8 = arith.maximumf %6, %7 : vector<16x8x4xbf16>
    %9 = vector.shape_cast %8 : vector<16x8x4xbf16> to vector<2x8x8x4xbf16>
    %c0_i32 = arith.constant 0 : i32
    %10 = arith.cmpi eq, %arg0, %c0_i32 : i32
    %11 = arith.extui %10 : i1 to i32
    %c0_i32_3 = arith.constant 0 : i32
    %12 = arith.cmpi ne, %11, %c0_i32_3 : i32
    scf.if %12 {
      %cst_60 = arith.constant 0.000000e+00 : bf16
      %54 = vector.broadcast %cst_60 : bf16 to vector<2x10x10x4xbf16>
      %c0_61 = arith.constant 0 : index
      %c0_62 = arith.constant 0 : index
      %c0_63 = arith.constant 0 : index
      %c0_64 = arith.constant 0 : index
      %55 = vector.load %arg9[%c0_61, %c0_62, %c0_63, %c0_64] : memref<2x10x10x4xbf16, #tpu.memory_space<vmem>>, vector<2x10x10x4xbf16>
      tpu.vector_store %arg9[%c0_61, %c0_62, %c0_63, %c0_64], %54 {strides = array<i32>} : memref<2x10x10x4xbf16, #tpu.memory_space<vmem>>, vector<2x10x10x4xbf16>,
    } else {
    }
    %c0_4 = arith.constant 0 : index
    %c1 = arith.constant 1 : index
    %c1_5 = arith.constant 1 : index
    %c0_6 = arith.constant 0 : index
    %13 = vector.load %arg9[%c0_4, %c1, %c1_5, %c0_6] : memref<2x10x10x4xbf16, #tpu.memory_space<vmem>>, vector<2x8x8x4xbf16>
    tpu.vector_store %arg9[%c0_4, %c1, %c1_5, %c0_6], %9 {strides = array<i32>} : memref<2x10x10x4xbf16, #tpu.memory_space<vmem>>, vector<2x8x8x4xbf16>,
    %c0_7 = arith.constant 0 : index
    %c0_8 = arith.constant 0 : index
    %c0_9 = arith.constant 0 : index
    %c0_10 = arith.constant 0 : index
    %14 = vector.load %arg9[%c0_7, %c0_8, %c0_9, %c0_10] : memref<2x10x10x4xbf16, #tpu.memory_space<vmem>>, vector<2x8x8x4xbf16>
    %15 = vector.shape_cast %14 : vector<2x8x8x4xbf16> to vector<128x4xbf16>
    %c0_11 = arith.constant 0 : index
    %c0_12 = arith.constant 0 : index
    %c1_13 = arith.constant 1 : index
    %c0_14 = arith.constant 0 : index
    %16 = vector.load %arg9[%c0_11, %c0_12, %c1_13, %c0_14] : memref<2x10x10x4xbf16, #tpu.memory_space<vmem>>, vector<2x8x8x4xbf16>
    %17 = vector.shape_cast %16 : vector<2x8x8x4xbf16> to vector<128x4xbf16>
    %c0_15 = arith.constant 0 : index
    %c0_16 = arith.constant 0 : index
    %c2 = arith.constant 2 : index
    %c0_17 = arith.constant 0 : index
    %18 = vector.load %arg9[%c0_15, %c0_16, %c2, %c0_17] : memref<2x10x10x4xbf16, #tpu.memory_space<vmem>>, vector<2x8x8x4xbf16>
    %19 = vector.shape_cast %18 : vector<2x8x8x4xbf16> to vector<128x4xbf16>
    %c0_18 = arith.constant 0 : index
    %c1_19 = arith.constant 1 : index
    %c0_20 = arith.constant 0 : index
    %c0_21 = arith.constant 0 : index
    %20 = vector.load %arg9[%c0_18, %c1_19, %c0_20, %c0_21] : memref<2x10x10x4xbf16, #tpu.memory_space<vmem>>, vector<2x8x8x4xbf16>
    %21 = vector.shape_cast %20 : vector<2x8x8x4xbf16> to vector<128x4xbf16>
    %c0_22 = arith.constant 0 : index
    %c1_23 = arith.constant 1 : index
    %c1_24 = arith.constant 1 : index
    %c0_25 = arith.constant 0 : index
    %22 = vector.load %arg9[%c0_22, %c1_23, %c1_24, %c0_25] : memref<2x10x10x4xbf16, #tpu.memory_space<vmem>>, vector<2x8x8x4xbf16>
    %23 = vector.shape_cast %22 : vector<2x8x8x4xbf16> to vector<128x4xbf16>
    %c0_26 = arith.constant 0 : index
    %c1_27 = arith.constant 1 : index
    %c2_28 = arith.constant 2 : index
    %c0_29 = arith.constant 0 : index
    %24 = vector.load %arg9[%c0_26, %c1_27, %c2_28, %c0_29] : memref<2x10x10x4xbf16, #tpu.memory_space<vmem>>, vector<2x8x8x4xbf16>
    %25 = vector.shape_cast %24 : vector<2x8x8x4xbf16> to vector<128x4xbf16>
    %c0_30 = arith.constant 0 : index
    %c2_31 = arith.constant 2 : index
    %c0_32 = arith.constant 0 : index
    %c0_33 = arith.constant 0 : index
    %26 = vector.load %arg9[%c0_30, %c2_31, %c0_32, %c0_33] : memref<2x10x10x4xbf16, #tpu.memory_space<vmem>>, vector<2x8x8x4xbf16>
    %27 = vector.shape_cast %26 : vector<2x8x8x4xbf16> to vector<128x4xbf16>
    %c0_34 = arith.constant 0 : index
    %c2_35 = arith.constant 2 : index
    %c1_36 = arith.constant 1 : index
    %c0_37 = arith.constant 0 : index
    %28 = vector.load %arg9[%c0_34, %c2_35, %c1_36, %c0_37] : memref<2x10x10x4xbf16, #tpu.memory_space<vmem>>, vector<2x8x8x4xbf16>
    %29 = vector.shape_cast %28 : vector<2x8x8x4xbf16> to vector<128x4xbf16>
    %c0_38 = arith.constant 0 : index
    %c2_39 = arith.constant 2 : index
    %c2_40 = arith.constant 2 : index
    %c0_41 = arith.constant 0 : index
    %30 = vector.load %arg9[%c0_38, %c2_39, %c2_40, %c0_41] : memref<2x10x10x4xbf16, #tpu.memory_space<vmem>>, vector<2x8x8x4xbf16>
    %31 = vector.shape_cast %30 : vector<2x8x8x4xbf16> to vector<128x4xbf16>
    %32 = tpu.concatenate %15, %17, %19, %21, %23, %25, %27, %29, %31 in 1 : vector<128x4xbf16>, vector<128x4xbf16>, vector<128x4xbf16>, vector<128x4xbf16>, vector<128x4xbf16>, vector<128x4xbf16>, vector<128x4xbf16>, vector<128x4xbf16>, vector<128x4xbf16> -> vector<128x36xbf16>
    %c0_42 = arith.constant 0 : index
    %c0_43 = arith.constant 0 : index
    %33 = vector.load %arg4[%c0_42, %c0_43] : memref<36x64xbf16, #tpu.memory_space<vmem>>, vector<36x64xbf16>
    %cst = arith.constant dense<0.000000e+00> : vector<128x64xf32>
    %34 = tpu.matmul %32, %33, %cst {dimension_numbers = #tpu.dot_dimension_numbers<[1], [0], [0], [1], [0, 0, 1, 1], [], []>} : vector<128x36xbf16>, vector<36x64xbf16>, vector<128x64xf32> -> vector<128x64xf32>
    %c0_44 = arith.constant 0 : index
    %c0_45 = arith.constant 0 : index
    %35 = vector.load %arg5[%c0_44, %c0_45] : memref<1x64xf32, #tpu.memory_space<vmem>>, vector<1x64xf32>
    %36 = vector.broadcast %35 : vector<1x64xf32> to vector<128x64xf32>
    %37 = arith.addf %34, %36 : vector<128x64xf32>
    %38 = arith.truncf %37 : vector<128x64xf32> to vector<128x64xbf16>
    %c0_46 = arith.constant 0 : index
    %c0_47 = arith.constant 0 : index
    %39 = vector.load %arg6[%c0_46, %c0_47] : memref<128x64xbf16, #tpu.memory_space<vmem>>, vector<128x64xbf16>
    tpu.vector_store %arg6[%c0_46, %c0_47], %38 {strides = array<i32>} : memref<128x64xbf16, #tpu.memory_space<vmem>>, vector<128x64xbf16>,
    %c0_i32_48 = arith.constant 0 : i32
    %40 = arith.cmpi eq, %arg0, %c0_i32_48 : i32
    %41 = arith.extui %40 : i1 to i32
    %c0_i32_49 = arith.constant 0 : i32
    %42 = arith.cmpi ne, %41, %c0_i32_49 : i32
    scf.if %42 {
      %cst_60 = arith.constant 0.000000e+00 : f32
      %54 = vector.broadcast %cst_60 : f32 to vector<1x64xf32>
      %c0_61 = arith.constant 0 : index
      %c0_62 = arith.constant 0 : index
      %55 = vector.load %arg7[%c0_61, %c0_62] : memref<1x64xf32, #tpu.memory_space<vmem>>, vector<1x64xf32>
      tpu.vector_store %arg7[%c0_61, %c0_62], %54 {strides = array<i32>} : memref<1x64xf32, #tpu.memory_space<vmem>>, vector<1x64xf32>,
      %cst_63 = arith.constant 0.000000e+00 : f32
      %56 = vector.broadcast %cst_63 : f32 to vector<1x64xf32>
      %c0_64 = arith.constant 0 : index
      %c0_65 = arith.constant 0 : index
      %57 = vector.load %arg8[%c0_64, %c0_65] : memref<1x64xf32, #tpu.memory_space<vmem>>, vector<1x64xf32>
      tpu.vector_store %arg8[%c0_64, %c0_65], %56 {strides = array<i32>} : memref<1x64xf32, #tpu.memory_space<vmem>>, vector<1x64xf32>,
    } else {
    }
    %c0_50 = arith.constant 0 : index
    %c0_51 = arith.constant 0 : index
    %43 = vector.load %arg7[%c0_50, %c0_51] : memref<1x64xf32, #tpu.memory_space<vmem>>, vector<1x64xf32>
    %cst_52 = arith.constant dense<0.000000e+00> : vector<64xf32>
    %44 = vector.multi_reduction <add>, %34, %cst_52 [0] : vector<128x64xf32> to vector<64xf32>
    %45 = vector.shape_cast %44 : vector<64xf32> to vector<1x64xf32>
    %46 = arith.addf %43, %45 : vector<1x64xf32>
    %c0_53 = arith.constant 0 : index
    %c0_54 = arith.constant 0 : index
    %47 = vector.load %arg7[%c0_53, %c0_54] : memref<1x64xf32, #tpu.memory_space<vmem>>, vector<1x64xf32>
    tpu.vector_store %arg7[%c0_53, %c0_54], %46 {strides = array<i32>} : memref<1x64xf32, #tpu.memory_space<vmem>>, vector<1x64xf32>,
    %c0_55 = arith.constant 0 : index
    %c0_56 = arith.constant 0 : index
    %48 = vector.load %arg8[%c0_55, %c0_56] : memref<1x64xf32, #tpu.memory_space<vmem>>, vector<1x64xf32>
    %49 = arith.mulf %34, %34 : vector<128x64xf32>
    %cst_57 = arith.constant dense<0.000000e+00> : vector<64xf32>
    %50 = vector.multi_reduction <add>, %49, %cst_57 [0] : vector<128x64xf32> to vector<64xf32>
    %51 = vector.shape_cast %50 : vector<64xf32> to vector<1x64xf32>
    %52 = arith.addf %48, %51 : vector<1x64xf32>
    %c0_58 = arith.constant 0 : index
    %c0_59 = arith.constant 0 : index
    %53 = vector.load %arg8[%c0_58, %c0_59] : memref<1x64xf32, #tpu.memory_space<vmem>>, vector<1x64xf32>
    tpu.vector_store %arg8[%c0_58, %c0_59], %52 {strides = array<i32>} : memref<1x64xf32, #tpu.memory_space<vmem>>, vector<1x64xf32>,
    return
  }
  func.func @transform_0(%arg0: i32) -> (i32, i32, i32, i32) {
    %c0_i32 = arith.constant 0 : i32
    %c0_i32_0 = arith.constant 0 : i32
    %c0_i32_1 = arith.constant 0 : i32
    %c0_i32_2 = arith.constant 0 : i32
    return %arg0, %c0_i32, %c0_i32_0, %c0_i32_1 : i32, i32, i32, i32
  }
  func.func @transform_1(%arg0: i32) -> (i32, i32) {
    %c0_i32 = arith.constant 0 : i32
    %c0_i32_0 = arith.constant 0 : i32
    %c0_i32_1 = arith.constant 0 : i32
    return %c0_i32, %c0_i32_0 : i32, i32
  }
  func.func @transform_2(%arg0: i32) -> (i32, i32) {
    %c0_i32 = arith.constant 0 : i32
    %c0_i32_0 = arith.constant 0 : i32
    %c0_i32_1 = arith.constant 0 : i32
    return %c0_i32, %c0_i32_0 : i32, i32
  }
  func.func @transform_3(%arg0: i32) -> (i32, i32) {
    %c0_i32 = arith.constant 0 : i32
    %c0_i32_0 = arith.constant 0 : i32
    %c0_i32_1 = arith.constant 0 : i32
    return %c0_i32, %c0_i32_0 : i32, i32
  }
  func.func @transform_4(%arg0: i32) -> (i32, i32) {
    %c0_i32 = arith.constant 0 : i32
    %c0_i32_0 = arith.constant 0 : i32
    %c0_i32_1 = arith.constant 0 : i32
    return %c0_i32, %c0_i32_0 : i32, i32
  }
  func.func @transform_5(%arg0: i32) -> (i32, i32) {
    %c0_i32 = arith.constant 0 : i32
    %c0_i32_0 = arith.constant 0 : i32
    return %arg0, %c0_i32 : i32, i32
  }
  func.func @transform_6(%arg0: i32) -> (i32, i32) {
    %c0_i32 = arith.constant 0 : i32
    %c0_i32_0 = arith.constant 0 : i32
    %c0_i32_1 = arith.constant 0 : i32
    return %c0_i32, %c0_i32_0 : i32, i32
  }
  func.func @transform_7(%arg0: i32) -> (i32, i32) {
    %c0_i32 = arith.constant 0 : i32
    %c0_i32_0 = arith.constant 0 : i32
    %c0_i32_1 = arith.constant 0 : i32
    return %c0_i32, %c0_i32_0 : i32, i32
  }
}

module attributes {stable_mosaic.version = 11 : i64} {
  func.func @_bn_relu_kernel(%arg0: i32, %arg1: memref<64x128xbf16, #tpu.memory_space<vmem>>, %arg2: memref<1x128xf32, #tpu.memory_space<vmem>>, %arg3: memref<1x128xf32, #tpu.memory_space<vmem>>, %arg4: memref<64x128xf32, #tpu.memory_space<vmem>>) attributes {dimension_semantics = [#tpu.dimension_semantics<parallel>], iteration_bounds = array<i64: 1>, scalar_prefetch = 0 : i64, scratch_operands = 0 : i64, tpu.core_type = #tpu.core_type<tc>, window_params = [{transform_indices = @transform_0, window_bounds = array<i64: 64, 128>}, {pipeline_mode = #tpu.pipeline_mode<synchronous>, transform_indices = @transform_1, window_bounds = array<i64: 1, 128>}, {pipeline_mode = #tpu.pipeline_mode<synchronous>, transform_indices = @transform_2, window_bounds = array<i64: 1, 128>}, {transform_indices = @transform_3, window_bounds = array<i64: 64, 128>}]} {
    %c0 = arith.constant 0 : index
    %c0_0 = arith.constant 0 : index
    %0 = vector.load %arg1[%c0, %c0_0] : memref<64x128xbf16, #tpu.memory_space<vmem>>, vector<64x128xbf16>
    %1 = arith.extf %0 : vector<64x128xbf16> to vector<64x128xf32>
    %c0_1 = arith.constant 0 : index
    %c0_2 = arith.constant 0 : index
    %2 = vector.load %arg2[%c0_1, %c0_2] : memref<1x128xf32, #tpu.memory_space<vmem>>, vector<1x128xf32>
    %3 = vector.broadcast %2 : vector<1x128xf32> to vector<64x128xf32>
    %4 = arith.mulf %1, %3 : vector<64x128xf32>
    %c0_3 = arith.constant 0 : index
    %c0_4 = arith.constant 0 : index
    %5 = vector.load %arg3[%c0_3, %c0_4] : memref<1x128xf32, #tpu.memory_space<vmem>>, vector<1x128xf32>
    %6 = vector.broadcast %5 : vector<1x128xf32> to vector<64x128xf32>
    %7 = arith.addf %4, %6 : vector<64x128xf32>
    %cst = arith.constant 0.000000e+00 : f32
    %8 = vector.broadcast %cst : f32 to vector<64x128xf32>
    %9 = arith.maximumf %7, %8 : vector<64x128xf32>
    %c0_5 = arith.constant 0 : index
    %c0_6 = arith.constant 0 : index
    %10 = vector.load %arg4[%c0_5, %c0_6] : memref<64x128xf32, #tpu.memory_space<vmem>>, vector<64x128xf32>
    tpu.vector_store %arg4[%c0_5, %c0_6], %9 {strides = array<i32>} : memref<64x128xf32, #tpu.memory_space<vmem>>, vector<64x128xf32>,
    return
  }
  func.func @transform_0(%arg0: i32) -> (i32, i32) {
    %c0_i32 = arith.constant 0 : i32
    %c0_i32_0 = arith.constant 0 : i32
    return %arg0, %c0_i32 : i32, i32
  }
  func.func @transform_1(%arg0: i32) -> (i32, i32) {
    %c0_i32 = arith.constant 0 : i32
    %c0_i32_0 = arith.constant 0 : i32
    %c0_i32_1 = arith.constant 0 : i32
    return %c0_i32, %c0_i32_0 : i32, i32
  }
  func.func @transform_2(%arg0: i32) -> (i32, i32) {
    %c0_i32 = arith.constant 0 : i32
    %c0_i32_0 = arith.constant 0 : i32
    %c0_i32_1 = arith.constant 0 : i32
    return %c0_i32, %c0_i32_0 : i32, i32
  }
  func.func @transform_3(%arg0: i32) -> (i32, i32) {
    %c0_i32 = arith.constant 0 : i32
    %c0_i32_0 = arith.constant 0 : i32
    return %arg0, %c0_i32 : i32, i32
  }
}

module attributes {stable_mosaic.version = 11 : i64} {
  func.func @kernel(%arg0: i32, %arg1: memref<2x8x8x64xbf16, #tpu.memory_space<vmem>>, %arg2: memref<1x64xf32, #tpu.memory_space<vmem>>, %arg3: memref<1x64xf32, #tpu.memory_space<vmem>>, %arg4: memref<576x64xbf16, #tpu.memory_space<vmem>>, %arg5: memref<1x64xf32, #tpu.memory_space<vmem>>, %arg6: memref<128x64xbf16, #tpu.memory_space<vmem>>, %arg7: memref<1x64xf32, #tpu.memory_space<vmem>>, %arg8: memref<1x64xf32, #tpu.memory_space<vmem>>, %arg9: memref<2x10x10x64xbf16, #tpu.memory_space<vmem>>) attributes {dimension_semantics = [#tpu.dimension_semantics<arbitrary>], iteration_bounds = array<i64: 1>, scalar_prefetch = 0 : i64, scratch_operands = 1 : i64, tpu.core_type = #tpu.core_type<tc>, window_params = [{transform_indices = @transform_0, window_bounds = array<i64: 2, 8, 8, 64>}, {pipeline_mode = #tpu.pipeline_mode<synchronous>, transform_indices = @transform_1, window_bounds = array<i64: 1, 64>}, {pipeline_mode = #tpu.pipeline_mode<synchronous>, transform_indices = @transform_2, window_bounds = array<i64: 1, 64>}, {pipeline_mode = #tpu.pipeline_mode<synchronous>, transform_indices = @transform_3, window_bounds = array<i64: 576, 64>}, {pipeline_mode = #tpu.pipeline_mode<synchronous>, transform_indices = @transform_4, window_bounds = array<i64: 1, 64>}, {transform_indices = @transform_5, window_bounds = array<i64: 128, 64>}, {pipeline_mode = #tpu.pipeline_mode<synchronous>, transform_indices = @transform_6, window_bounds = array<i64: 1, 64>}, {pipeline_mode = #tpu.pipeline_mode<synchronous>, transform_indices = @transform_7, window_bounds = array<i64: 1, 64>}]} {
    %c0 = arith.constant 0 : index
    %c0_0 = arith.constant 0 : index
    %c0_1 = arith.constant 0 : index
    %c0_2 = arith.constant 0 : index
    %0 = vector.load %arg1[%c0, %c0_0, %c0_1, %c0_2] : memref<2x8x8x64xbf16, #tpu.memory_space<vmem>>, vector<2x8x8x64xbf16>
    %c0_3 = arith.constant 0 : index
    %c0_4 = arith.constant 0 : index
    %1 = vector.load %arg2[%c0_3, %c0_4] : memref<1x64xf32, #tpu.memory_space<vmem>>, vector<1x64xf32>
    %2 = vector.shape_cast %1 : vector<1x64xf32> to vector<1x1x1x64xf32>
    %c0_5 = arith.constant 0 : index
    %c0_6 = arith.constant 0 : index
    %3 = vector.load %arg3[%c0_5, %c0_6] : memref<1x64xf32, #tpu.memory_space<vmem>>, vector<1x64xf32>
    %4 = vector.shape_cast %3 : vector<1x64xf32> to vector<1x1x1x64xf32>
    %5 = arith.extf %0 : vector<2x8x8x64xbf16> to vector<2x8x8x64xf32>
    %6 = vector.broadcast %2 : vector<1x1x1x64xf32> to vector<2x8x8x64xf32>
    %7 = arith.mulf %5, %6 : vector<2x8x8x64xf32>
    %8 = vector.broadcast %4 : vector<1x1x1x64xf32> to vector<2x8x8x64xf32>
    %9 = arith.addf %7, %8 : vector<2x8x8x64xf32>
    %cst = arith.constant 0.000000e+00 : f32
    %10 = vector.broadcast %cst : f32 to vector<2x8x8x64xf32>
    %11 = arith.maximumf %9, %10 : vector<2x8x8x64xf32>
    %12 = arith.truncf %11 : vector<2x8x8x64xf32> to vector<2x8x8x64xbf16>
    %c0_i32 = arith.constant 0 : i32
    %13 = arith.cmpi eq, %arg0, %c0_i32 : i32
    %14 = arith.extui %13 : i1 to i32
    %c0_i32_7 = arith.constant 0 : i32
    %15 = arith.cmpi ne, %14, %c0_i32_7 : i32
    scf.if %15 {
      %cst_65 = arith.constant 0.000000e+00 : bf16
      %57 = vector.broadcast %cst_65 : bf16 to vector<2x10x10x64xbf16>
      %c0_66 = arith.constant 0 : index
      %c0_67 = arith.constant 0 : index
      %c0_68 = arith.constant 0 : index
      %c0_69 = arith.constant 0 : index
      %58 = vector.load %arg9[%c0_66, %c0_67, %c0_68, %c0_69] : memref<2x10x10x64xbf16, #tpu.memory_space<vmem>>, vector<2x10x10x64xbf16>
      tpu.vector_store %arg9[%c0_66, %c0_67, %c0_68, %c0_69], %57 {strides = array<i32>} : memref<2x10x10x64xbf16, #tpu.memory_space<vmem>>, vector<2x10x10x64xbf16>,
    } else {
    }
    %c0_8 = arith.constant 0 : index
    %c1 = arith.constant 1 : index
    %c1_9 = arith.constant 1 : index
    %c0_10 = arith.constant 0 : index
    %16 = vector.load %arg9[%c0_8, %c1, %c1_9, %c0_10] : memref<2x10x10x64xbf16, #tpu.memory_space<vmem>>, vector<2x8x8x64xbf16>
    tpu.vector_store %arg9[%c0_8, %c1, %c1_9, %c0_10], %12 {strides = array<i32>} : memref<2x10x10x64xbf16, #tpu.memory_space<vmem>>, vector<2x8x8x64xbf16>,
    %c0_11 = arith.constant 0 : index
    %c0_12 = arith.constant 0 : index
    %c0_13 = arith.constant 0 : index
    %c0_14 = arith.constant 0 : index
    %17 = vector.load %arg9[%c0_11, %c0_12, %c0_13, %c0_14] : memref<2x10x10x64xbf16, #tpu.memory_space<vmem>>, vector<2x8x8x64xbf16>
    %18 = vector.shape_cast %17 : vector<2x8x8x64xbf16> to vector<128x64xbf16>
    %c0_15 = arith.constant 0 : index
    %c0_16 = arith.constant 0 : index
    %c1_17 = arith.constant 1 : index
    %c0_18 = arith.constant 0 : index
    %19 = vector.load %arg9[%c0_15, %c0_16, %c1_17, %c0_18] : memref<2x10x10x64xbf16, #tpu.memory_space<vmem>>, vector<2x8x8x64xbf16>
    %20 = vector.shape_cast %19 : vector<2x8x8x64xbf16> to vector<128x64xbf16>
    %c0_19 = arith.constant 0 : index
    %c0_20 = arith.constant 0 : index
    %c2 = arith.constant 2 : index
    %c0_21 = arith.constant 0 : index
    %21 = vector.load %arg9[%c0_19, %c0_20, %c2, %c0_21] : memref<2x10x10x64xbf16, #tpu.memory_space<vmem>>, vector<2x8x8x64xbf16>
    %22 = vector.shape_cast %21 : vector<2x8x8x64xbf16> to vector<128x64xbf16>
    %c0_22 = arith.constant 0 : index
    %c1_23 = arith.constant 1 : index
    %c0_24 = arith.constant 0 : index
    %c0_25 = arith.constant 0 : index
    %23 = vector.load %arg9[%c0_22, %c1_23, %c0_24, %c0_25] : memref<2x10x10x64xbf16, #tpu.memory_space<vmem>>, vector<2x8x8x64xbf16>
    %24 = vector.shape_cast %23 : vector<2x8x8x64xbf16> to vector<128x64xbf16>
    %c0_26 = arith.constant 0 : index
    %c1_27 = arith.constant 1 : index
    %c1_28 = arith.constant 1 : index
    %c0_29 = arith.constant 0 : index
    %25 = vector.load %arg9[%c0_26, %c1_27, %c1_28, %c0_29] : memref<2x10x10x64xbf16, #tpu.memory_space<vmem>>, vector<2x8x8x64xbf16>
    %26 = vector.shape_cast %25 : vector<2x8x8x64xbf16> to vector<128x64xbf16>
    %c0_30 = arith.constant 0 : index
    %c1_31 = arith.constant 1 : index
    %c2_32 = arith.constant 2 : index
    %c0_33 = arith.constant 0 : index
    %27 = vector.load %arg9[%c0_30, %c1_31, %c2_32, %c0_33] : memref<2x10x10x64xbf16, #tpu.memory_space<vmem>>, vector<2x8x8x64xbf16>
    %28 = vector.shape_cast %27 : vector<2x8x8x64xbf16> to vector<128x64xbf16>
    %c0_34 = arith.constant 0 : index
    %c2_35 = arith.constant 2 : index
    %c0_36 = arith.constant 0 : index
    %c0_37 = arith.constant 0 : index
    %29 = vector.load %arg9[%c0_34, %c2_35, %c0_36, %c0_37] : memref<2x10x10x64xbf16, #tpu.memory_space<vmem>>, vector<2x8x8x64xbf16>
    %30 = vector.shape_cast %29 : vector<2x8x8x64xbf16> to vector<128x64xbf16>
    %c0_38 = arith.constant 0 : index
    %c2_39 = arith.constant 2 : index
    %c1_40 = arith.constant 1 : index
    %c0_41 = arith.constant 0 : index
    %31 = vector.load %arg9[%c0_38, %c2_39, %c1_40, %c0_41] : memref<2x10x10x64xbf16, #tpu.memory_space<vmem>>, vector<2x8x8x64xbf16>
    %32 = vector.shape_cast %31 : vector<2x8x8x64xbf16> to vector<128x64xbf16>
    %c0_42 = arith.constant 0 : index
    %c2_43 = arith.constant 2 : index
    %c2_44 = arith.constant 2 : index
    %c0_45 = arith.constant 0 : index
    %33 = vector.load %arg9[%c0_42, %c2_43, %c2_44, %c0_45] : memref<2x10x10x64xbf16, #tpu.memory_space<vmem>>, vector<2x8x8x64xbf16>
    %34 = vector.shape_cast %33 : vector<2x8x8x64xbf16> to vector<128x64xbf16>
    %35 = tpu.concatenate %18, %20, %22, %24, %26, %28, %30, %32, %34 in 1 : vector<128x64xbf16>, vector<128x64xbf16>, vector<128x64xbf16>, vector<128x64xbf16>, vector<128x64xbf16>, vector<128x64xbf16>, vector<128x64xbf16>, vector<128x64xbf16>, vector<128x64xbf16> -> vector<128x576xbf16>
    %c0_46 = arith.constant 0 : index
    %c0_47 = arith.constant 0 : index
    %36 = vector.load %arg4[%c0_46, %c0_47] : memref<576x64xbf16, #tpu.memory_space<vmem>>, vector<576x64xbf16>
    %cst_48 = arith.constant dense<0.000000e+00> : vector<128x64xf32>
    %37 = tpu.matmul %35, %36, %cst_48 {dimension_numbers = #tpu.dot_dimension_numbers<[1], [0], [0], [1], [0, 0, 1, 1], [], []>} : vector<128x576xbf16>, vector<576x64xbf16>, vector<128x64xf32> -> vector<128x64xf32>
    %c0_49 = arith.constant 0 : index
    %c0_50 = arith.constant 0 : index
    %38 = vector.load %arg5[%c0_49, %c0_50] : memref<1x64xf32, #tpu.memory_space<vmem>>, vector<1x64xf32>
    %39 = vector.broadcast %38 : vector<1x64xf32> to vector<128x64xf32>
    %40 = arith.addf %37, %39 : vector<128x64xf32>
    %41 = arith.truncf %40 : vector<128x64xf32> to vector<128x64xbf16>
    %c0_51 = arith.constant 0 : index
    %c0_52 = arith.constant 0 : index
    %42 = vector.load %arg6[%c0_51, %c0_52] : memref<128x64xbf16, #tpu.memory_space<vmem>>, vector<128x64xbf16>
    tpu.vector_store %arg6[%c0_51, %c0_52], %41 {strides = array<i32>} : memref<128x64xbf16, #tpu.memory_space<vmem>>, vector<128x64xbf16>,
    %c0_i32_53 = arith.constant 0 : i32
    %43 = arith.cmpi eq, %arg0, %c0_i32_53 : i32
    %44 = arith.extui %43 : i1 to i32
    %c0_i32_54 = arith.constant 0 : i32
    %45 = arith.cmpi ne, %44, %c0_i32_54 : i32
    scf.if %45 {
      %cst_65 = arith.constant 0.000000e+00 : f32
      %57 = vector.broadcast %cst_65 : f32 to vector<1x64xf32>
      %c0_66 = arith.constant 0 : index
      %c0_67 = arith.constant 0 : index
      %58 = vector.load %arg7[%c0_66, %c0_67] : memref<1x64xf32, #tpu.memory_space<vmem>>, vector<1x64xf32>
      tpu.vector_store %arg7[%c0_66, %c0_67], %57 {strides = array<i32>} : memref<1x64xf32, #tpu.memory_space<vmem>>, vector<1x64xf32>,
      %cst_68 = arith.constant 0.000000e+00 : f32
      %59 = vector.broadcast %cst_68 : f32 to vector<1x64xf32>
      %c0_69 = arith.constant 0 : index
      %c0_70 = arith.constant 0 : index
      %60 = vector.load %arg8[%c0_69, %c0_70] : memref<1x64xf32, #tpu.memory_space<vmem>>, vector<1x64xf32>
      tpu.vector_store %arg8[%c0_69, %c0_70], %59 {strides = array<i32>} : memref<1x64xf32, #tpu.memory_space<vmem>>, vector<1x64xf32>,
    } else {
    }
    %c0_55 = arith.constant 0 : index
    %c0_56 = arith.constant 0 : index
    %46 = vector.load %arg7[%c0_55, %c0_56] : memref<1x64xf32, #tpu.memory_space<vmem>>, vector<1x64xf32>
    %cst_57 = arith.constant dense<0.000000e+00> : vector<64xf32>
    %47 = vector.multi_reduction <add>, %37, %cst_57 [0] : vector<128x64xf32> to vector<64xf32>
    %48 = vector.shape_cast %47 : vector<64xf32> to vector<1x64xf32>
    %49 = arith.addf %46, %48 : vector<1x64xf32>
    %c0_58 = arith.constant 0 : index
    %c0_59 = arith.constant 0 : index
    %50 = vector.load %arg7[%c0_58, %c0_59] : memref<1x64xf32, #tpu.memory_space<vmem>>, vector<1x64xf32>
    tpu.vector_store %arg7[%c0_58, %c0_59], %49 {strides = array<i32>} : memref<1x64xf32, #tpu.memory_space<vmem>>, vector<1x64xf32>,
    %c0_60 = arith.constant 0 : index
    %c0_61 = arith.constant 0 : index
    %51 = vector.load %arg8[%c0_60, %c0_61] : memref<1x64xf32, #tpu.memory_space<vmem>>, vector<1x64xf32>
    %52 = arith.mulf %37, %37 : vector<128x64xf32>
    %cst_62 = arith.constant dense<0.000000e+00> : vector<64xf32>
    %53 = vector.multi_reduction <add>, %52, %cst_62 [0] : vector<128x64xf32> to vector<64xf32>
    %54 = vector.shape_cast %53 : vector<64xf32> to vector<1x64xf32>
    %55 = arith.addf %51, %54 : vector<1x64xf32>
    %c0_63 = arith.constant 0 : index
    %c0_64 = arith.constant 0 : index
    %56 = vector.load %arg8[%c0_63, %c0_64] : memref<1x64xf32, #tpu.memory_space<vmem>>, vector<1x64xf32>
    tpu.vector_store %arg8[%c0_63, %c0_64], %55 {strides = array<i32>} : memref<1x64xf32, #tpu.memory_space<vmem>>, vector<1x64xf32>,
    return
  }
  func.func @transform_0(%arg0: i32) -> (i32, i32, i32, i32) {
    %c0_i32 = arith.constant 0 : i32
    %c0_i32_0 = arith.constant 0 : i32
    %c0_i32_1 = arith.constant 0 : i32
    %c0_i32_2 = arith.constant 0 : i32
    return %arg0, %c0_i32, %c0_i32_0, %c0_i32_1 : i32, i32, i32, i32
  }
  func.func @transform_1(%arg0: i32) -> (i32, i32) {
    %c0_i32 = arith.constant 0 : i32
    %c0_i32_0 = arith.constant 0 : i32
    %c0_i32_1 = arith.constant 0 : i32
    return %c0_i32, %c0_i32_0 : i32, i32
  }
  func.func @transform_2(%arg0: i32) -> (i32, i32) {
    %c0_i32 = arith.constant 0 : i32
    %c0_i32_0 = arith.constant 0 : i32
    %c0_i32_1 = arith.constant 0 : i32
    return %c0_i32, %c0_i32_0 : i32, i32
  }
  func.func @transform_3(%arg0: i32) -> (i32, i32) {
    %c0_i32 = arith.constant 0 : i32
    %c0_i32_0 = arith.constant 0 : i32
    %c0_i32_1 = arith.constant 0 : i32
    return %c0_i32, %c0_i32_0 : i32, i32
  }
  func.func @transform_4(%arg0: i32) -> (i32, i32) {
    %c0_i32 = arith.constant 0 : i32
    %c0_i32_0 = arith.constant 0 : i32
    %c0_i32_1 = arith.constant 0 : i32
    return %c0_i32, %c0_i32_0 : i32, i32
  }
  func.func @transform_5(%arg0: i32) -> (i32, i32) {
    %c0_i32 = arith.constant 0 : i32
    %c0_i32_0 = arith.constant 0 : i32
    return %arg0, %c0_i32 : i32, i32
  }
  func.func @transform_6(%arg0: i32) -> (i32, i32) {
    %c0_i32 = arith.constant 0 : i32
    %c0_i32_0 = arith.constant 0 : i32
    %c0_i32_1 = arith.constant 0 : i32
    return %c0_i32, %c0_i32_0 : i32, i32
  }
  func.func @transform_7(%arg0: i32) -> (i32, i32) {
    %c0_i32 = arith.constant 0 : i32
    %c0_i32_0 = arith.constant 0 : i32
    %c0_i32_1 = arith.constant 0 : i32
    return %c0_i32, %c0_i32_0 : i32, i32
  }
}

</mosaic_0001>

<llo_original>
// kernel: downsample_forward.5
$region0: #{downsample_forward.5}
  #allocation0 [shape = 'u32[]', space=smem, size = 0x4, offset = 0x4, fixed_abs, tag = 'smem constant byte address 0x4 - core index']
  #allocation1 [shape = 'u32[144,128]{1,0:T(1,128)}', space=vmem, size = 0x12000, scoped, tag = 'internal scratch']
  %s0 = inlined_call_operand.vmem [shape: bf16[64,128], index: 0, kind: input, shape index: {}]
  %s1 = inlined_call_operand.vmem [shape: f32[1,128], index: 1, kind: input, shape index: {}]
  %s2 = inlined_call_operand.vmem [shape: f32[1,128], index: 2, kind: input, shape index: {}]
  %s3 = inlined_call_operand.vmem [shape: f32[64,128], index: 3, kind: output, shape index: {}]
  %s4 = sld [smem:[#allocation0]]
  $region22: #{downsample_forward.5} parent=0
    _
  %s6 = ssub.s32 1, %s4
  %s7 = scalar_select 0, %s6, %s4
  // Predicated region
  $region2: #{downsample_forward.5} parent=0 // pred_check
    _
  $region3: #{downsample_forward.5} parent=0 // pred_check_branch
    %9 = sbr.rel (0) target = $region5
  $region4: #{downsample_forward.5} parent=0 // pred_region
    _
  $region5: #{downsample_forward.5} parent=0 // pred_fallthru
    _
  // Predicated region
  $region6: #{downsample_forward.5} parent=0 // pred_check
    _
  $region7: #{downsample_forward.5} parent=0 // pred_check_branch
    %11 = sbr.rel (0) target = $region9
  $region8: #{downsample_forward.5} parent=0 // pred_region
    _
  $region9: #{downsample_forward.5} parent=0 // pred_fallthru
    _
  // Predicated region
  $region10: #{downsample_forward.5} parent=0 // pred_check
    _
  $region11: #{downsample_forward.5} parent=0 // pred_check_branch
    %13 = sbr.rel (0) target = $region13
  $region12: #{downsample_forward.5} parent=0 // pred_region
    _
  $region13: #{downsample_forward.5} parent=0 // pred_fallthru
    _
  %v14 = vld [vmem:[%s0] sm:$0xf]
  %v15 = vld [vmem:[%s0 + $0x4] sm:$0xf]
  %v16 = vld [vmem:[%s0 + $0x8] sm:$0xf]
  %v17 = vld [vmem:[%s0 + $0xc] sm:$0xf]
  %v18 = vld [vmem:[%s0 + $0x10] sm:$0xf]
  %v19 = vld [vmem:[%s0 + $0x14] sm:$0xf]
  %v20 = vld [vmem:[%s0 + $0x18] sm:$0xf]
  %v21 = vld [vmem:[%s0 + $0x1c] sm:$0xf]
  %v22 = vunpack.c.l.bf16 %v14
  %v23 = vunpack.c.l.bf16 %v15
  %v24 = vunpack.c.l.bf16 %v16
  %v25 = vunpack.c.l.bf16 %v17
  %v26 = vunpack.c.l.bf16 %v18
  %v27 = vunpack.c.l.bf16 %v19
  %v28 = vunpack.c.l.bf16 %v20
  %v29 = vunpack.c.l.bf16 %v21
  %v30 = vld [vmem:[%s1] sm:$0x1]
  %v32 = vlaneseq
  %v33 = vshrl.u32 %v32, 7
  %v34 = vsub.s32 0, %v33
  %v35 = vrot.slane %v30, %v34
  %v37 = vmul.f32 %v22, %v35
  %v38 = vmul.f32 %v23, %v35
  %v39 = vmul.f32 %v24, %v35
  %v40 = vmul.f32 %v25, %v35
  %v41 = vmul.f32 %v26, %v35
  %v42 = vmul.f32 %v27, %v35
  %v43 = vmul.f32 %v28, %v35
  %v44 = vmul.f32 %v29, %v35
  %v45 = vld [vmem:[%s2] sm:$0x1]
  %v47 = vlaneseq
  %v48 = vshrl.u32 %v47, 7
  %v49 = vsub.s32 0, %v48
  %v50 = vrot.slane %v45, %v49
  %v52 = vadd.f32 %v37, %v50
  %v53 = vadd.f32 %v38, %v50
  %v54 = vadd.f32 %v39, %v50
  %v55 = vadd.f32 %v40, %v50
  %v56 = vadd.f32 %v41, %v50
  %v57 = vadd.f32 %v42, %v50
  %v58 = vadd.f32 %v43, %v50
  %v59 = vadd.f32 %v44, %v50
  %v60 = vmax.f32 %v52, 0.0
  %v61 = vmax.f32 %v53, 0.0
  %v62 = vmax.f32 %v54, 0.0
  %v63 = vmax.f32 %v55, 0.0
  %v64 = vmax.f32 %v56, 0.0
  %v65 = vmax.f32 %v57, 0.0
  %v66 = vmax.f32 %v58, 0.0
  %v67 = vmax.f32 %v59, 0.0
  %68 = vst [vmem:[%s3] sm:$0xff] %v60
  %69 = vst [vmem:[%s3 + $0x8] sm:$0xff] %v61
  %70 = vst [vmem:[%s3 + $0x10] sm:$0xff] %v62
  %71 = vst [vmem:[%s3 + $0x18] sm:$0xff] %v63
  %72 = vst [vmem:[%s3 + $0x20] sm:$0xff] %v64
  %73 = vst [vmem:[%s3 + $0x28] sm:$0xff] %v65
  %74 = vst [vmem:[%s3 + $0x30] sm:$0xff] %v66
  %75 = vst [vmem:[%s3 + $0x38] sm:$0xff] %v67
  // Predicated region
  $region14: #{downsample_forward.5} parent=0 // pred_check
    _
  $region15: #{downsample_forward.5} parent=0 // pred_check_branch
    %77 = sbr.rel (0) target = $region17
  $region16: #{downsample_forward.5} parent=0 // pred_region
    _
  $region17: #{downsample_forward.5} parent=0 // pred_fallthru
    _
  // Predicated region
  $region18: #{downsample_forward.5} parent=0 // pred_check
    _
  $region19: #{downsample_forward.5} parent=0 // pred_check_branch
    %79 = sbr.rel (0) target = $region21
  $region20: #{downsample_forward.5} parent=0 // pred_region
    _
  $region21: #{downsample_forward.5} parent=0 // pred_fallthru
    _

// kernel: downsample_forward.3
$region0: #{downsample_forward.3}
  #allocation0 [shape = 'u32[]', space=smem, size = 0x4, offset = 0x4, fixed_abs, tag = 'smem constant byte address 0x4 - core index']
  #allocation1 [shape = 'u32[144,128]{1,0:T(1,128)}', space=vmem, size = 0x12000, scoped, tag = 'internal scratch']
  #allocation2 [shape = 'bf16[2,10,10,4]{3,2,1,0:T(8,128)(2,1)}', space=vmem, size = 0x14000, scoped, tag = 'scratch operand']
  %s0 = inlined_call_operand.vmem [shape: bf16[16,2,8,8], index: 0, kind: input, shape index: {}]
  %s1 = inlined_call_operand.vmem [shape: f32[1,4], index: 1, kind: input, shape index: {}, may-alias: {1,2}]
  %s2 = inlined_call_operand.vmem [shape: f32[1,4], index: 2, kind: input, shape index: {}, may-alias: {1,2}]
  %s3 = inlined_call_operand.vmem [shape: bf16[36,64], index: 3, kind: input, shape index: {}]
  %s4 = inlined_call_operand.vmem [shape: f32[1,64], index: 4, kind: input, shape index: {}]
  %s5 = inlined_call_operand.vmem [shape: bf16[128,64], index: 5, kind: output, shape index: {0}]
  %s6 = inlined_call_operand.vmem [shape: f32[1,64], index: 6, kind: output, shape index: {1}]
  %s7 = inlined_call_operand.vmem [shape: f32[1,64], index: 7, kind: output, shape index: {2}]
  %8 = xla_tuple %s5, %s6, %s7
  %s9 = sld [smem:[#allocation0]]
  $region54: #{downsample_forward.3} parent=0
    _
  %s11 = ssub.s32 1, %s9
  %s12 = scalar_select 0, %s11, %s9
  // Predicated region
  $region2: #{downsample_forward.3} parent=0 // pred_check
    _
  $region3: #{downsample_forward.3} parent=0 // pred_check_branch
    %14 = sbr.rel (0) target = $region5
  $region4: #{downsample_forward.3} parent=0 // pred_region
    _
  $region5: #{downsample_forward.3} parent=0 // pred_fallthru
    _
  // Predicated region
  $region6: #{downsample_forward.3} parent=0 // pred_check
    _
  $region7: #{downsample_forward.3} parent=0 // pred_check_branch
    %16 = sbr.rel (0) target = $region9
  $region8: #{downsample_forward.3} parent=0 // pred_region
    _
  $region9: #{downsample_forward.3} parent=0 // pred_fallthru
    _
  // Predicated region
  $region10: #{downsample_forward.3} parent=0 // pred_check
    _
  $region11: #{downsample_forward.3} parent=0 // pred_check_branch
    %18 = sbr.rel (0) target = $region13
  $region12: #{downsample_forward.3} parent=0 // pred_region
    _
  $region13: #{downsample_forward.3} parent=0 // pred_fallthru
    _
  // Predicated region
  $region14: #{downsample_forward.3} parent=0 // pred_check
    _
  $region15: #{downsample_forward.3} parent=0 // pred_check_branch
    %20 = sbr.rel (0) target = $region17
  $region16: #{downsample_forward.3} parent=0 // pred_region
    _
  $region17: #{downsample_forward.3} parent=0 // pred_fallthru
    _
  // Predicated region
  $region18: #{downsample_forward.3} parent=0 // pred_check
    _
  $region19: #{downsample_forward.3} parent=0 // pred_check_branch
    %22 = sbr.rel (0) target = $region21
  $region20: #{downsample_forward.3} parent=0 // pred_region
    _
  $region21: #{downsample_forward.3} parent=0 // pred_fallthru
    _
  %v24 = vld [vmem:[%s0] sm:$0xf]
  %v25 = vld [vmem:[%s0 + $0x4] sm:$0xf]
  %v26 = vld [vmem:[%s0 + $0x8] sm:$0xf]
  %v27 = vld [vmem:[%s0 + $0xc] sm:$0xf]
  %v28 = vld [vmem:[%s0 + $0x10] sm:$0xf]
  %v29 = vld [vmem:[%s0 + $0x14] sm:$0xf]
  %v30 = vld [vmem:[%s0 + $0x18] sm:$0xf]
  %v31 = vld [vmem:[%s0 + $0x1c] sm:$0xf]
  %v32 = vld [vmem:[%s0 + $0x20] sm:$0xf]
  %v33 = vld [vmem:[%s0 + $0x24] sm:$0xf]
  %v34 = vld [vmem:[%s0 + $0x28] sm:$0xf]
  %v35 = vld [vmem:[%s0 + $0x2c] sm:$0xf]
  %v36 = vld [vmem:[%s0 + $0x30] sm:$0xf]
  %v37 = vld [vmem:[%s0 + $0x34] sm:$0xf]
  %v38 = vld [vmem:[%s0 + $0x38] sm:$0xf]
  %v39 = vld [vmem:[%s0 + $0x3c] sm:$0xf]
  %v40 = vld [vmem:[%s0 + $0x40] sm:$0xf]
  %v41 = vld [vmem:[%s0 + $0x44] sm:$0xf]
  %v42 = vld [vmem:[%s0 + $0x48] sm:$0xf]
  %v43 = vld [vmem:[%s0 + $0x4c] sm:$0xf]
  %v44 = vld [vmem:[%s0 + $0x50] sm:$0xf]
  %v45 = vld [vmem:[%s0 + $0x54] sm:$0xf]
  %v46 = vld [vmem:[%s0 + $0x58] sm:$0xf]
  %v47 = vld [vmem:[%s0 + $0x5c] sm:$0xf]
  %v48 = vld [vmem:[%s0 + $0x60] sm:$0xf]
  %v49 = vld [vmem:[%s0 + $0x64] sm:$0xf]
  %v50 = vld [vmem:[%s0 + $0x68] sm:$0xf]
  %v51 = vld [vmem:[%s0 + $0x6c] sm:$0xf]
  %v52 = vld [vmem:[%s0 + $0x70] sm:$0xf]
  %v53 = vld [vmem:[%s0 + $0x74] sm:$0xf]
  %v54 = vld [vmem:[%s0 + $0x78] sm:$0xf]
  %v55 = vld [vmem:[%s0 + $0x7c] sm:$0xf]
  %v56 = vmax.bf16 %v24, %v25
  %v57 = vmax.bf16 %v26, %v27
  %v58 = vmax.bf16 %v28, %v29
  %v59 = vmax.bf16 %v30, %v31
  %v60 = vmax.bf16 %v32, %v33
  %v61 = vmax.bf16 %v34, %v35
  %v62 = vmax.bf16 %v36, %v37
  %v63 = vmax.bf16 %v38, %v39
  %v64 = vmax.bf16 %v40, %v41
  %v65 = vmax.bf16 %v42, %v43
  %v66 = vmax.bf16 %v44, %v45
  %v67 = vmax.bf16 %v46, %v47
  %v68 = vmax.bf16 %v48, %v49
  %v69 = vmax.bf16 %v50, %v51
  %v70 = vmax.bf16 %v52, %v53
  %v71 = vmax.bf16 %v54, %v55
  %88 = vrot.lane.b32.xlu0 %v56, 124
  %v89 = vpop.permute.xlu0 %88
  %90 = vrot.lane.b32.xlu0 %v57, 124
  %v91 = vpop.permute.xlu0 %90
  %92 = vrot.lane.b32.xlu0 %v58, 124
  %v93 = vpop.permute.xlu0 %92
  %94 = vrot.lane.b32.xlu0 %v59, 124
  %v95 = vpop.permute.xlu0 %94
  %96 = vrot.lane.b32.xlu0 %v60, 124
  %v97 = vpop.permute.xlu0 %96
  %98 = vrot.lane.b32.xlu0 %v61, 124
  %v99 = vpop.permute.xlu0 %98
  %100 = vrot.lane.b32.xlu0 %v62, 124
  %v101 = vpop.permute.xlu0 %100
  %102 = vrot.lane.b32.xlu0 %v63, 124
  %v103 = vpop.permute.xlu0 %102
  %104 = vrot.lane.b32.xlu0 %v64, 124
  %v105 = vpop.permute.xlu0 %104
  %106 = vrot.lane.b32.xlu0 %v65, 124
  %v107 = vpop.permute.xlu0 %106
  %108 = vrot.lane.b32.xlu0 %v66, 124
  %v109 = vpop.permute.xlu0 %108
  %110 = vrot.lane.b32.xlu0 %v67, 124
  %v111 = vpop.permute.xlu0 %110
  %112 = vrot.lane.b32.xlu0 %v68, 124
  %v113 = vpop.permute.xlu0 %112
  %114 = vrot.lane.b32.xlu0 %v69, 124
  %v115 = vpop.permute.xlu0 %114
  %116 = vrot.lane.b32.xlu0 %v70, 124
  %v117 = vpop.permute.xlu0 %116
  %118 = vrot.lane.b32.xlu0 %v71, 124
  %v119 = vpop.permute.xlu0 %118
  %v136 = vmax.bf16 %v56, %v89
  %v137 = vmax.bf16 %v57, %v91
  %v138 = vmax.bf16 %v58, %v93
  %v139 = vmax.bf16 %v59, %v95
  %v140 = vmax.bf16 %v60, %v97
  %v141 = vmax.bf16 %v61, %v99
  %v142 = vmax.bf16 %v62, %v101
  %v143 = vmax.bf16 %v63, %v103
  %v144 = vmax.bf16 %v64, %v105
  %v145 = vmax.bf16 %v65, %v107
  %v146 = vmax.bf16 %v66, %v109
  %v147 = vmax.bf16 %v67, %v111
  %v148 = vmax.bf16 %v68, %v113
  %v149 = vmax.bf16 %v69, %v115
  %v150 = vmax.bf16 %v70, %v117
  %v151 = vmax.bf16 %v71, %v119
  %p152 = scmp.eq.s32.totalorder 0, 0
  // Predicated region
  $region22: #{downsample_forward.3} parent=0 // pred_check
    %p153 = pneg %p152
  $region23: #{downsample_forward.3} parent=0 // pred_check_branch
    %155 = sbr.rel (%p153) target = $region25
  $region24: #{downsample_forward.3} parent=0 // pred_region
    %vm156 = vcmask 27648
    %157 = vst.msk [vmem:[#allocation2] sm:$0xf] %vm156, 0
    %vm158 = vcmask 24576
    %159 = vst.msk [vmem:[#allocation2 + $0x4] sm:$0x1] %vm158, 0
    %160 = vst.msk [vmem:[#allocation2 + $0x8] sm:$0xf] %vm156, 0
    %161 = vst.msk [vmem:[#allocation2 + $0xc] sm:$0x1] %vm158, 0
    %162 = vst.msk [vmem:[#allocation2 + $0x10] sm:$0xf] %vm156, 0
    %163 = vst.msk [vmem:[#allocation2 + $0x14] sm:$0x1] %vm158, 0
    %164 = vst.msk [vmem:[#allocation2 + $0x18] sm:$0xf] %vm156, 0
    %165 = vst.msk [vmem:[#allocation2 + $0x1c] sm:$0x1] %vm158, 0
    %166 = vst.msk [vmem:[#allocation2 + $0x20] sm:$0xf] %vm156, 0
    %167 = vst.msk [vmem:[#allocation2 + $0x24] sm:$0x1] %vm158, 0
    %168 = vst.msk [vmem:[#allocation2 + $0x28] sm:$0xf] %vm156, 0
    %169 = vst.msk [vmem:[#allocation2 + $0x2c] sm:$0x1] %vm158, 0
    %170 = vst.msk [vmem:[#allocation2 + $0x30] sm:$0xf] %vm156, 0
    %171 = vst.msk [vmem:[#allocation2 + $0x34] sm:$0x1] %vm158, 0
    %172 = vst.msk [vmem:[#allocation2 + $0x38] sm:$0xf] %vm156, 0
    %173 = vst.msk [vmem:[#allocation2 + $0x3c] sm:$0x1] %vm158, 0
    %174 = vst.msk [vmem:[#allocation2 + $0x40] sm:$0xf] %vm156, 0
    %175 = vst.msk [vmem:[#allocation2 + $0x44] sm:$0x1] %vm158, 0
    %176 = vst.msk [vmem:[#allocation2 + $0x48] sm:$0xf] %vm156, 0
    %177 = vst.msk [vmem:[#allocation2 + $0x4c] sm:$0x1] %vm158, 0
    %178 = vst.msk [vmem:[#allocation2 + $0x50] sm:$0xf] %vm156, 0
    %179 = vst.msk [vmem:[#allocation2 + $0x54] sm:$0x1] %vm158, 0
    %180 = vst.msk [vmem:[#allocation2 + $0x58] sm:$0xf] %vm156, 0
    %181 = vst.msk [vmem:[#allocation2 + $0x5c] sm:$0x1] %vm158, 0
    %182 = vst.msk [vmem:[#allocation2 + $0x60] sm:$0xf] %vm156, 0
    %183 = vst.msk [vmem:[#allocation2 + $0x64] sm:$0x1] %vm158, 0
    %184 = vst.msk [vmem:[#allocation2 + $0x68] sm:$0xf] %vm156, 0
    %185 = vst.msk [vmem:[#allocation2 + $0x6c] sm:$0x1] %vm158, 0
    %186 = vst.msk [vmem:[#allocation2 + $0x70] sm:$0xf] %vm156, 0
    %187 = vst.msk [vmem:[#allocation2 + $0x74] sm:$0x1] %vm158, 0
    %188 = vst.msk [vmem:[#allocation2 + $0x78] sm:$0xf] %vm156, 0
    %189 = vst.msk [vmem:[#allocation2 + $0x7c] sm:$0x1] %vm158, 0
    %190 = vst.msk [vmem:[#allocation2 + $0x80] sm:$0xf] %vm156, 0
    %191 = vst.msk [vmem:[#allocation2 + $0x84] sm:$0x1] %vm158, 0
    %192 = vst.msk [vmem:[#allocation2 + $0x88] sm:$0xf] %vm156, 0
    %193 = vst.msk [vmem:[#allocation2 + $0x8c] sm:$0x1] %vm158, 0
    %194 = vst.msk [vmem:[#allocation2 + $0x90] sm:$0xf] %vm156, 0
    %195 = vst.msk [vmem:[#allocation2 + $0x94] sm:$0x1] %vm158, 0
    %196 = vst.msk [vmem:[#allocation2 + $0x98] sm:$0xf] %vm156, 0
    %197 = vst.msk [vmem:[#allocation2 + $0x9c] sm:$0x1] %vm158, 0
  $region25: #{downsample_forward.3} parent=0 // pred_fallthru
    _
  %v199 = vshrl.u32 %v136, 16
  %v201 = vrot.slane %v199, 7
  %v202 = vshll.u32 %v136, 16
  %v204 = vor.u32 %v201, %v202
  %v205 = vrot.slane %v201, 4
  %v207 = vshrl.u32 %v137, 16
  %v209 = vrot.slane %v207, 7
  %v210 = vshll.u32 %v137, 16
  %v212 = vor.u32 %v209, %v210
  %v213 = vrot.slane %v209, 4
  %v215 = vshrl.u32 %v138, 16
  %v217 = vrot.slane %v215, 7
  %v218 = vshll.u32 %v138, 16
  %v220 = vor.u32 %v217, %v218
  %v221 = vrot.slane %v217, 4
  %v223 = vshrl.u32 %v139, 16
  %v225 = vrot.slane %v223, 7
  %v226 = vshll.u32 %v139, 16
  %v228 = vor.u32 %v225, %v226
  %v229 = vrot.slane %v225, 4
  %v231 = vshrl.u32 %v140, 16
  %v233 = vrot.slane %v231, 7
  %v234 = vshll.u32 %v140, 16
  %v236 = vor.u32 %v233, %v234
  %v237 = vrot.slane %v233, 4
  %v239 = vshrl.u32 %v141, 16
  %v241 = vrot.slane %v239, 7
  %v242 = vshll.u32 %v141, 16
  %v244 = vor.u32 %v241, %v242
  %v245 = vrot.slane %v241, 4
  %v247 = vshrl.u32 %v142, 16
  %v249 = vrot.slane %v247, 7
  %v250 = vshll.u32 %v142, 16
  %v252 = vor.u32 %v249, %v250
  %v253 = vrot.slane %v249, 4
  %v255 = vshrl.u32 %v143, 16
  %v257 = vrot.slane %v255, 7
  %v258 = vshll.u32 %v143, 16
  %v260 = vor.u32 %v257, %v258
  %v261 = vrot.slane %v257, 4
  %v263 = vshrl.u32 %v144, 16
  %v265 = vrot.slane %v263, 7
  %v266 = vshll.u32 %v144, 16
  %v268 = vor.u32 %v265, %v266
  %v269 = vrot.slane %v265, 4
  %v271 = vshrl.u32 %v145, 16
  %v273 = vrot.slane %v271, 7
  %v274 = vshll.u32 %v145, 16
  %v276 = vor.u32 %v273, %v274
  %v277 = vrot.slane %v273, 4
  %v279 = vshrl.u32 %v146, 16
  %v281 = vrot.slane %v279, 7
  %v282 = vshll.u32 %v146, 16
  %v284 = vor.u32 %v281, %v282
  %v285 = vrot.slane %v281, 4
  %v287 = vshrl.u32 %v147, 16
  %v289 = vrot.slane %v287, 7
  %v290 = vshll.u32 %v147, 16
  %v292 = vor.u32 %v289, %v290
  %v293 = vrot.slane %v289, 4
  %v295 = vshrl.u32 %v148, 16
  %v297 = vrot.slane %v295, 7
  %v298 = vshll.u32 %v148, 16
  %v300 = vor.u32 %v297, %v298
  %v301 = vrot.slane %v297, 4
  %v303 = vshrl.u32 %v149, 16
  %v305 = vrot.slane %v303, 7
  %v306 = vshll.u32 %v149, 16
  %v308 = vor.u32 %v305, %v306
  %v309 = vrot.slane %v305, 4
  %v311 = vshrl.u32 %v150, 16
  %v313 = vrot.slane %v311, 7
  %v314 = vshll.u32 %v150, 16
  %v316 = vor.u32 %v313, %v314
  %v317 = vrot.slane %v313, 4
  %v319 = vshrl.u32 %v151, 16
  %v321 = vrot.slane %v319, 7
  %v322 = vshll.u32 %v151, 16
  %v324 = vor.u32 %v321, %v322
  %v325 = vrot.slane %v321, 4
  %s358 = scalar_lea.vmem [#allocation2], 8
  %vm359 = vcmask 27648
  %vm360 = vsmask.f32 7938
  %vm361 = vmand %vm359, %vm360
  %v362 = vld [vmem:[%s358] sm:$0xf]
  %v363 = vsel %vm361, %v204, %v362
  %364 = vst [vmem:[%s358] sm:$0xf] %v363
  %vm365 = vcmask 24576
  %vm366 = vsmask.f32 256
  %vm367 = vmand %vm365, %vm366
  %v368 = vld [vmem:[%s358 + $0x4] sm:$0x1]
  %v369 = vsel %vm367, %v205, %v368
  %370 = vst [vmem:[%s358 + $0x4] sm:$0x1] %v369
  %v371 = vld [vmem:[%s358 + $0x8] sm:$0xf]
  %v372 = vsel %vm361, %v212, %v371
  %373 = vst [vmem:[%s358 + $0x8] sm:$0xf] %v372
  %v374 = vld [vmem:[%s358 + $0xc] sm:$0x1]
  %v375 = vsel %vm367, %v213, %v374
  %376 = vst [vmem:[%s358 + $0xc] sm:$0x1] %v375
  %v377 = vld [vmem:[%s358 + $0x10] sm:$0xf]
  %v378 = vsel %vm361, %v220, %v377
  %379 = vst [vmem:[%s358 + $0x10] sm:$0xf] %v378
  %v380 = vld [vmem:[%s358 + $0x14] sm:$0x1]
  %v381 = vsel %vm367, %v221, %v380
  %382 = vst [vmem:[%s358 + $0x14] sm:$0x1] %v381
  %v383 = vld [vmem:[%s358 + $0x18] sm:$0xf]
  %v384 = vsel %vm361, %v228, %v383
  %385 = vst [vmem:[%s358 + $0x18] sm:$0xf] %v384
  %v386 = vld [vmem:[%s358 + $0x1c] sm:$0x1]
  %v387 = vsel %vm367, %v229, %v386
  %388 = vst [vmem:[%s358 + $0x1c] sm:$0x1] %v387
  %v389 = vld [vmem:[%s358 + $0x20] sm:$0xf]
  %v390 = vsel %vm361, %v236, %v389
  %391 = vst [vmem:[%s358 + $0x20] sm:$0xf] %v390
  %v392 = vld [vmem:[%s358 + $0x24] sm:$0x1]
  %v393 = vsel %vm367, %v237, %v392
  %394 = vst [vmem:[%s358 + $0x24] sm:$0x1] %v393
  %v395 = vld [vmem:[%s358 + $0x28] sm:$0xf]
  %v396 = vsel %vm361, %v244, %v395
  %397 = vst [vmem:[%s358 + $0x28] sm:$0xf] %v396
  %v398 = vld [vmem:[%s358 + $0x2c] sm:$0x1]
  %v399 = vsel %vm367, %v245, %v398
  %400 = vst [vmem:[%s358 + $0x2c] sm:$0x1] %v399
  %v401 = vld [vmem:[%s358 + $0x30] sm:$0xf]
  %v402 = vsel %vm361, %v252, %v401
  %403 = vst [vmem:[%s358 + $0x30] sm:$0xf] %v402
  %v404 = vld [vmem:[%s358 + $0x34] sm:$0x1]
  %v405 = vsel %vm367, %v253, %v404
  %406 = vst [vmem:[%s358 + $0x34] sm:$0x1] %v405
  %v407 = vld [vmem:[%s358 + $0x38] sm:$0xf]
  %v408 = vsel %vm361, %v260, %v407
  %409 = vst [vmem:[%s358 + $0x38] sm:$0xf] %v408
  %v410 = vld [vmem:[%s358 + $0x3c] sm:$0x1]
  %v411 = vsel %vm367, %v261, %v410
  %412 = vst [vmem:[%s358 + $0x3c] sm:$0x1] %v411
  %v413 = vld [vmem:[%s358 + $0x50] sm:$0xf]
  %v414 = vsel %vm361, %v268, %v413
  %415 = vst [vmem:[%s358 + $0x50] sm:$0xf] %v414
  %v416 = vld [vmem:[%s358 + $0x54] sm:$0x1]
  %v417 = vsel %vm367, %v269, %v416
  %418 = vst [vmem:[%s358 + $0x54] sm:$0x1] %v417
  %v419 = vld [vmem:[%s358 + $0x58] sm:$0xf]
  %v420 = vsel %vm361, %v276, %v419
  %421 = vst [vmem:[%s358 + $0x58] sm:$0xf] %v420
  %v422 = vld [vmem:[%s358 + $0x5c] sm:$0x1]
  %v423 = vsel %vm367, %v277, %v422
  %424 = vst [vmem:[%s358 + $0x5c] sm:$0x1] %v423
  %v425 = vld [vmem:[%s358 + $0x60] sm:$0xf]
  %v426 = vsel %vm361, %v284, %v425
  %427 = vst [vmem:[%s358 + $0x60] sm:$0xf] %v426
  %v428 = vld [vmem:[%s358 + $0x64] sm:$0x1]
  %v429 = vsel %vm367, %v285, %v428
  %430 = vst [vmem:[%s358 + $0x64] sm:$0x1] %v429
  %v431 = vld [vmem:[%s358 + $0x68] sm:$0xf]
  %v432 = vsel %vm361, %v292, %v431
  %433 = vst [vmem:[%s358 + $0x68] sm:$0xf] %v432
  %v434 = vld [vmem:[%s358 + $0x6c] sm:$0x1]
  %v435 = vsel %vm367, %v293, %v434
  %436 = vst [vmem:[%s358 + $0x6c] sm:$0x1] %v435
  %v437 = vld [vmem:[%s358 + $0x70] sm:$0xf]
  %v438 = vsel %vm361, %v300, %v437
  %439 = vst [vmem:[%s358 + $0x70] sm:$0xf] %v438
  %v440 = vld [vmem:[%s358 + $0x74] sm:$0x1]
  %v441 = vsel %vm367, %v301, %v440
  %442 = vst [vmem:[%s358 + $0x74] sm:$0x1] %v441
  %v443 = vld [vmem:[%s358 + $0x78] sm:$0xf]
  %v444 = vsel %vm361, %v308, %v443
  %445 = vst [vmem:[%s358 + $0x78] sm:$0xf] %v444
  %v446 = vld [vmem:[%s358 + $0x7c] sm:$0x1]
  %v447 = vsel %vm367, %v309, %v446
  %448 = vst [vmem:[%s358 + $0x7c] sm:$0x1] %v447
  %v449 = vld [vmem:[%s358 + $0x80] sm:$0xf]
  %v450 = vsel %vm361, %v316, %v449
  %451 = vst [vmem:[%s358 + $0x80] sm:$0xf] %v450
  %v452 = vld [vmem:[%s358 + $0x84] sm:$0x1]
  %v453 = vsel %vm367, %v317, %v452
  %454 = vst [vmem:[%s358 + $0x84] sm:$0x1] %v453
  %v455 = vld [vmem:[%s358 + $0x88] sm:$0xf]
  %v456 = vsel %vm361, %v324, %v455
  %457 = vst [vmem:[%s358 + $0x88] sm:$0xf] %v456
  %v458 = vld [vmem:[%s358 + $0x8c] sm:$0x1]
  %v459 = vsel %vm367, %v325, %v458
  %460 = vst [vmem:[%s358 + $0x8c] sm:$0x1] %v459
  %v461 = vld [vmem:[#allocation2] sm:$0xf]
  %v462 = vld [vmem:[#allocation2 + $0x8] sm:$0xf]
  %v463 = vld [vmem:[#allocation2 + $0x10] sm:$0xf]
  %v464 = vld [vmem:[#allocation2 + $0x18] sm:$0xf]
  %v465 = vld [vmem:[#allocation2 + $0x20] sm:$0xf]
  %v466 = vld [vmem:[#allocation2 + $0x28] sm:$0xf]
  %v467 = vld [vmem:[#allocation2 + $0x30] sm:$0xf]
  %v468 = vld [vmem:[#allocation2 + $0x38] sm:$0xf]
  %v469 = vld [vmem:[#allocation2 + $0x50] sm:$0xf]
  %v470 = vld [vmem:[#allocation2 + $0x58] sm:$0xf]
  %v471 = vld [vmem:[#allocation2 + $0x60] sm:$0xf]
  %v472 = vld [vmem:[#allocation2 + $0x68] sm:$0xf]
  %v473 = vld [vmem:[#allocation2 + $0x70] sm:$0xf]
  %v474 = vld [vmem:[#allocation2 + $0x78] sm:$0xf]
  %v475 = vld [vmem:[#allocation2 + $0x80] sm:$0xf]
  %v476 = vld [vmem:[#allocation2 + $0x88] sm:$0xf]
  %v477 = vld [vmem:[#allocation2 + $0x4] sm:$0x1]
  %v478 = vld [vmem:[#allocation2 + $0xc] sm:$0x1]
  %v479 = vld [vmem:[#allocation2 + $0x14] sm:$0x1]
  %v480 = vld [vmem:[#allocation2 + $0x1c] sm:$0x1]
  %v481 = vld [vmem:[#allocation2 + $0x24] sm:$0x1]
  %v482 = vld [vmem:[#allocation2 + $0x2c] sm:$0x1]
  %v483 = vld [vmem:[#allocation2 + $0x34] sm:$0x1]
  %v484 = vld [vmem:[#allocation2 + $0x3c] sm:$0x1]
  %v485 = vld [vmem:[#allocation2 + $0x54] sm:$0x1]
  %v486 = vld [vmem:[#allocation2 + $0x5c] sm:$0x1]
  %v487 = vld [vmem:[#allocation2 + $0x64] sm:$0x1]
  %v488 = vld [vmem:[#allocation2 + $0x6c] sm:$0x1]
  %v489 = vld [vmem:[#allocation2 + $0x74] sm:$0x1]
  %v490 = vld [vmem:[#allocation2 + $0x7c] sm:$0x1]
  %v491 = vld [vmem:[#allocation2 + $0x84] sm:$0x1]
  %v492 = vld [vmem:[#allocation2 + $0x8c] sm:$0x1]
  %vm493 = vsmask.f32 3328
  %vm494 = vsmask.f32 7440
  %vm495 = vmor %vm493, %vm494
  %v497 = vshrl.u32 %v461, 16
  %v499 = vrot.slane %v497, 4
  %v500 = vshll.u32 %v461, 16
  %v502 = vrot.slane %v500, 5
  %v503 = vor.u32 %v499, %v502
  %v504 = vrot.slane %v503, 4
  %v506 = vshll.u32 %v477, 16
  %v508 = vrot.slane %v506, 5
  %v509 = vsel %vm495, %v504, %v508
  %v511 = vshrl.u32 %v462, 16
  %v513 = vrot.slane %v511, 4
  %v514 = vshll.u32 %v462, 16
  %v516 = vrot.slane %v514, 5
  %v517 = vor.u32 %v513, %v516
  %v518 = vrot.slane %v517, 4
  %v520 = vshll.u32 %v478, 16
  %v522 = vrot.slane %v520, 5
  %v523 = vsel %vm495, %v518, %v522
  %v525 = vshrl.u32 %v463, 16
  %v527 = vrot.slane %v525, 4
  %v528 = vshll.u32 %v463, 16
  %v530 = vrot.slane %v528, 5
  %v531 = vor.u32 %v527, %v530
  %v532 = vrot.slane %v531, 4
  %v534 = vshll.u32 %v479, 16
  %v536 = vrot.slane %v534, 5
  %v537 = vsel %vm495, %v532, %v536
  %v539 = vshrl.u32 %v464, 16
  %v541 = vrot.slane %v539, 4
  %v542 = vshll.u32 %v464, 16
  %v544 = vrot.slane %v542, 5
  %v545 = vor.u32 %v541, %v544
  %v546 = vrot.slane %v545, 4
  %v548 = vshll.u32 %v480, 16
  %v550 = vrot.slane %v548, 5
  %v551 = vsel %vm495, %v546, %v550
  %v553 = vshrl.u32 %v465, 16
  %v555 = vrot.slane %v553, 4
  %v556 = vshll.u32 %v465, 16
  %v558 = vrot.slane %v556, 5
  %v559 = vor.u32 %v555, %v558
  %v560 = vrot.slane %v559, 4
  %v562 = vshll.u32 %v481, 16
  %v564 = vrot.slane %v562, 5
  %v565 = vsel %vm495, %v560, %v564
  %v567 = vshrl.u32 %v466, 16
  %v569 = vrot.slane %v567, 4
  %v570 = vshll.u32 %v466, 16
  %v572 = vrot.slane %v570, 5
  %v573 = vor.u32 %v569, %v572
  %v574 = vrot.slane %v573, 4
  %v576 = vshll.u32 %v482, 16
  %v578 = vrot.slane %v576, 5
  %v579 = vsel %vm495, %v574, %v578
  %v581 = vshrl.u32 %v467, 16
  %v583 = vrot.slane %v581, 4
  %v584 = vshll.u32 %v467, 16
  %v586 = vrot.slane %v584, 5
  %v587 = vor.u32 %v583, %v586
  %v588 = vrot.slane %v587, 4
  %v590 = vshll.u32 %v483, 16
  %v592 = vrot.slane %v590, 5
  %v593 = vsel %vm495, %v588, %v592
  %v595 = vshrl.u32 %v468, 16
  %v597 = vrot.slane %v595, 4
  %v598 = vshll.u32 %v468, 16
  %v600 = vrot.slane %v598, 5
  %v601 = vor.u32 %v597, %v600
  %v602 = vrot.slane %v601, 4
  %v604 = vshll.u32 %v484, 16
  %v606 = vrot.slane %v604, 5
  %v607 = vsel %vm495, %v602, %v606
  %v609 = vshrl.u32 %v469, 16
  %v611 = vrot.slane %v609, 4
  %v612 = vshll.u32 %v469, 16
  %v614 = vrot.slane %v612, 5
  %v615 = vor.u32 %v611, %v614
  %v616 = vrot.slane %v615, 4
  %v618 = vshll.u32 %v485, 16
  %v620 = vrot.slane %v618, 5
  %v621 = vsel %vm495, %v616, %v620
  %v623 = vshrl.u32 %v470, 16
  %v625 = vrot.slane %v623, 4
  %v626 = vshll.u32 %v470, 16
  %v628 = vrot.slane %v626, 5
  %v629 = vor.u32 %v625, %v628
  %v630 = vrot.slane %v629, 4
  %v632 = vshll.u32 %v486, 16
  %v634 = vrot.slane %v632, 5
  %v635 = vsel %vm495, %v630, %v634
  %v637 = vshrl.u32 %v471, 16
  %v639 = vrot.slane %v637, 4
  %v640 = vshll.u32 %v471, 16
  %v642 = vrot.slane %v640, 5
  %v643 = vor.u32 %v639, %v642
  %v644 = vrot.slane %v643, 4
  %v646 = vshll.u32 %v487, 16
  %v648 = vrot.slane %v646, 5
  %v649 = vsel %vm495, %v644, %v648
  %v651 = vshrl.u32 %v472, 16
  %v653 = vrot.slane %v651, 4
  %v654 = vshll.u32 %v472, 16
  %v656 = vrot.slane %v654, 5
  %v657 = vor.u32 %v653, %v656
  %v658 = vrot.slane %v657, 4
  %v660 = vshll.u32 %v488, 16
  %v662 = vrot.slane %v660, 5
  %v663 = vsel %vm495, %v658, %v662
  %v665 = vshrl.u32 %v473, 16
  %v667 = vrot.slane %v665, 4
  %v668 = vshll.u32 %v473, 16
  %v670 = vrot.slane %v668, 5
  %v671 = vor.u32 %v667, %v670
  %v672 = vrot.slane %v671, 4
  %v674 = vshll.u32 %v489, 16
  %v676 = vrot.slane %v674, 5
  %v677 = vsel %vm495, %v672, %v676
  %v679 = vshrl.u32 %v474, 16
  %v681 = vrot.slane %v679, 4
  %v682 = vshll.u32 %v474, 16
  %v684 = vrot.slane %v682, 5
  %v685 = vor.u32 %v681, %v684
  %v686 = vrot.slane %v685, 4
  %v688 = vshll.u32 %v490, 16
  %v690 = vrot.slane %v688, 5
  %v691 = vsel %vm495, %v686, %v690
  %v693 = vshrl.u32 %v475, 16
  %v695 = vrot.slane %v693, 4
  %v696 = vshll.u32 %v475, 16
  %v698 = vrot.slane %v696, 5
  %v699 = vor.u32 %v695, %v698
  %v700 = vrot.slane %v699, 4
  %v702 = vshll.u32 %v491, 16
  %v704 = vrot.slane %v702, 5
  %v705 = vsel %vm495, %v700, %v704
  %v707 = vshrl.u32 %v476, 16
  %v709 = vrot.slane %v707, 4
  %v710 = vshll.u32 %v476, 16
  %v712 = vrot.slane %v710, 5
  %v713 = vor.u32 %v709, %v712
  %v714 = vrot.slane %v713, 4
  %v716 = vshll.u32 %v492, 16
  %v718 = vrot.slane %v716, 5
  %v719 = vsel %vm495, %v714, %v718
  %v720 = vld [vmem:[#allocation2] sm:$0xe]
  %v721 = vld [vmem:[#allocation2 + $0x8] sm:$0xe]
  %v722 = vld [vmem:[#allocation2 + $0x10] sm:$0xe]
  %v723 = vld [vmem:[#allocation2 + $0x18] sm:$0xe]
  %v724 = vld [vmem:[#allocation2 + $0x20] sm:$0xe]
  %v725 = vld [vmem:[#allocation2 + $0x28] sm:$0xe]
  %v726 = vld [vmem:[#allocation2 + $0x30] sm:$0xe]
  %v727 = vld [vmem:[#allocation2 + $0x38] sm:$0xe]
  %v728 = vld [vmem:[#allocation2 + $0x50] sm:$0xe]
  %v729 = vld [vmem:[#allocation2 + $0x58] sm:$0xe]
  %v730 = vld [vmem:[#allocation2 + $0x60] sm:$0xe]
  %v731 = vld [vmem:[#allocation2 + $0x68] sm:$0xe]
  %v732 = vld [vmem:[#allocation2 + $0x70] sm:$0xe]
  %v733 = vld [vmem:[#allocation2 + $0x78] sm:$0xe]
  %v734 = vld [vmem:[#allocation2 + $0x80] sm:$0xe]
  %v735 = vld [vmem:[#allocation2 + $0x88] sm:$0xe]
  %vm768 = vcmask 1042432
  %vm769 = vcmask 1046532
  %vm770 = vmor %vm768, %vm769
  %v771 = vrot.slane %v720, 5
  %v772 = vrot.slane %v771, 4
  %v773 = vrot.slane %v477, 5
  %v774 = vsel %vm770, %v772, %v773
  %v775 = vrot.slane %v721, 5
  %v776 = vrot.slane %v775, 4
  %v777 = vrot.slane %v478, 5
  %v778 = vsel %vm770, %v776, %v777
  %v779 = vrot.slane %v722, 5
  %v780 = vrot.slane %v779, 4
  %v781 = vrot.slane %v479, 5
  %v782 = vsel %vm770, %v780, %v781
  %v783 = vrot.slane %v723, 5
  %v784 = vrot.slane %v783, 4
  %v785 = vrot.slane %v480, 5
  %v786 = vsel %vm770, %v784, %v785
  %v787 = vrot.slane %v724, 5
  %v788 = vrot.slane %v787, 4
  %v789 = vrot.slane %v481, 5
  %v790 = vsel %vm770, %v788, %v789
  %v791 = vrot.slane %v725, 5
  %v792 = vrot.slane %v791, 4
  %v793 = vrot.slane %v482, 5
  %v794 = vsel %vm770, %v792, %v793
  %v795 = vrot.slane %v726, 5
  %v796 = vrot.slane %v795, 4
  %v797 = vrot.slane %v483, 5
  %v798 = vsel %vm770, %v796, %v797
  %v799 = vrot.slane %v727, 5
  %v800 = vrot.slane %v799, 4
  %v801 = vrot.slane %v484, 5
  %v802 = vsel %vm770, %v800, %v801
  %v803 = vrot.slane %v728, 5
  %v804 = vrot.slane %v803, 4
  %v805 = vrot.slane %v485, 5
  %v806 = vsel %vm770, %v804, %v805
  %v807 = vrot.slane %v729, 5
  %v808 = vrot.slane %v807, 4
  %v809 = vrot.slane %v486, 5
  %v810 = vsel %vm770, %v808, %v809
  %v811 = vrot.slane %v730, 5
  %v812 = vrot.slane %v811, 4
  %v813 = vrot.slane %v487, 5
  %v814 = vsel %vm770, %v812, %v813
  %v815 = vrot.slane %v731, 5
  %v816 = vrot.slane %v815, 4
  %v817 = vrot.slane %v488, 5
  %v818 = vsel %vm770, %v816, %v817
  %v819 = vrot.slane %v732, 5
  %v820 = vrot.slane %v819, 4
  %v821 = vrot.slane %v489, 5
  %v822 = vsel %vm770, %v820, %v821
  %v823 = vrot.slane %v733, 5
  %v824 = vrot.slane %v823, 4
  %v825 = vrot.slane %v490, 5
  %v826 = vsel %vm770, %v824, %v825
  %v827 = vrot.slane %v734, 5
  %v828 = vrot.slane %v827, 4
  %v829 = vrot.slane %v491, 5
  %v830 = vsel %vm770, %v828, %v829
  %v831 = vrot.slane %v735, 5
  %v832 = vrot.slane %v831, 4
  %v833 = vrot.slane %v492, 5
  %v834 = vsel %vm770, %v832, %v833
  %v835 = vld [vmem:[%s358] sm:$0xf]
  %v836 = vld [vmem:[%s358 + $0x8] sm:$0xf]
  %v837 = vld [vmem:[%s358 + $0x10] sm:$0xf]
  %v838 = vld [vmem:[%s358 + $0x18] sm:$0xf]
  %v839 = vld [vmem:[%s358 + $0x20] sm:$0xf]
  %v840 = vld [vmem:[%s358 + $0x28] sm:$0xf]
  %v841 = vld [vmem:[%s358 + $0x30] sm:$0xf]
  %v842 = vld [vmem:[%s358 + $0x38] sm:$0xf]
  %v843 = vld [vmem:[%s358 + $0x50] sm:$0xf]
  %v844 = vld [vmem:[%s358 + $0x58] sm:$0xf]
  %v845 = vld [vmem:[%s358 + $0x60] sm:$0xf]
  %v846 = vld [vmem:[%s358 + $0x68] sm:$0xf]
  %v847 = vld [vmem:[%s358 + $0x70] sm:$0xf]
  %v848 = vld [vmem:[%s358 + $0x78] sm:$0xf]
  %v849 = vld [vmem:[%s358 + $0x80] sm:$0xf]
  %v850 = vld [vmem:[%s358 + $0x88] sm:$0xf]
  %v851 = vld [vmem:[%s358 + $0x4] sm:$0x1]
  %v852 = vld [vmem:[%s358 + $0xc] sm:$0x1]
  %v853 = vld [vmem:[%s358 + $0x14] sm:$0x1]
  %v854 = vld [vmem:[%s358 + $0x1c] sm:$0x1]
  %v855 = vld [vmem:[%s358 + $0x24] sm:$0x1]
  %v856 = vld [vmem:[%s358 + $0x2c] sm:$0x1]
  %v857 = vld [vmem:[%s358 + $0x34] sm:$0x1]
  %v858 = vld [vmem:[%s358 + $0x3c] sm:$0x1]
  %v859 = vld [vmem:[%s358 + $0x54] sm:$0x1]
  %v860 = vld [vmem:[%s358 + $0x5c] sm:$0x1]
  %v861 = vld [vmem:[%s358 + $0x64] sm:$0x1]
  %v862 = vld [vmem:[%s358 + $0x6c] sm:$0x1]
  %v863 = vld [vmem:[%s358 + $0x74] sm:$0x1]
  %v864 = vld [vmem:[%s358 + $0x7c] sm:$0x1]
  %v865 = vld [vmem:[%s358 + $0x84] sm:$0x1]
  %v866 = vld [vmem:[%s358 + $0x8c] sm:$0x1]
  %v868 = vshrl.u32 %v835, 16
  %v870 = vrot.slane %v868, 4
  %v871 = vshll.u32 %v835, 16
  %v873 = vrot.slane %v871, 5
  %v874 = vor.u32 %v870, %v873
  %v875 = vrot.slane %v874, 4
  %v877 = vshll.u32 %v851, 16
  %v879 = vrot.slane %v877, 5
  %v880 = vsel %vm495, %v875, %v879
  %v882 = vshrl.u32 %v836, 16
  %v884 = vrot.slane %v882, 4
  %v885 = vshll.u32 %v836, 16
  %v887 = vrot.slane %v885, 5
  %v888 = vor.u32 %v884, %v887
  %v889 = vrot.slane %v888, 4
  %v891 = vshll.u32 %v852, 16
  %v893 = vrot.slane %v891, 5
  %v894 = vsel %vm495, %v889, %v893
  %v896 = vshrl.u32 %v837, 16
  %v898 = vrot.slane %v896, 4
  %v899 = vshll.u32 %v837, 16
  %v901 = vrot.slane %v899, 5
  %v902 = vor.u32 %v898, %v901
  %v903 = vrot.slane %v902, 4
  %v905 = vshll.u32 %v853, 16
  %v907 = vrot.slane %v905, 5
  %v908 = vsel %vm495, %v903, %v907
  %v910 = vshrl.u32 %v838, 16
  %v912 = vrot.slane %v910, 4
  %v913 = vshll.u32 %v838, 16
  %v915 = vrot.slane %v913, 5
  %v916 = vor.u32 %v912, %v915
  %v917 = vrot.slane %v916, 4
  %v919 = vshll.u32 %v854, 16
  %v921 = vrot.slane %v919, 5
  %v922 = vsel %vm495, %v917, %v921
  %v924 = vshrl.u32 %v839, 16
  %v926 = vrot.slane %v924, 4
  %v927 = vshll.u32 %v839, 16
  %v929 = vrot.slane %v927, 5
  %v930 = vor.u32 %v926, %v929
  %v931 = vrot.slane %v930, 4
  %v933 = vshll.u32 %v855, 16
  %v935 = vrot.slane %v933, 5
  %v936 = vsel %vm495, %v931, %v935
  %v938 = vshrl.u32 %v840, 16
  %v940 = vrot.slane %v938, 4
  %v941 = vshll.u32 %v840, 16
  %v943 = vrot.slane %v941, 5
  %v944 = vor.u32 %v940, %v943
  %v945 = vrot.slane %v944, 4
  %v947 = vshll.u32 %v856, 16
  %v949 = vrot.slane %v947, 5
  %v950 = vsel %vm495, %v945, %v949
  %v952 = vshrl.u32 %v841, 16
  %v954 = vrot.slane %v952, 4
  %v955 = vshll.u32 %v841, 16
  %v957 = vrot.slane %v955, 5
  %v958 = vor.u32 %v954, %v957
  %v959 = vrot.slane %v958, 4
  %v961 = vshll.u32 %v857, 16
  %v963 = vrot.slane %v961, 5
  %v964 = vsel %vm495, %v959, %v963
  %v966 = vshrl.u32 %v842, 16
  %v968 = vrot.slane %v966, 4
  %v969 = vshll.u32 %v842, 16
  %v971 = vrot.slane %v969, 5
  %v972 = vor.u32 %v968, %v971
  %v973 = vrot.slane %v972, 4
  %v975 = vshll.u32 %v858, 16
  %v977 = vrot.slane %v975, 5
  %v978 = vsel %vm495, %v973, %v977
  %v980 = vshrl.u32 %v843, 16
  %v982 = vrot.slane %v980, 4
  %v983 = vshll.u32 %v843, 16
  %v985 = vrot.slane %v983, 5
  %v986 = vor.u32 %v982, %v985
  %v987 = vrot.slane %v986, 4
  %v989 = vshll.u32 %v859, 16
  %v991 = vrot.slane %v989, 5
  %v992 = vsel %vm495, %v987, %v991
  %v994 = vshrl.u32 %v844, 16
  %v996 = vrot.slane %v994, 4
  %v997 = vshll.u32 %v844, 16
  %v999 = vrot.slane %v997, 5
  %v1000 = vor.u32 %v996, %v999
  %v1001 = vrot.slane %v1000, 4
  %v1003 = vshll.u32 %v860, 16
  %v1005 = vrot.slane %v1003, 5
  %v1006 = vsel %vm495, %v1001, %v1005
  %v1008 = vshrl.u32 %v845, 16
  %v1010 = vrot.slane %v1008, 4
  %v1011 = vshll.u32 %v845, 16
  %v1013 = vrot.slane %v1011, 5
  %v1014 = vor.u32 %v1010, %v1013
  %v1015 = vrot.slane %v1014, 4
  %v1017 = vshll.u32 %v861, 16
  %v1019 = vrot.slane %v1017, 5
  %v1020 = vsel %vm495, %v1015, %v1019
  %v1022 = vshrl.u32 %v846, 16
  %v1024 = vrot.slane %v1022, 4
  %v1025 = vshll.u32 %v846, 16
  %v1027 = vrot.slane %v1025, 5
  %v1028 = vor.u32 %v1024, %v1027
  %v1029 = vrot.slane %v1028, 4
  %v1031 = vshll.u32 %v862, 16
  %v1033 = vrot.slane %v1031, 5
  %v1034 = vsel %vm495, %v1029, %v1033
  %v1036 = vshrl.u32 %v847, 16
  %v1038 = vrot.slane %v1036, 4
  %v1039 = vshll.u32 %v847, 16
  %v1041 = vrot.slane %v1039, 5
  %v1042 = vor.u32 %v1038, %v1041
  %v1043 = vrot.slane %v1042, 4
  %v1045 = vshll.u32 %v863, 16
  %v1047 = vrot.slane %v1045, 5
  %v1048 = vsel %vm495, %v1043, %v1047
  %v1050 = vshrl.u32 %v848, 16
  %v1052 = vrot.slane %v1050, 4
  %v1053 = vshll.u32 %v848, 16
  %v1055 = vrot.slane %v1053, 5
  %v1056 = vor.u32 %v1052, %v1055
  %v1057 = vrot.slane %v1056, 4
  %v1059 = vshll.u32 %v864, 16
  %v1061 = vrot.slane %v1059, 5
  %v1062 = vsel %vm495, %v1057, %v1061
  %v1064 = vshrl.u32 %v849, 16
  %v1066 = vrot.slane %v1064, 4
  %v1067 = vshll.u32 %v849, 16
  %v1069 = vrot.slane %v1067, 5
  %v1070 = vor.u32 %v1066, %v1069
  %v1071 = vrot.slane %v1070, 4
  %v1073 = vshll.u32 %v865, 16
  %v1075 = vrot.slane %v1073, 5
  %v1076 = vsel %vm495, %v1071, %v1075
  %v1078 = vshrl.u32 %v850, 16
  %v1080 = vrot.slane %v1078, 4
  %v1081 = vshll.u32 %v850, 16
  %v1083 = vrot.slane %v1081, 5
  %v1084 = vor.u32 %v1080, %v1083
  %v1085 = vrot.slane %v1084, 4
  %v1087 = vshll.u32 %v866, 16
  %v1089 = vrot.slane %v1087, 5
  %v1090 = vsel %vm495, %v1085, %v1089
  %v1091 = vld [vmem:[%s358] sm:$0xe]
  %v1092 = vld [vmem:[%s358 + $0x8] sm:$0xe]
  %v1093 = vld [vmem:[%s358 + $0x10] sm:$0xe]
  %v1094 = vld [vmem:[%s358 + $0x18] sm:$0xe]
  %v1095 = vld [vmem:[%s358 + $0x20] sm:$0xe]
  %v1096 = vld [vmem:[%s358 + $0x28] sm:$0xe]
  %v1097 = vld [vmem:[%s358 + $0x30] sm:$0xe]
  %v1098 = vld [vmem:[%s358 + $0x38] sm:$0xe]
  %v1099 = vld [vmem:[%s358 + $0x50] sm:$0xe]
  %v1100 = vld [vmem:[%s358 + $0x58] sm:$0xe]
  %v1101 = vld [vmem:[%s358 + $0x60] sm:$0xe]
  %v1102 = vld [vmem:[%s358 + $0x68] sm:$0xe]
  %v1103 = vld [vmem:[%s358 + $0x70] sm:$0xe]
  %v1104 = vld [vmem:[%s358 + $0x78] sm:$0xe]
  %v1105 = vld [vmem:[%s358 + $0x80] sm:$0xe]
  %v1106 = vld [vmem:[%s358 + $0x88] sm:$0xe]
  %v1139 = vrot.slane %v1091, 5
  %v1140 = vrot.slane %v1139, 4
  %v1141 = vrot.slane %v851, 5
  %v1142 = vsel %vm770, %v1140, %v1141
  %v1143 = vrot.slane %v1092, 5
  %v1144 = vrot.slane %v1143, 4
  %v1145 = vrot.slane %v852, 5
  %v1146 = vsel %vm770, %v1144, %v1145
  %v1147 = vrot.slane %v1093, 5
  %v1148 = vrot.slane %v1147, 4
  %v1149 = vrot.slane %v853, 5
  %v1150 = vsel %vm770, %v1148, %v1149
  %v1151 = vrot.slane %v1094, 5
  %v1152 = vrot.slane %v1151, 4
  %v1153 = vrot.slane %v854, 5
  %v1154 = vsel %vm770, %v1152, %v1153
  %v1155 = vrot.slane %v1095, 5
  %v1156 = vrot.slane %v1155, 4
  %v1157 = vrot.slane %v855, 5
  %v1158 = vsel %vm770, %v1156, %v1157
  %v1159 = vrot.slane %v1096, 5
  %v1160 = vrot.slane %v1159, 4
  %v1161 = vrot.slane %v856, 5
  %v1162 = vsel %vm770, %v1160, %v1161
  %v1163 = vrot.slane %v1097, 5
  %v1164 = vrot.slane %v1163, 4
  %v1165 = vrot.slane %v857, 5
  %v1166 = vsel %vm770, %v1164, %v1165
  %v1167 = vrot.slane %v1098, 5
  %v1168 = vrot.slane %v1167, 4
  %v1169 = vrot.slane %v858, 5
  %v1170 = vsel %vm770, %v1168, %v1169
  %v1171 = vrot.slane %v1099, 5
  %v1172 = vrot.slane %v1171, 4
  %v1173 = vrot.slane %v859, 5
  %v1174 = vsel %vm770, %v1172, %v1173
  %v1175 = vrot.slane %v1100, 5
  %v1176 = vrot.slane %v1175, 4
  %v1177 = vrot.slane %v860, 5
  %v1178 = vsel %vm770, %v1176, %v1177
  %v1179 = vrot.slane %v1101, 5
  %v1180 = vrot.slane %v1179, 4
  %v1181 = vrot.slane %v861, 5
  %v1182 = vsel %vm770, %v1180, %v1181
  %v1183 = vrot.slane %v1102, 5
  %v1184 = vrot.slane %v1183, 4
  %v1185 = vrot.slane %v862, 5
  %v1186 = vsel %vm770, %v1184, %v1185
  %v1187 = vrot.slane %v1103, 5
  %v1188 = vrot.slane %v1187, 4
  %v1189 = vrot.slane %v863, 5
  %v1190 = vsel %vm770, %v1188, %v1189
  %v1191 = vrot.slane %v1104, 5
  %v1192 = vrot.slane %v1191, 4
  %v1193 = vrot.slane %v864, 5
  %v1194 = vsel %vm770, %v1192, %v1193
  %v1195 = vrot.slane %v1105, 5
  %v1196 = vrot.slane %v1195, 4
  %v1197 = vrot.slane %v865, 5
  %v1198 = vsel %vm770, %v1196, %v1197
  %v1199 = vrot.slane %v1106, 5
  %v1200 = vrot.slane %v1199, 4
  %v1201 = vrot.slane %v866, 5
  %v1202 = vsel %vm770, %v1200, %v1201
  %s1203 = scalar_lea.vmem [#allocation2], 16
  %v1204 = vld [vmem:[%s1203] sm:$0xf]
  %v1205 = vld [vmem:[%s1203 + $0x8] sm:$0xf]
  %v1206 = vld [vmem:[%s1203 + $0x10] sm:$0xf]
  %v1207 = vld [vmem:[%s1203 + $0x18] sm:$0xf]
  %v1208 = vld [vmem:[%s1203 + $0x20] sm:$0xf]
  %v1209 = vld [vmem:[%s1203 + $0x28] sm:$0xf]
  %v1210 = vld [vmem:[%s1203 + $0x30] sm:$0xf]
  %v1211 = vld [vmem:[%s1203 + $0x38] sm:$0xf]
  %v1212 = vld [vmem:[%s1203 + $0x50] sm:$0xf]
  %v1213 = vld [vmem:[%s1203 + $0x58] sm:$0xf]
  %v1214 = vld [vmem:[%s1203 + $0x60] sm:$0xf]
  %v1215 = vld [vmem:[%s1203 + $0x68] sm:$0xf]
  %v1216 = vld [vmem:[%s1203 + $0x70] sm:$0xf]
  %v1217 = vld [vmem:[%s1203 + $0x78] sm:$0xf]
  %v1218 = vld [vmem:[%s1203 + $0x80] sm:$0xf]
  %v1219 = vld [vmem:[%s1203 + $0x88] sm:$0xf]
  %v1220 = vld [vmem:[%s1203 + $0x4] sm:$0x1]
  %v1221 = vld [vmem:[%s1203 + $0xc] sm:$0x1]
  %v1222 = vld [vmem:[%s1203 + $0x14] sm:$0x1]
  %v1223 = vld [vmem:[%s1203 + $0x1c] sm:$0x1]
  %v1224 = vld [vmem:[%s1203 + $0x24] sm:$0x1]
  %v1225 = vld [vmem:[%s1203 + $0x2c] sm:$0x1]
  %v1226 = vld [vmem:[%s1203 + $0x34] sm:$0x1]
  %v1227 = vld [vmem:[%s1203 + $0x3c] sm:$0x1]
  %v1228 = vld [vmem:[%s1203 + $0x54] sm:$0x1]
  %v1229 = vld [vmem:[%s1203 + $0x5c] sm:$0x1]
  %v1230 = vld [vmem:[%s1203 + $0x64] sm:$0x1]
  %v1231 = vld [vmem:[%s1203 + $0x6c] sm:$0x1]
  %v1232 = vld [vmem:[%s1203 + $0x74] sm:$0x1]
  %v1233 = vld [vmem:[%s1203 + $0x7c] sm:$0x1]
  %v1234 = vld [vmem:[%s1203 + $0x84] sm:$0x1]
  %v1235 = vld [vmem:[%s1203 + $0x8c] sm:$0x1]
  %v1237 = vshrl.u32 %v1204, 16
  %v1239 = vrot.slane %v1237, 4
  %v1240 = vshll.u32 %v1204, 16
  %v1242 = vrot.slane %v1240, 5
  %v1243 = vor.u32 %v1239, %v1242
  %v1244 = vrot.slane %v1243, 4
  %v1246 = vshll.u32 %v1220, 16
  %v1248 = vrot.slane %v1246, 5
  %v1249 = vsel %vm495, %v1244, %v1248
  %v1251 = vshrl.u32 %v1205, 16
  %v1253 = vrot.slane %v1251, 4
  %v1254 = vshll.u32 %v1205, 16
  %v1256 = vrot.slane %v1254, 5
  %v1257 = vor.u32 %v1253, %v1256
  %v1258 = vrot.slane %v1257, 4
  %v1260 = vshll.u32 %v1221, 16
  %v1262 = vrot.slane %v1260, 5
  %v1263 = vsel %vm495, %v1258, %v1262
  %v1265 = vshrl.u32 %v1206, 16
  %v1267 = vrot.slane %v1265, 4
  %v1268 = vshll.u32 %v1206, 16
  %v1270 = vrot.slane %v1268, 5
  %v1271 = vor.u32 %v1267, %v1270
  %v1272 = vrot.slane %v1271, 4
  %v1274 = vshll.u32 %v1222, 16
  %v1276 = vrot.slane %v1274, 5
  %v1277 = vsel %vm495, %v1272, %v1276
  %v1279 = vshrl.u32 %v1207, 16
  %v1281 = vrot.slane %v1279, 4
  %v1282 = vshll.u32 %v1207, 16
  %v1284 = vrot.slane %v1282, 5
  %v1285 = vor.u32 %v1281, %v1284
  %v1286 = vrot.slane %v1285, 4
  %v1288 = vshll.u32 %v1223, 16
  %v1290 = vrot.slane %v1288, 5
  %v1291 = vsel %vm495, %v1286, %v1290
  %v1293 = vshrl.u32 %v1208, 16
  %v1295 = vrot.slane %v1293, 4
  %v1296 = vshll.u32 %v1208, 16
  %v1298 = vrot.slane %v1296, 5
  %v1299 = vor.u32 %v1295, %v1298
  %v1300 = vrot.slane %v1299, 4
  %v1302 = vshll.u32 %v1224, 16
  %v1304 = vrot.slane %v1302, 5
  %v1305 = vsel %vm495, %v1300, %v1304
  %v1307 = vshrl.u32 %v1209, 16
  %v1309 = vrot.slane %v1307, 4
  %v1310 = vshll.u32 %v1209, 16
  %v1312 = vrot.slane %v1310, 5
  %v1313 = vor.u32 %v1309, %v1312
  %v1314 = vrot.slane %v1313, 4
  %v1316 = vshll.u32 %v1225, 16
  %v1318 = vrot.slane %v1316, 5
  %v1319 = vsel %vm495, %v1314, %v1318
  %v1321 = vshrl.u32 %v1210, 16
  %v1323 = vrot.slane %v1321, 4
  %v1324 = vshll.u32 %v1210, 16
  %v1326 = vrot.slane %v1324, 5
  %v1327 = vor.u32 %v1323, %v1326
  %v1328 = vrot.slane %v1327, 4
  %v1330 = vshll.u32 %v1226, 16
  %v1332 = vrot.slane %v1330, 5
  %v1333 = vsel %vm495, %v1328, %v1332
  %v1335 = vshrl.u32 %v1211, 16
  %v1337 = vrot.slane %v1335, 4
  %v1338 = vshll.u32 %v1211, 16
  %v1340 = vrot.slane %v1338, 5
  %v1341 = vor.u32 %v1337, %v1340
  %v1342 = vrot.slane %v1341, 4
  %v1344 = vshll.u32 %v1227, 16
  %v1346 = vrot.slane %v1344, 5
  %v1347 = vsel %vm495, %v1342, %v1346
  %v1349 = vshrl.u32 %v1212, 16
  %v1351 = vrot.slane %v1349, 4
  %v1352 = vshll.u32 %v1212, 16
  %v1354 = vrot.slane %v1352, 5
  %v1355 = vor.u32 %v1351, %v1354
  %v1356 = vrot.slane %v1355, 4
  %v1358 = vshll.u32 %v1228, 16
  %v1360 = vrot.slane %v1358, 5
  %v1361 = vsel %vm495, %v1356, %v1360
  %v1363 = vshrl.u32 %v1213, 16
  %v1365 = vrot.slane %v1363, 4
  %v1366 = vshll.u32 %v1213, 16
  %v1368 = vrot.slane %v1366, 5
  %v1369 = vor.u32 %v1365, %v1368
  %v1370 = vrot.slane %v1369, 4
  %v1372 = vshll.u32 %v1229, 16
  %v1374 = vrot.slane %v1372, 5
  %v1375 = vsel %vm495, %v1370, %v1374
  %v1377 = vshrl.u32 %v1214, 16
  %v1379 = vrot.slane %v1377, 4
  %v1380 = vshll.u32 %v1214, 16
  %v1382 = vrot.slane %v1380, 5
  %v1383 = vor.u32 %v1379, %v1382
  %v1384 = vrot.slane %v1383, 4
  %v1386 = vshll.u32 %v1230, 16
  %v1388 = vrot.slane %v1386, 5
  %v1389 = vsel %vm495, %v1384, %v1388
  %v1391 = vshrl.u32 %v1215, 16
  %v1393 = vrot.slane %v1391, 4
  %v1394 = vshll.u32 %v1215, 16
  %v1396 = vrot.slane %v1394, 5
  %v1397 = vor.u32 %v1393, %v1396
  %v1398 = vrot.slane %v1397, 4
  %v1400 = vshll.u32 %v1231, 16
  %v1402 = vrot.slane %v1400, 5
  %v1403 = vsel %vm495, %v1398, %v1402
  %v1405 = vshrl.u32 %v1216, 16
  %v1407 = vrot.slane %v1405, 4
  %v1408 = vshll.u32 %v1216, 16
  %v1410 = vrot.slane %v1408, 5
  %v1411 = vor.u32 %v1407, %v1410
  %v1412 = vrot.slane %v1411, 4
  %v1414 = vshll.u32 %v1232, 16
  %v1416 = vrot.slane %v1414, 5
  %v1417 = vsel %vm495, %v1412, %v1416
  %v1419 = vshrl.u32 %v1217, 16
  %v1421 = vrot.slane %v1419, 4
  %v1422 = vshll.u32 %v1217, 16
  %v1424 = vrot.slane %v1422, 5
  %v1425 = vor.u32 %v1421, %v1424
  %v1426 = vrot.slane %v1425, 4
  %v1428 = vshll.u32 %v1233, 16
  %v1430 = vrot.slane %v1428, 5
  %v1431 = vsel %vm495, %v1426, %v1430
  %v1433 = vshrl.u32 %v1218, 16
  %v1435 = vrot.slane %v1433, 4
  %v1436 = vshll.u32 %v1218, 16
  %v1438 = vrot.slane %v1436, 5
  %v1439 = vor.u32 %v1435, %v1438
  %v1440 = vrot.slane %v1439, 4
  %v1442 = vshll.u32 %v1234, 16
  %v1444 = vrot.slane %v1442, 5
  %v1445 = vsel %vm495, %v1440, %v1444
  %v1447 = vshrl.u32 %v1219, 16
  %v1449 = vrot.slane %v1447, 4
  %v1450 = vshll.u32 %v1219, 16
  %v1452 = vrot.slane %v1450, 5
  %v1453 = vor.u32 %v1449, %v1452
  %v1454 = vrot.slane %v1453, 4
  %v1456 = vshll.u32 %v1235, 16
  %v1458 = vrot.slane %v1456, 5
  %v1459 = vsel %vm495, %v1454, %v1458
  %v1460 = vld [vmem:[%s1203] sm:$0xe]
  %v1461 = vld [vmem:[%s1203 + $0x8] sm:$0xe]
  %v1462 = vld [vmem:[%s1203 + $0x10] sm:$0xe]
  %v1463 = vld [vmem:[%s1203 + $0x18] sm:$0xe]
  %v1464 = vld [vmem:[%s1203 + $0x20] sm:$0xe]
  %v1465 = vld [vmem:[%s1203 + $0x28] sm:$0xe]
  %v1466 = vld [vmem:[%s1203 + $0x30] sm:$0xe]
  %v1467 = vld [vmem:[%s1203 + $0x38] sm:$0xe]
  %v1468 = vld [vmem:[%s1203 + $0x50] sm:$0xe]
  %v1469 = vld [vmem:[%s1203 + $0x58] sm:$0xe]
  %v1470 = vld [vmem:[%s1203 + $0x60] sm:$0xe]
  %v1471 = vld [vmem:[%s1203 + $0x68] sm:$0xe]
  %v1472 = vld [vmem:[%s1203 + $0x70] sm:$0xe]
  %v1473 = vld [vmem:[%s1203 + $0x78] sm:$0xe]
  %v1474 = vld [vmem:[%s1203 + $0x80] sm:$0xe]
  %v1475 = vld [vmem:[%s1203 + $0x88] sm:$0xe]
  %v1508 = vrot.slane %v1460, 5
  %v1509 = vrot.slane %v1508, 4
  %v1510 = vrot.slane %v1220, 5
  %v1511 = vsel %vm770, %v1509, %v1510
  %v1512 = vrot.slane %v1461, 5
  %v1513 = vrot.slane %v1512, 4
  %v1514 = vrot.slane %v1221, 5
  %v1515 = vsel %vm770, %v1513, %v1514
  %v1516 = vrot.slane %v1462, 5
  %v1517 = vrot.slane %v1516, 4
  %v1518 = vrot.slane %v1222, 5
  %v1519 = vsel %vm770, %v1517, %v1518
  %v1520 = vrot.slane %v1463, 5
  %v1521 = vrot.slane %v1520, 4
  %v1522 = vrot.slane %v1223, 5
  %v1523 = vsel %vm770, %v1521, %v1522
  %v1524 = vrot.slane %v1464, 5
  %v1525 = vrot.slane %v1524, 4
  %v1526 = vrot.slane %v1224, 5
  %v1527 = vsel %vm770, %v1525, %v1526
  %v1528 = vrot.slane %v1465, 5
  %v1529 = vrot.slane %v1528, 4
  %v1530 = vrot.slane %v1225, 5
  %v1531 = vsel %vm770, %v1529, %v1530
  %v1532 = vrot.slane %v1466, 5
  %v1533 = vrot.slane %v1532, 4
  %v1534 = vrot.slane %v1226, 5
  %v1535 = vsel %vm770, %v1533, %v1534
  %v1536 = vrot.slane %v1467, 5
  %v1537 = vrot.slane %v1536, 4
  %v1538 = vrot.slane %v1227, 5
  %v1539 = vsel %vm770, %v1537, %v1538
  %v1540 = vrot.slane %v1468, 5
  %v1541 = vrot.slane %v1540, 4
  %v1542 = vrot.slane %v1228, 5
  %v1543 = vsel %vm770, %v1541, %v1542
  %v1544 = vrot.slane %v1469, 5
  %v1545 = vrot.slane %v1544, 4
  %v1546 = vrot.slane %v1229, 5
  %v1547 = vsel %vm770, %v1545, %v1546
  %v1548 = vrot.slane %v1470, 5
  %v1549 = vrot.slane %v1548, 4
  %v1550 = vrot.slane %v1230, 5
  %v1551 = vsel %vm770, %v1549, %v1550
  %v1552 = vrot.slane %v1471, 5
  %v1553 = vrot.slane %v1552, 4
  %v1554 = vrot.slane %v1231, 5
  %v1555 = vsel %vm770, %v1553, %v1554
  %v1556 = vrot.slane %v1472, 5
  %v1557 = vrot.slane %v1556, 4
  %v1558 = vrot.slane %v1232, 5
  %v1559 = vsel %vm770, %v1557, %v1558
  %v1560 = vrot.slane %v1473, 5
  %v1561 = vrot.slane %v1560, 4
  %v1562 = vrot.slane %v1233, 5
  %v1563 = vsel %vm770, %v1561, %v1562
  %v1564 = vrot.slane %v1474, 5
  %v1565 = vrot.slane %v1564, 4
  %v1566 = vrot.slane %v1234, 5
  %v1567 = vsel %vm770, %v1565, %v1566
  %v1568 = vrot.slane %v1475, 5
  %v1569 = vrot.slane %v1568, 4
  %v1570 = vrot.slane %v1235, 5
  %v1571 = vsel %vm770, %v1569, %v1570
  %v1588 = vunpack.c.l.b16 %v461
  %v1589 = vunpack.c.l.b16 %v462
  %v1590 = vunpack.c.l.b16 %v463
  %v1591 = vunpack.c.l.b16 %v464
  %v1592 = vunpack.c.l.b16 %v465
  %v1593 = vunpack.c.l.b16 %v466
  %v1594 = vunpack.c.l.b16 %v467
  %v1595 = vunpack.c.l.b16 %v468
  %v1596 = vunpack.c.l.b16 %v469
  %v1597 = vunpack.c.l.b16 %v470
  %v1598 = vunpack.c.l.b16 %v471
  %v1599 = vunpack.c.l.b16 %v472
  %v1600 = vunpack.c.l.b16 %v473
  %v1601 = vunpack.c.l.b16 %v474
  %v1602 = vunpack.c.l.b16 %v475
  %v1603 = vunpack.c.l.b16 %v476
  %v1604 = vpack.c.b16 %v1589, %v1588
  %v1605 = vpack.c.b16 %v1591, %v1590
  %v1606 = vpack.c.b16 %v1593, %v1592
  %v1607 = vpack.c.b16 %v1595, %v1594
  %v1608 = vpack.c.b16 %v1597, %v1596
  %v1609 = vpack.c.b16 %v1599, %v1598
  %v1610 = vpack.c.b16 %v1601, %v1600
  %v1611 = vpack.c.b16 %v1603, %v1602
  %v1612 = vunpack.c.l.b16 %v509
  %v1613 = vunpack.c.l.b16 %v523
  %v1614 = vunpack.c.l.b16 %v537
  %v1615 = vunpack.c.l.b16 %v551
  %v1616 = vunpack.c.l.b16 %v565
  %v1617 = vunpack.c.l.b16 %v579
  %v1618 = vunpack.c.l.b16 %v593
  %v1619 = vunpack.c.l.b16 %v607
  %v1620 = vunpack.c.l.b16 %v621
  %v1621 = vunpack.c.l.b16 %v635
  %v1622 = vunpack.c.l.b16 %v649
  %v1623 = vunpack.c.l.b16 %v663
  %v1624 = vunpack.c.l.b16 %v677
  %v1625 = vunpack.c.l.b16 %v691
  %v1626 = vunpack.c.l.b16 %v705
  %v1627 = vunpack.c.l.b16 %v719
  %v1628 = vpack.c.b16 %v1613, %v1612
  %v1629 = vpack.c.b16 %v1615, %v1614
  %v1630 = vpack.c.b16 %v1617, %v1616
  %v1631 = vpack.c.b16 %v1619, %v1618
  %v1632 = vpack.c.b16 %v1621, %v1620
  %v1633 = vpack.c.b16 %v1623, %v1622
  %v1634 = vpack.c.b16 %v1625, %v1624
  %v1635 = vpack.c.b16 %v1627, %v1626
  %1636 = vrot.lane.b32.xlu0 %v1628, 4
  %v1637 = vpop.permute.xlu0 %1636
  %1638 = vrot.lane.b32.xlu0 %v1629, 4
  %v1639 = vpop.permute.xlu0 %1638
  %1640 = vrot.lane.b32.xlu0 %v1630, 4
  %v1641 = vpop.permute.xlu0 %1640
  %1642 = vrot.lane.b32.xlu0 %v1631, 4
  %v1643 = vpop.permute.xlu0 %1642
  %1644 = vrot.lane.b32.xlu0 %v1632, 4
  %v1645 = vpop.permute.xlu0 %1644
  %1646 = vrot.lane.b32.xlu0 %v1633, 4
  %v1647 = vpop.permute.xlu0 %1646
  %1648 = vrot.lane.b32.xlu0 %v1634, 4
  %v1649 = vpop.permute.xlu0 %1648
  %1650 = vrot.lane.b32.xlu0 %v1635, 4
  %v1651 = vpop.permute.xlu0 %1650
  %v1652 = vunpack.c.l.b16 %v774
  %v1653 = vunpack.c.l.b16 %v778
  %v1654 = vunpack.c.l.b16 %v782
  %v1655 = vunpack.c.l.b16 %v786
  %v1656 = vunpack.c.l.b16 %v790
  %v1657 = vunpack.c.l.b16 %v794
  %v1658 = vunpack.c.l.b16 %v798
  %v1659 = vunpack.c.l.b16 %v802
  %v1660 = vunpack.c.l.b16 %v806
  %v1661 = vunpack.c.l.b16 %v810
  %v1662 = vunpack.c.l.b16 %v814
  %v1663 = vunpack.c.l.b16 %v818
  %v1664 = vunpack.c.l.b16 %v822
  %v1665 = vunpack.c.l.b16 %v826
  %v1666 = vunpack.c.l.b16 %v830
  %v1667 = vunpack.c.l.b16 %v834
  %v1668 = vpack.c.b16 %v1653, %v1652
  %v1669 = vpack.c.b16 %v1655, %v1654
  %v1670 = vpack.c.b16 %v1657, %v1656
  %v1671 = vpack.c.b16 %v1659, %v1658
  %v1672 = vpack.c.b16 %v1661, %v1660
  %v1673 = vpack.c.b16 %v1663, %v1662
  %v1674 = vpack.c.b16 %v1665, %v1664
  %v1675 = vpack.c.b16 %v1667, %v1666
  %1676 = vrot.lane.b32.xlu0 %v1668, 8
  %v1677 = vpop.permute.xlu0 %1676
  %1678 = vrot.lane.b32.xlu0 %v1669, 8
  %v1679 = vpop.permute.xlu0 %1678
  %1680 = vrot.lane.b32.xlu0 %v1670, 8
  %v1681 = vpop.permute.xlu0 %1680
  %1682 = vrot.lane.b32.xlu0 %v1671, 8
  %v1683 = vpop.permute.xlu0 %1682
  %1684 = vrot.lane.b32.xlu0 %v1672, 8
  %v1685 = vpop.permute.xlu0 %1684
  %1686 = vrot.lane.b32.xlu0 %v1673, 8
  %v1687 = vpop.permute.xlu0 %1686
  %1688 = vrot.lane.b32.xlu0 %v1674, 8
  %v1689 = vpop.permute.xlu0 %1688
  %1690 = vrot.lane.b32.xlu0 %v1675, 8
  %v1691 = vpop.permute.xlu0 %1690
  %v1708 = vunpack.c.l.b16 %v835
  %v1709 = vunpack.c.l.b16 %v836
  %v1710 = vunpack.c.l.b16 %v837
  %v1711 = vunpack.c.l.b16 %v838
  %v1712 = vunpack.c.l.b16 %v839
  %v1713 = vunpack.c.l.b16 %v840
  %v1714 = vunpack.c.l.b16 %v841
  %v1715 = vunpack.c.l.b16 %v842
  %v1716 = vunpack.c.l.b16 %v843
  %v1717 = vunpack.c.l.b16 %v844
  %v1718 = vunpack.c.l.b16 %v845
  %v1719 = vunpack.c.l.b16 %v846
  %v1720 = vunpack.c.l.b16 %v847
  %v1721 = vunpack.c.l.b16 %v848
  %v1722 = vunpack.c.l.b16 %v849
  %v1723 = vunpack.c.l.b16 %v850
  %v1724 = vpack.c.b16 %v1709, %v1708
  %v1725 = vpack.c.b16 %v1711, %v1710
  %v1726 = vpack.c.b16 %v1713, %v1712
  %v1727 = vpack.c.b16 %v1715, %v1714
  %v1728 = vpack.c.b16 %v1717, %v1716
  %v1729 = vpack.c.b16 %v1719, %v1718
  %v1730 = vpack.c.b16 %v1721, %v1720
  %v1731 = vpack.c.b16 %v1723, %v1722
  %1732 = vrot.lane.b32.xlu0 %v1724, 12
  %v1733 = vpop.permute.xlu0 %1732
  %1734 = vrot.lane.b32.xlu0 %v1725, 12
  %v1735 = vpop.permute.xlu0 %1734
  %1736 = vrot.lane.b32.xlu0 %v1726, 12
  %v1737 = vpop.permute.xlu0 %1736
  %1738 = vrot.lane.b32.xlu0 %v1727, 12
  %v1739 = vpop.permute.xlu0 %1738
  %1740 = vrot.lane.b32.xlu0 %v1728, 12
  %v1741 = vpop.permute.xlu0 %1740
  %1742 = vrot.lane.b32.xlu0 %v1729, 12
  %v1743 = vpop.permute.xlu0 %1742
  %1744 = vrot.lane.b32.xlu0 %v1730, 12
  %v1745 = vpop.permute.xlu0 %1744
  %1746 = vrot.lane.b32.xlu0 %v1731, 12
  %v1747 = vpop.permute.xlu0 %1746
  %v1748 = vunpack.c.l.b16 %v880
  %v1749 = vunpack.c.l.b16 %v894
  %v1750 = vunpack.c.l.b16 %v908
  %v1751 = vunpack.c.l.b16 %v922
  %v1752 = vunpack.c.l.b16 %v936
  %v1753 = vunpack.c.l.b16 %v950
  %v1754 = vunpack.c.l.b16 %v964
  %v1755 = vunpack.c.l.b16 %v978
  %v1756 = vunpack.c.l.b16 %v992
  %v1757 = vunpack.c.l.b16 %v1006
  %v1758 = vunpack.c.l.b16 %v1020
  %v1759 = vunpack.c.l.b16 %v1034
  %v1760 = vunpack.c.l.b16 %v1048
  %v1761 = vunpack.c.l.b16 %v1062
  %v1762 = vunpack.c.l.b16 %v1076
  %v1763 = vunpack.c.l.b16 %v1090
  %v1764 = vpack.c.b16 %v1749, %v1748
  %v1765 = vpack.c.b16 %v1751, %v1750
  %v1766 = vpack.c.b16 %v1753, %v1752
  %v1767 = vpack.c.b16 %v1755, %v1754
  %v1768 = vpack.c.b16 %v1757, %v1756
  %v1769 = vpack.c.b16 %v1759, %v1758
  %v1770 = vpack.c.b16 %v1761, %v1760
  %v1771 = vpack.c.b16 %v1763, %v1762
  %1772 = vrot.lane.b32.xlu0 %v1764, 16
  %v1773 = vpop.permute.xlu0 %1772
  %1774 = vrot.lane.b32.xlu0 %v1765, 16
  %v1775 = vpop.permute.xlu0 %1774
  %1776 = vrot.lane.b32.xlu0 %v1766, 16
  %v1777 = vpop.permute.xlu0 %1776
  %1778 = vrot.lane.b32.xlu0 %v1767, 16
  %v1779 = vpop.permute.xlu0 %1778
  %1780 = vrot.lane.b32.xlu0 %v1768, 16
  %v1781 = vpop.permute.xlu0 %1780
  %1782 = vrot.lane.b32.xlu0 %v1769, 16
  %v1783 = vpop.permute.xlu0 %1782
  %1784 = vrot.lane.b32.xlu0 %v1770, 16
  %v1785 = vpop.permute.xlu0 %1784
  %1786 = vrot.lane.b32.xlu0 %v1771, 16
  %v1787 = vpop.permute.xlu0 %1786
  %v1788 = vunpack.c.l.b16 %v1142
  %v1789 = vunpack.c.l.b16 %v1146
  %v1790 = vunpack.c.l.b16 %v1150
  %v1791 = vunpack.c.l.b16 %v1154
  %v1792 = vunpack.c.l.b16 %v1158
  %v1793 = vunpack.c.l.b16 %v1162
  %v1794 = vunpack.c.l.b16 %v1166
  %v1795 = vunpack.c.l.b16 %v1170
  %v1796 = vunpack.c.l.b16 %v1174
  %v1797 = vunpack.c.l.b16 %v1178
  %v1798 = vunpack.c.l.b16 %v1182
  %v1799 = vunpack.c.l.b16 %v1186
  %v1800 = vunpack.c.l.b16 %v1190
  %v1801 = vunpack.c.l.b16 %v1194
  %v1802 = vunpack.c.l.b16 %v1198
  %v1803 = vunpack.c.l.b16 %v1202
  %v1804 = vpack.c.b16 %v1789, %v1788
  %v1805 = vpack.c.b16 %v1791, %v1790
  %v1806 = vpack.c.b16 %v1793, %v1792
  %v1807 = vpack.c.b16 %v1795, %v1794
  %v1808 = vpack.c.b16 %v1797, %v1796
  %v1809 = vpack.c.b16 %v1799, %v1798
  %v1810 = vpack.c.b16 %v1801, %v1800
  %v1811 = vpack.c.b16 %v1803, %v1802
  %1812 = vrot.lane.b32.xlu0 %v1804, 20
  %v1813 = vpop.permute.xlu0 %1812
  %1814 = vrot.lane.b32.xlu0 %v1805, 20
  %v1815 = vpop.permute.xlu0 %1814
  %1816 = vrot.lane.b32.xlu0 %v1806, 20
  %v1817 = vpop.permute.xlu0 %1816
  %1818 = vrot.lane.b32.xlu0 %v1807, 20
  %v1819 = vpop.permute.xlu0 %1818
  %1820 = vrot.lane.b32.xlu0 %v1808, 20
  %v1821 = vpop.permute.xlu0 %1820
  %1822 = vrot.lane.b32.xlu0 %v1809, 20
  %v1823 = vpop.permute.xlu0 %1822
  %1824 = vrot.lane.b32.xlu0 %v1810, 20
  %v1825 = vpop.permute.xlu0 %1824
  %1826 = vrot.lane.b32.xlu0 %v1811, 20
  %v1827 = vpop.permute.xlu0 %1826
  %v1844 = vunpack.c.l.b16 %v1204
  %v1845 = vunpack.c.l.b16 %v1205
  %v1846 = vunpack.c.l.b16 %v1206
  %v1847 = vunpack.c.l.b16 %v1207
  %v1848 = vunpack.c.l.b16 %v1208
  %v1849 = vunpack.c.l.b16 %v1209
  %v1850 = vunpack.c.l.b16 %v1210
  %v1851 = vunpack.c.l.b16 %v1211
  %v1852 = vunpack.c.l.b16 %v1212
  %v1853 = vunpack.c.l.b16 %v1213
  %v1854 = vunpack.c.l.b16 %v1214
  %v1855 = vunpack.c.l.b16 %v1215
  %v1856 = vunpack.c.l.b16 %v1216
  %v1857 = vunpack.c.l.b16 %v1217
  %v1858 = vunpack.c.l.b16 %v1218
  %v1859 = vunpack.c.l.b16 %v1219
  %v1860 = vpack.c.b16 %v1845, %v1844
  %v1861 = vpack.c.b16 %v1847, %v1846
  %v1862 = vpack.c.b16 %v1849, %v1848
  %v1863 = vpack.c.b16 %v1851, %v1850
  %v1864 = vpack.c.b16 %v1853, %v1852
  %v1865 = vpack.c.b16 %v1855, %v1854
  %v1866 = vpack.c.b16 %v1857, %v1856
  %v1867 = vpack.c.b16 %v1859, %v1858
  %1868 = vrot.lane.b32.xlu0 %v1860, 24
  %v1869 = vpop.permute.xlu0 %1868
  %1870 = vrot.lane.b32.xlu0 %v1861, 24
  %v1871 = vpop.permute.xlu0 %1870
  %1872 = vrot.lane.b32.xlu0 %v1862, 24
  %v1873 = vpop.permute.xlu0 %1872
  %1874 = vrot.lane.b32.xlu0 %v1863, 24
  %v1875 = vpop.permute.xlu0 %1874
  %1876 = vrot.lane.b32.xlu0 %v1864, 24
  %v1877 = vpop.permute.xlu0 %1876
  %1878 = vrot.lane.b32.xlu0 %v1865, 24
  %v1879 = vpop.permute.xlu0 %1878
  %1880 = vrot.lane.b32.xlu0 %v1866, 24
  %v1881 = vpop.permute.xlu0 %1880
  %1882 = vrot.lane.b32.xlu0 %v1867, 24
  %v1883 = vpop.permute.xlu0 %1882
  %v1884 = vunpack.c.l.b16 %v1249
  %v1885 = vunpack.c.l.b16 %v1263
  %v1886 = vunpack.c.l.b16 %v1277
  %v1887 = vunpack.c.l.b16 %v1291
  %v1888 = vunpack.c.l.b16 %v1305
  %v1889 = vunpack.c.l.b16 %v1319
  %v1890 = vunpack.c.l.b16 %v1333
  %v1891 = vunpack.c.l.b16 %v1347
  %v1892 = vunpack.c.l.b16 %v1361
  %v1893 = vunpack.c.l.b16 %v1375
  %v1894 = vunpack.c.l.b16 %v1389
  %v1895 = vunpack.c.l.b16 %v1403
  %v1896 = vunpack.c.l.b16 %v1417
  %v1897 = vunpack.c.l.b16 %v1431
  %v1898 = vunpack.c.l.b16 %v1445
  %v1899 = vunpack.c.l.b16 %v1459
  %v1900 = vpack.c.b16 %v1885, %v1884
  %v1901 = vpack.c.b16 %v1887, %v1886
  %v1902 = vpack.c.b16 %v1889, %v1888
  %v1903 = vpack.c.b16 %v1891, %v1890
  %v1904 = vpack.c.b16 %v1893, %v1892
  %v1905 = vpack.c.b16 %v1895, %v1894
  %v1906 = vpack.c.b16 %v1897, %v1896
  %v1907 = vpack.c.b16 %v1899, %v1898
  %1908 = vrot.lane.b32.xlu0 %v1900, 28
  %v1909 = vpop.permute.xlu0 %1908
  %1910 = vrot.lane.b32.xlu0 %v1901, 28
  %v1911 = vpop.permute.xlu0 %1910
  %1912 = vrot.lane.b32.xlu0 %v1902, 28
  %v1913 = vpop.permute.xlu0 %1912
  %1914 = vrot.lane.b32.xlu0 %v1903, 28
  %v1915 = vpop.permute.xlu0 %1914
  %1916 = vrot.lane.b32.xlu0 %v1904, 28
  %v1917 = vpop.permute.xlu0 %1916
  %1918 = vrot.lane.b32.xlu0 %v1905, 28
  %v1919 = vpop.permute.xlu0 %1918
  %1920 = vrot.lane.b32.xlu0 %v1906, 28
  %v1921 = vpop.permute.xlu0 %1920
  %1922 = vrot.lane.b32.xlu0 %v1907, 28
  %v1923 = vpop.permute.xlu0 %1922
  %v1924 = vunpack.c.l.b16 %v1511
  %v1925 = vunpack.c.l.b16 %v1515
  %v1926 = vunpack.c.l.b16 %v1519
  %v1927 = vunpack.c.l.b16 %v1523
  %v1928 = vunpack.c.l.b16 %v1527
  %v1929 = vunpack.c.l.b16 %v1531
  %v1930 = vunpack.c.l.b16 %v1535
  %v1931 = vunpack.c.l.b16 %v1539
  %v1932 = vunpack.c.l.b16 %v1543
  %v1933 = vunpack.c.l.b16 %v1547
  %v1934 = vunpack.c.l.b16 %v1551
  %v1935 = vunpack.c.l.b16 %v1555
  %v1936 = vunpack.c.l.b16 %v1559
  %v1937 = vunpack.c.l.b16 %v1563
  %v1938 = vunpack.c.l.b16 %v1567
  %v1939 = vunpack.c.l.b16 %v1571
  %v1940 = vpack.c.b16 %v1925, %v1924
  %v1941 = vpack.c.b16 %v1927, %v1926
  %v1942 = vpack.c.b16 %v1929, %v1928
  %v1943 = vpack.c.b16 %v1931, %v1930
  %v1944 = vpack.c.b16 %v1933, %v1932
  %v1945 = vpack.c.b16 %v1935, %v1934
  %v1946 = vpack.c.b16 %v1937, %v1936
  %v1947 = vpack.c.b16 %v1939, %v1938
  %1948 = vrot.lane.b32.xlu0 %v1940, 32
  %v1949 = vpop.permute.xlu0 %1948
  %1950 = vrot.lane.b32.xlu0 %v1941, 32
  %v1951 = vpop.permute.xlu0 %1950
  %1952 = vrot.lane.b32.xlu0 %v1942, 32
  %v1953 = vpop.permute.xlu0 %1952
  %1954 = vrot.lane.b32.xlu0 %v1943, 32
  %v1955 = vpop.permute.xlu0 %1954
  %1956 = vrot.lane.b32.xlu0 %v1944, 32
  %v1957 = vpop.permute.xlu0 %1956
  %1958 = vrot.lane.b32.xlu0 %v1945, 32
  %v1959 = vpop.permute.xlu0 %1958
  %1960 = vrot.lane.b32.xlu0 %v1946, 32
  %v1961 = vpop.permute.xlu0 %1960
  %1962 = vrot.lane.b32.xlu0 %v1947, 32
  %v1963 = vpop.permute.xlu0 %1962
  %vm1964 = vcmask 31744
  %v1967 = vsel %vm1964, %v1604, %v1637
  %v1970 = vsel %vm1964, %v1605, %v1639
  %v1973 = vsel %vm1964, %v1606, %v1641
  %v1976 = vsel %vm1964, %v1607, %v1643
  %v1979 = vsel %vm1964, %v1608, %v1645
  %v1982 = vsel %vm1964, %v1609, %v1647
  %v1985 = vsel %vm1964, %v1610, %v1649
  %v1988 = vsel %vm1964, %v1611, %v1651
  %vm1989 = vcmask 64512
  %v1991 = vsel %vm1989, %v1967, %v1677
  %v1993 = vsel %vm1989, %v1970, %v1679
  %v1995 = vsel %vm1989, %v1973, %v1681
  %v1997 = vsel %vm1989, %v1976, %v1683
  %v1999 = vsel %vm1989, %v1979, %v1685
  %v2001 = vsel %vm1989, %v1982, %v1687
  %v2003 = vsel %vm1989, %v1985, %v1689
  %v2005 = vsel %vm1989, %v1988, %v1691
  %vm2006 = vcmask 97280
  %v2008 = vsel %vm2006, %v1991, %v1733
  %v2010 = vsel %vm2006, %v1993, %v1735
  %v2012 = vsel %vm2006, %v1995, %v1737
  %v2014 = vsel %vm2006, %v1997, %v1739
  %v2016 = vsel %vm2006, %v1999, %v1741
  %v2018 = vsel %vm2006, %v2001, %v1743
  %v2020 = vsel %vm2006, %v2003, %v1745
  %v2022 = vsel %vm2006, %v2005, %v1747
  %vm2023 = vcmask 130048
  %v2025 = vsel %vm2023, %v2008, %v1773
  %v2027 = vsel %vm2023, %v2010, %v1775
  %v2029 = vsel %vm2023, %v2012, %v1777
  %v2031 = vsel %vm2023, %v2014, %v1779
  %v2033 = vsel %vm2023, %v2016, %v1781
  %v2035 = vsel %vm2023, %v2018, %v1783
  %v2037 = vsel %vm2023, %v2020, %v1785
  %v2039 = vsel %vm2023, %v2022, %v1787
  %vm2040 = vcmask 162816
  %v2042 = vsel %vm2040, %v2025, %v1813
  %v2044 = vsel %vm2040, %v2027, %v1815
  %v2046 = vsel %vm2040, %v2029, %v1817
  %v2048 = vsel %vm2040, %v2031, %v1819
  %v2050 = vsel %vm2040, %v2033, %v1821
  %v2052 = vsel %vm2040, %v2035, %v1823
  %v2054 = vsel %vm2040, %v2037, %v1825
  %v2056 = vsel %vm2040, %v2039, %v1827
  %vm2057 = vcmask 195584
  %v2059 = vsel %vm2057, %v2042, %v1869
  %v2061 = vsel %vm2057, %v2044, %v1871
  %v2063 = vsel %vm2057, %v2046, %v1873
  %v2065 = vsel %vm2057, %v2048, %v1875
  %v2067 = vsel %vm2057, %v2050, %v1877
  %v2069 = vsel %vm2057, %v2052, %v1879
  %v2071 = vsel %vm2057, %v2054, %v1881
  %v2073 = vsel %vm2057, %v2056, %v1883
  %vm2074 = vcmask 228352
  %v2076 = vsel %vm2074, %v2059, %v1909
  %v2078 = vsel %vm2074, %v2061, %v1911
  %v2080 = vsel %vm2074, %v2063, %v1913
  %v2082 = vsel %vm2074, %v2065, %v1915
  %v2084 = vsel %vm2074, %v2067, %v1917
  %v2086 = vsel %vm2074, %v2069, %v1919
  %v2088 = vsel %vm2074, %v2071, %v1921
  %v2090 = vsel %vm2074, %v2073, %v1923
  %vm2091 = vcmask 261120
  %v2093 = vsel %vm2091, %v2076, %v1949
  %v2095 = vsel %vm2091, %v2078, %v1951
  %v2097 = vsel %vm2091, %v2080, %v1953
  %v2099 = vsel %vm2091, %v2082, %v1955
  %v2101 = vsel %vm2091, %v2084, %v1957
  %v2103 = vsel %vm2091, %v2086, %v1959
  %v2105 = vsel %vm2091, %v2088, %v1961
  %v2107 = vsel %vm2091, %v2090, %v1963
  %v2108 = vld [vmem:[%s3] sm:$0xf]
  %v2109 = vld [vmem:[%s3 + $0x4] sm:$0xf]
  %v2110 = vld [vmem:[%s3 + $0x8] sm:$0xf]
  %v2111 = vld [vmem:[%s3 + $0xc] sm:$0xf]
  %v2112 = vld [vmem:[%s3 + $0x10] sm:$0x3]
  %v2118 = vunpack.c.l.b16 %v2108
  %v2119 = vunpack.c.l.b16 %v2109
  %v2120 = vunpack.c.l.b16 %v2110
  %v2121 = vunpack.c.l.b16 %v2111
  %v2122 = vunpack.c.l.b16 %v2112
  %v2123 = vpack.c.b16 %v2119, %v2118
  %v2124 = vpack.c.b16 %v2121, %v2120
  %v2125 = vpack.c.b16 %v2122, %v2122
  %vm2128 = vcmask 293888
  %v2129 = vsel %vm2128, %v2093, 0
  %v2131 = vsel %vm2128, %v2095, 0
  %v2133 = vsel %vm2128, %v2097, 0
  %v2135 = vsel %vm2128, %v2099, 0
  %v2137 = vsel %vm2128, %v2101, 0
  %v2139 = vsel %vm2128, %v2103, 0
  %v2141 = vsel %vm2128, %v2105, 0
  %v2143 = vsel %vm2128, %v2107, 0
  %vm2145 = vcmask 1041408
  %v2147 = vsel %vm2145, %v2125, 0
  %2149 = vmatprep.subr.bf16.mxu0 0
  %2150 = vmatpush1.bf16.msra.mxu0 0
  %2151 = vmatprep.subr.bf16.mxu0 0
  %2152 = vmatpush1.bf16.msra.mxu0 0
  %2153 = vmatprep.subr.bf16.mxu0 0
  %2154 = vmatpush1.bf16.msra.mxu0 0
  %2155 = vmatprep.subr.bf16.mxu0 0
  %2156 = vmatpush1.bf16.msra.mxu0 0
  %2157 = vmatprep.subr.bf16.mxu0 0
  %2158 = vmatpush1.bf16.msra.mxu0 0
  %2159 = vmatprep.subr.bf16.mxu0 0
  %2160 = vmatpush1.bf16.msra.mxu0 %v2147
  %2161 = vmatprep.subr.bf16.mxu0 0
  %2162 = vmatpush1.bf16.msra.mxu0 %v2124
  %2163 = vmatprep.subr.bf16.mxu0 0
  %2164 = vmatpush1.bf16.msra.mxu0 %v2123
  %2165 = vmatprep.subr.bf16.mxu0 0
  %2166 = vmatpush2.bf16.msra.mxu0 0
  %2167 = vmatprep.subr.bf16.mxu0 0
  %2168 = vmatpush2.bf16.msra.mxu0 0
  %2169 = vmatprep.subr.bf16.mxu0 0
  %2170 = vmatpush2.bf16.msra.mxu0 0
  %2171 = vmatprep.subr.bf16.mxu0 0
  %2172 = vmatpush2.bf16.msra.mxu0 0
  %2173 = vmatprep.subr.bf16.mxu0 0
  %2174 = vmatpush2.bf16.msra.mxu0 0
  %2175 = vmatprep.subr.bf16.mxu0 0
  %2176 = vmatpush2.bf16.msra.mxu0 0
  %2177 = vmatprep.subr.bf16.mxu0 0
  %2178 = vmatpush2.bf16.msra.mxu0 0
  %2179 = vmatprep.subr.bf16.mxu0 0
  %2180 = vmatpush2.bf16.msra.mxu0 0
  %2181 = vmatprep.mubr.bf16.mxu0 0
  %2182 = vmatmul.mubr.bf16.gmra.mxu0 %v2129
  %v2183 = vpop.f32.mrf.mxu0
  %v2184 = vadd.f32 0.0, %v2183
  %v2185 = vpop.f32.mrf.mxu0
  %v2186 = vpop.f32.mrf.mxu0
  %v2187 = vadd.f32 0.0, %v2186
  %v2188 = vpop.f32.mrf.mxu0
  %2189 = vmatprep.mubr.bf16.mxu0 0
  %2190 = vmatmul.mubr.bf16.gmra.mxu0 %v2131
  %v2191 = vpop.f32.mrf.mxu0
  %v2192 = vadd.f32 0.0, %v2191
  %v2193 = vpop.f32.mrf.mxu0
  %v2194 = vpop.f32.mrf.mxu0
  %v2195 = vadd.f32 0.0, %v2194
  %v2196 = vpop.f32.mrf.mxu0
  %2197 = vmatprep.mubr.bf16.mxu0 0
  %2198 = vmatmul.mubr.bf16.gmra.mxu0 %v2133
  %v2199 = vpop.f32.mrf.mxu0
  %v2200 = vadd.f32 0.0, %v2199
  %v2201 = vpop.f32.mrf.mxu0
  %v2202 = vpop.f32.mrf.mxu0
  %v2203 = vadd.f32 0.0, %v2202
  %v2204 = vpop.f32.mrf.mxu0
  %2205 = vmatprep.mubr.bf16.mxu0 0
  %2206 = vmatmul.mubr.bf16.gmra.mxu0 %v2135
  %v2207 = vpop.f32.mrf.mxu0
  %v2208 = vadd.f32 0.0, %v2207
  %v2209 = vpop.f32.mrf.mxu0
  %v2210 = vpop.f32.mrf.mxu0
  %v2211 = vadd.f32 0.0, %v2210
  %v2212 = vpop.f32.mrf.mxu0
  %2213 = vmatprep.mubr.bf16.mxu0 0
  %2214 = vmatmul.mubr.bf16.gmra.mxu0 %v2137
  %v2215 = vpop.f32.mrf.mxu0
  %v2216 = vadd.f32 0.0, %v2215
  %v2217 = vpop.f32.mrf.mxu0
  %v2218 = vpop.f32.mrf.mxu0
  %v2219 = vadd.f32 0.0, %v2218
  %v2220 = vpop.f32.mrf.mxu0
  %2221 = vmatprep.mubr.bf16.mxu0 0
  %2222 = vmatmul.mubr.bf16.gmra.mxu0 %v2139
  %v2223 = vpop.f32.mrf.mxu0
  %v2224 = vadd.f32 0.0, %v2223
  %v2225 = vpop.f32.mrf.mxu0
  %v2226 = vpop.f32.mrf.mxu0
  %v2227 = vadd.f32 0.0, %v2226
  %v2228 = vpop.f32.mrf.mxu0
  %2229 = vmatprep.mubr.bf16.mxu0 0
  %2230 = vmatmul.mubr.bf16.gmra.mxu0 %v2141
  %v2231 = vpop.f32.mrf.mxu0
  %v2232 = vadd.f32 0.0, %v2231
  %v2233 = vpop.f32.mrf.mxu0
  %v2234 = vpop.f32.mrf.mxu0
  %v2235 = vadd.f32 0.0, %v2234
  %v2236 = vpop.f32.mrf.mxu0
  %2237 = vmatprep.mubr.bf16.mxu0 0
  %2238 = vmatmul.mubr.bf16.gmra.mxu0 %v2143
  %v2239 = vpop.f32.mrf.mxu0
  %v2240 = vadd.f32 0.0, %v2239
  %v2241 = vpop.f32.mrf.mxu0
  %v2242 = vpop.f32.mrf.mxu0
  %v2243 = vadd.f32 0.0, %v2242
  %v2244 = vpop.f32.mrf.mxu0
  %2245 = vdwg.mxu0
  %v2246 = vld [vmem:[%s4] sm:$0x1]
  %v2248 = vlaneseq
  %v2249 = vshrl.u32 %v2248, 7
  %v2250 = vsub.s32 0, %v2249
  %v2251 = vrot.slane %v2246, %v2250
  %v2253 = vadd.f32 %v2184, %v2251
  %v2254 = vadd.f32 %v2187, %v2251
  %v2255 = vadd.f32 %v2192, %v2251
  %v2256 = vadd.f32 %v2195, %v2251
  %v2257 = vadd.f32 %v2200, %v2251
  %v2258 = vadd.f32 %v2203, %v2251
  %v2259 = vadd.f32 %v2208, %v2251
  %v2260 = vadd.f32 %v2211, %v2251
  %v2261 = vadd.f32 %v2216, %v2251
  %v2262 = vadd.f32 %v2219, %v2251
  %v2263 = vadd.f32 %v2224, %v2251
  %v2264 = vadd.f32 %v2227, %v2251
  %v2265 = vadd.f32 %v2232, %v2251
  %v2266 = vadd.f32 %v2235, %v2251
  %v2267 = vadd.f32 %v2240, %v2251
  %v2268 = vadd.f32 %v2243, %v2251
  %v2269 = vpack.c.bf16 %v2254, %v2253
  %v2270 = vpack.c.bf16 %v2256, %v2255
  %v2271 = vpack.c.bf16 %v2258, %v2257
  %v2272 = vpack.c.bf16 %v2260, %v2259
  %v2273 = vpack.c.bf16 %v2262, %v2261
  %v2274 = vpack.c.bf16 %v2264, %v2263
  %v2275 = vpack.c.bf16 %v2266, %v2265
  %v2276 = vpack.c.bf16 %v2268, %v2267
  %v2285 = vunpack.c.l.b16 %v2269
  %v2286 = vunpack.c.h.b16 %v2269
  %v2287 = vunpack.c.l.b16 %v2270
  %v2288 = vunpack.c.h.b16 %v2270
  %v2289 = vunpack.c.l.b16 %v2271
  %v2290 = vunpack.c.h.b16 %v2271
  %v2291 = vunpack.c.l.b16 %v2272
  %v2292 = vunpack.c.h.b16 %v2272
  %v2293 = vunpack.c.l.b16 %v2273
  %v2294 = vunpack.c.h.b16 %v2273
  %v2295 = vunpack.c.l.b16 %v2274
  %v2296 = vunpack.c.h.b16 %v2274
  %v2297 = vunpack.c.l.b16 %v2275
  %v2298 = vunpack.c.h.b16 %v2275
  %v2299 = vunpack.c.l.b16 %v2276
  %v2300 = vunpack.c.h.b16 %v2276
  %v2301 = vpack.c.b16 %v2285, %v2285
  %v2302 = vpack.c.b16 %v2286, %v2286
  %v2303 = vpack.c.b16 %v2287, %v2287
  %v2304 = vpack.c.b16 %v2288, %v2288
  %v2305 = vpack.c.b16 %v2289, %v2289
  %v2306 = vpack.c.b16 %v2290, %v2290
  %v2307 = vpack.c.b16 %v2291, %v2291
  %v2308 = vpack.c.b16 %v2292, %v2292
  %v2309 = vpack.c.b16 %v2293, %v2293
  %v2310 = vpack.c.b16 %v2294, %v2294
  %v2311 = vpack.c.b16 %v2295, %v2295
  %v2312 = vpack.c.b16 %v2296, %v2296
  %v2313 = vpack.c.b16 %v2297, %v2297
  %v2314 = vpack.c.b16 %v2298, %v2298
  %v2315 = vpack.c.b16 %v2299, %v2299
  %v2316 = vpack.c.b16 %v2300, %v2300
  %vm2333 = vcmask 519168
  %2334 = vst.msk [vmem:[%s5] sm:$0xf] %vm2333, %v2301
  %2335 = vst.msk [vmem:[%s5 + $0x4] sm:$0xf] %vm2333, %v2302
  %2336 = vst.msk [vmem:[%s5 + $0x8] sm:$0xf] %vm2333, %v2303
  %2337 = vst.msk [vmem:[%s5 + $0xc] sm:$0xf] %vm2333, %v2304
  %2338 = vst.msk [vmem:[%s5 + $0x10] sm:$0xf] %vm2333, %v2305
  %2339 = vst.msk [vmem:[%s5 + $0x14] sm:$0xf] %vm2333, %v2306
  %2340 = vst.msk [vmem:[%s5 + $0x18] sm:$0xf] %vm2333, %v2307
  %2341 = vst.msk [vmem:[%s5 + $0x1c] sm:$0xf] %vm2333, %v2308
  %2342 = vst.msk [vmem:[%s5 + $0x20] sm:$0xf] %vm2333, %v2309
  %2343 = vst.msk [vmem:[%s5 + $0x24] sm:$0xf] %vm2333, %v2310
  %2344 = vst.msk [vmem:[%s5 + $0x28] sm:$0xf] %vm2333, %v2311
  %2345 = vst.msk [vmem:[%s5 + $0x2c] sm:$0xf] %vm2333, %v2312
  %2346 = vst.msk [vmem:[%s5 + $0x30] sm:$0xf] %vm2333, %v2313
  %2347 = vst.msk [vmem:[%s5 + $0x34] sm:$0xf] %vm2333, %v2314
  %2348 = vst.msk [vmem:[%s5 + $0x38] sm:$0xf] %vm2333, %v2315
  %2349 = vst.msk [vmem:[%s5 + $0x3c] sm:$0xf] %vm2333, %v2316
  // Predicated region
  $region26: #{downsample_forward.3} parent=0 // pred_check
    %p2350 = pneg %p152
  $region27: #{downsample_forward.3} parent=0 // pred_check_branch
    %2352 = sbr.rel (%p2350) target = $region29
  $region28: #{downsample_forward.3} parent=0 // pred_region
    %vm2353 = vcmask 516096
    %2354 = vst.msk [vmem:[%s6] sm:$0x1] %vm2353, 0.0
    %2355 = vst.msk [vmem:[%s7] sm:$0x1] %vm2353, 0.0
  $region29: #{downsample_forward.3} parent=0 // pred_fallthru
    _
  %v2356 = vld [vmem:[%s6] sm:$0x1]
  %vm2357 = vcmask 523264
  %v2358 = vsel %vm2357, %v2184, 0.0
  %v2359 = vsel %vm2357, %v2187, 0.0
  %v2360 = vadd.f32 %v2358, %v2359
  %v2361 = vsel %vm2357, %v2192, 0.0
  %v2362 = vadd.f32 %v2360, %v2361
  %v2363 = vsel %vm2357, %v2195, 0.0
  %v2364 = vadd.f32 %v2362, %v2363
  %v2365 = vsel %vm2357, %v2200, 0.0
  %v2366 = vadd.f32 %v2364, %v2365
  %v2367 = vsel %vm2357, %v2203, 0.0
  %v2368 = vadd.f32 %v2366, %v2367
  %v2369 = vsel %vm2357, %v2208, 0.0
  %v2370 = vadd.f32 %v2368, %v2369
  %v2371 = vsel %vm2357, %v2211, 0.0
  %v2372 = vadd.f32 %v2370, %v2371
  %v2373 = vsel %vm2357, %v2216, 0.0
  %v2374 = vadd.f32 %v2372, %v2373
  %v2375 = vsel %vm2357, %v2219, 0.0
  %v2376 = vadd.f32 %v2374, %v2375
  %v2377 = vsel %vm2357, %v2224, 0.0
  %v2378 = vadd.f32 %v2376, %v2377
  %v2379 = vsel %vm2357, %v2227, 0.0
  %v2380 = vadd.f32 %v2378, %v2379
  %v2381 = vsel %vm2357, %v2232, 0.0
  %v2382 = vadd.f32 %v2380, %v2381
  %v2383 = vsel %vm2357, %v2235, 0.0
  %v2384 = vadd.f32 %v2382, %v2383
  %v2385 = vsel %vm2357, %v2240, 0.0
  %v2386 = vadd.f32 %v2384, %v2385
  %v2387 = vsel %vm2357, %v2243, 0.0
  %v2388 = vadd.f32 %v2386, %v2387
  %v2389 = vrot.slane %v2388, 4
  %v2390 = vadd.f32 %v2388, %v2389
  %v2391 = vrot.slane %v2390, 2
  %v2392 = vadd.f32 %v2390, %v2391
  %v2393 = vrot.slane %v2392, 1
  %v2394 = vadd.f32 %v2392, %v2393
  %v2395 = vadd.f32 %v2356, %v2394
  %vm2396 = vcmask 516096
  %2397 = vst.msk [vmem:[%s6] sm:$0x1] %vm2396, %v2395
  %v2398 = vld [vmem:[%s7] sm:$0x1]
  %v2399 = vmul.f32 %v2184, %v2184
  %v2400 = vmul.f32 %v2187, %v2187
  %v2401 = vmul.f32 %v2192, %v2192
  %v2402 = vmul.f32 %v2195, %v2195
  %v2403 = vmul.f32 %v2200, %v2200
  %v2404 = vmul.f32 %v2203, %v2203
  %v2405 = vmul.f32 %v2208, %v2208
  %v2406 = vmul.f32 %v2211, %v2211
  %v2407 = vmul.f32 %v2216, %v2216
  %v2408 = vmul.f32 %v2219, %v2219
  %v2409 = vmul.f32 %v2224, %v2224
  %v2410 = vmul.f32 %v2227, %v2227
  %v2411 = vmul.f32 %v2232, %v2232
  %v2412 = vmul.f32 %v2235, %v2235
  %v2413 = vmul.f32 %v2240, %v2240
  %v2414 = vmul.f32 %v2243, %v2243
  %v2415 = vsel %vm2357, %v2399, 0.0
  %v2416 = vsel %vm2357, %v2400, 0.0
  %v2417 = vadd.f32 %v2415, %v2416
  %v2418 = vsel %vm2357, %v2401, 0.0
  %v2419 = vadd.f32 %v2417, %v2418
  %v2420 = vsel %vm2357, %v2402, 0.0
  %v2421 = vadd.f32 %v2419, %v2420
  %v2422 = vsel %vm2357, %v2403, 0.0
  %v2423 = vadd.f32 %v2421, %v2422
  %v2424 = vsel %vm2357, %v2404, 0.0
  %v2425 = vadd.f32 %v2423, %v2424
  %v2426 = vsel %vm2357, %v2405, 0.0
  %v2427 = vadd.f32 %v2425, %v2426
  %v2428 = vsel %vm2357, %v2406, 0.0
  %v2429 = vadd.f32 %v2427, %v2428
  %v2430 = vsel %vm2357, %v2407, 0.0
  %v2431 = vadd.f32 %v2429, %v2430
  %v2432 = vsel %vm2357, %v2408, 0.0
  %v2433 = vadd.f32 %v2431, %v2432
  %v2434 = vsel %vm2357, %v2409, 0.0
  %v2435 = vadd.f32 %v2433, %v2434
  %v2436 = vsel %vm2357, %v2410, 0.0
  %v2437 = vadd.f32 %v2435, %v2436
  %v2438 = vsel %vm2357, %v2411, 0.0
  %v2439 = vadd.f32 %v2437, %v2438
  %v2440 = vsel %vm2357, %v2412, 0.0
  %v2441 = vadd.f32 %v2439, %v2440
  %v2442 = vsel %vm2357, %v2413, 0.0
  %v2443 = vadd.f32 %v2441, %v2442
  %v2444 = vsel %vm2357, %v2414, 0.0
  %v2445 = vadd.f32 %v2443, %v2444
  %v2446 = vrot.slane %v2445, 4
  %v2447 = vadd.f32 %v2445, %v2446
  %v2448 = vrot.slane %v2447, 2
  %v2449 = vadd.f32 %v2447, %v2448
  %v2450 = vrot.slane %v2449, 1
  %v2451 = vadd.f32 %v2449, %v2450
  %v2452 = vadd.f32 %v2398, %v2451
  %2453 = vst.msk [vmem:[%s7] sm:$0x1] %vm2396, %v2452
  // Predicated region
  $region30: #{downsample_forward.3} parent=0 // pred_check
    _
  $region31: #{downsample_forward.3} parent=0 // pred_check_branch
    %2455 = sbr.rel (0) target = $region33
  $region32: #{downsample_forward.3} parent=0 // pred_region
    _
  $region33: #{downsample_forward.3} parent=0 // pred_fallthru
    _
  // Predicated region
  $region34: #{downsample_forward.3} parent=0 // pred_check
    _
  $region35: #{downsample_forward.3} parent=0 // pred_check_branch
    %2457 = sbr.rel (0) target = $region37
  $region36: #{downsample_forward.3} parent=0 // pred_region
    _
  $region37: #{downsample_forward.3} parent=0 // pred_fallthru
    _
  // Predicated region
  $region38: #{downsample_forward.3} parent=0 // pred_check
    _
  $region39: #{downsample_forward.3} parent=0 // pred_check_branch
    %2459 = sbr.rel (0) target = $region41
  $region40: #{downsample_forward.3} parent=0 // pred_region
    _
  $region41: #{downsample_forward.3} parent=0 // pred_fallthru
    _
  // Predicated region
  $region42: #{downsample_forward.3} parent=0 // pred_check
    _
  $region43: #{downsample_forward.3} parent=0 // pred_check_branch
    %2461 = sbr.rel (0) target = $region45
  $region44: #{downsample_forward.3} parent=0 // pred_region
    _
  $region45: #{downsample_forward.3} parent=0 // pred_fallthru
    _
  // Predicated region
  $region46: #{downsample_forward.3} parent=0 // pred_check
    _
  $region47: #{downsample_forward.3} parent=0 // pred_check_branch
    %2463 = sbr.rel (0) target = $region49
  $region48: #{downsample_forward.3} parent=0 // pred_region
    _
  $region49: #{downsample_forward.3} parent=0 // pred_fallthru
    _
  // Predicated region
  $region50: #{downsample_forward.3} parent=0 // pred_check
    _
  $region51: #{downsample_forward.3} parent=0 // pred_check_branch
    %2465 = sbr.rel (0) target = $region53
  $region52: #{downsample_forward.3} parent=0 // pred_region
    _
  $region53: #{downsample_forward.3} parent=0 // pred_fallthru
    _

// kernel: downsample_forward.4
$region0: #{downsample_forward.4}
  #allocation0 [shape = 'u32[]', space=smem, size = 0x4, offset = 0x4, fixed_abs, tag = 'smem constant byte address 0x4 - core index']
  #allocation1 [shape = 'u32[144,128]{1,0:T(1,128)}', space=vmem, size = 0x12000, scoped, tag = 'internal scratch']
  #allocation2 [shape = 'bf16[2,10,10,64]{3,2,1,0:T(8,128)(2,1)}', space=vmem, size = 0x14000, scoped, tag = 'scratch operand']
  %s0 = inlined_call_operand.vmem [shape: bf16[2,8,8,64], index: 0, kind: input, shape index: {}]
  %s1 = inlined_call_operand.vmem [shape: f32[1,64], index: 1, kind: input, shape index: {}]
  %s2 = inlined_call_operand.vmem [shape: f32[1,64], index: 2, kind: input, shape index: {}]
  %s3 = inlined_call_operand.vmem [shape: bf16[576,64], index: 3, kind: input, shape index: {}]
  %s4 = inlined_call_operand.vmem [shape: f32[1,64], index: 4, kind: input, shape index: {}]
  %s5 = inlined_call_operand.vmem [shape: bf16[128,64], index: 5, kind: output, shape index: {0}]
  %s6 = inlined_call_operand.vmem [shape: f32[1,64], index: 6, kind: output, shape index: {1}]
  %s7 = inlined_call_operand.vmem [shape: f32[1,64], index: 7, kind: output, shape index: {2}]
  %8 = xla_tuple %s5, %s6, %s7
  %s9 = sld [smem:[#allocation0]]
  $region54: #{downsample_forward.4} parent=0
    _
  %s11 = ssub.s32 1, %s9
  %s12 = scalar_select 0, %s11, %s9
  // Predicated region
  $region2: #{downsample_forward.4} parent=0 // pred_check
    _
  $region3: #{downsample_forward.4} parent=0 // pred_check_branch
    %14 = sbr.rel (0) target = $region5
  $region4: #{downsample_forward.4} parent=0 // pred_region
    _
  $region5: #{downsample_forward.4} parent=0 // pred_fallthru
    _
  // Predicated region
  $region6: #{downsample_forward.4} parent=0 // pred_check
    _
  $region7: #{downsample_forward.4} parent=0 // pred_check_branch
    %16 = sbr.rel (0) target = $region9
  $region8: #{downsample_forward.4} parent=0 // pred_region
    _
  $region9: #{downsample_forward.4} parent=0 // pred_fallthru
    _
  // Predicated region
  $region10: #{downsample_forward.4} parent=0 // pred_check
    _
  $region11: #{downsample_forward.4} parent=0 // pred_check_branch
    %18 = sbr.rel (0) target = $region13
  $region12: #{downsample_forward.4} parent=0 // pred_region
    _
  $region13: #{downsample_forward.4} parent=0 // pred_fallthru
    _
  // Predicated region
  $region14: #{downsample_forward.4} parent=0 // pred_check
    _
  $region15: #{downsample_forward.4} parent=0 // pred_check_branch
    %20 = sbr.rel (0) target = $region17
  $region16: #{downsample_forward.4} parent=0 // pred_region
    _
  $region17: #{downsample_forward.4} parent=0 // pred_fallthru
    _
  // Predicated region
  $region18: #{downsample_forward.4} parent=0 // pred_check
    _
  $region19: #{downsample_forward.4} parent=0 // pred_check_branch
    %22 = sbr.rel (0) target = $region21
  $region20: #{downsample_forward.4} parent=0 // pred_region
    _
  $region21: #{downsample_forward.4} parent=0 // pred_fallthru
    _
  %v24 = vld [vmem:[%s0] sm:$0xf]
  %v25 = vld [vmem:[%s0 + $0x4] sm:$0xf]
  %v26 = vld [vmem:[%s0 + $0x8] sm:$0xf]
  %v27 = vld [vmem:[%s0 + $0xc] sm:$0xf]
  %v28 = vld [vmem:[%s0 + $0x10] sm:$0xf]
  %v29 = vld [vmem:[%s0 + $0x14] sm:$0xf]
  %v30 = vld [vmem:[%s0 + $0x18] sm:$0xf]
  %v31 = vld [vmem:[%s0 + $0x1c] sm:$0xf]
  %v32 = vld [vmem:[%s0 + $0x20] sm:$0xf]
  %v33 = vld [vmem:[%s0 + $0x24] sm:$0xf]
  %v34 = vld [vmem:[%s0 + $0x28] sm:$0xf]
  %v35 = vld [vmem:[%s0 + $0x2c] sm:$0xf]
  %v36 = vld [vmem:[%s0 + $0x30] sm:$0xf]
  %v37 = vld [vmem:[%s0 + $0x34] sm:$0xf]
  %v38 = vld [vmem:[%s0 + $0x38] sm:$0xf]
  %v39 = vld [vmem:[%s0 + $0x3c] sm:$0xf]
  %v40 = vld [vmem:[%s1] sm:$0x1]
  %v41 = vld [vmem:[%s2] sm:$0x1]
  %v42 = vunpack.c.l.bf16 %v24
  %v43 = vunpack.c.l.bf16 %v25
  %v44 = vunpack.c.l.bf16 %v26
  %v45 = vunpack.c.l.bf16 %v27
  %v46 = vunpack.c.l.bf16 %v28
  %v47 = vunpack.c.l.bf16 %v29
  %v48 = vunpack.c.l.bf16 %v30
  %v49 = vunpack.c.l.bf16 %v31
  %v50 = vunpack.c.l.bf16 %v32
  %v51 = vunpack.c.l.bf16 %v33
  %v52 = vunpack.c.l.bf16 %v34
  %v53 = vunpack.c.l.bf16 %v35
  %v54 = vunpack.c.l.bf16 %v36
  %v55 = vunpack.c.l.bf16 %v37
  %v56 = vunpack.c.l.bf16 %v38
  %v57 = vunpack.c.l.bf16 %v39
  %v59 = vlaneseq
  %v60 = vshrl.u32 %v59, 7
  %v61 = vsub.s32 0, %v60
  %v62 = vrot.slane %v40, %v61
  %v64 = vmul.f32 %v42, %v62
  %v65 = vmul.f32 %v43, %v62
  %v66 = vmul.f32 %v44, %v62
  %v67 = vmul.f32 %v45, %v62
  %v68 = vmul.f32 %v46, %v62
  %v69 = vmul.f32 %v47, %v62
  %v70 = vmul.f32 %v48, %v62
  %v71 = vmul.f32 %v49, %v62
  %v72 = vmul.f32 %v50, %v62
  %v73 = vmul.f32 %v51, %v62
  %v74 = vmul.f32 %v52, %v62
  %v75 = vmul.f32 %v53, %v62
  %v76 = vmul.f32 %v54, %v62
  %v77 = vmul.f32 %v55, %v62
  %v78 = vmul.f32 %v56, %v62
  %v79 = vmul.f32 %v57, %v62
  %v81 = vlaneseq
  %v82 = vshrl.u32 %v81, 7
  %v83 = vsub.s32 0, %v82
  %v84 = vrot.slane %v41, %v83
  %v86 = vadd.f32 %v64, %v84
  %v87 = vadd.f32 %v65, %v84
  %v88 = vadd.f32 %v66, %v84
  %v89 = vadd.f32 %v67, %v84
  %v90 = vadd.f32 %v68, %v84
  %v91 = vadd.f32 %v69, %v84
  %v92 = vadd.f32 %v70, %v84
  %v93 = vadd.f32 %v71, %v84
  %v94 = vadd.f32 %v72, %v84
  %v95 = vadd.f32 %v73, %v84
  %v96 = vadd.f32 %v74, %v84
  %v97 = vadd.f32 %v75, %v84
  %v98 = vadd.f32 %v76, %v84
  %v99 = vadd.f32 %v77, %v84
  %v100 = vadd.f32 %v78, %v84
  %v101 = vadd.f32 %v79, %v84
  %v102 = vmax.f32 %v86, 0.0
  %v103 = vmax.f32 %v87, 0.0
  %v104 = vmax.f32 %v88, 0.0
  %v105 = vmax.f32 %v89, 0.0
  %v106 = vmax.f32 %v90, 0.0
  %v107 = vmax.f32 %v91, 0.0
  %v108 = vmax.f32 %v92, 0.0
  %v109 = vmax.f32 %v93, 0.0
  %v110 = vmax.f32 %v94, 0.0
  %v111 = vmax.f32 %v95, 0.0
  %v112 = vmax.f32 %v96, 0.0
  %v113 = vmax.f32 %v97, 0.0
  %v114 = vmax.f32 %v98, 0.0
  %v115 = vmax.f32 %v99, 0.0
  %v116 = vmax.f32 %v100, 0.0
  %v117 = vmax.f32 %v101, 0.0
  %v118 = vpack.c.bf16 %v102, %v102
  %v119 = vpack.c.bf16 %v103, %v103
  %v120 = vpack.c.bf16 %v104, %v104
  %v121 = vpack.c.bf16 %v105, %v105
  %v122 = vpack.c.bf16 %v106, %v106
  %v123 = vpack.c.bf16 %v107, %v107
  %v124 = vpack.c.bf16 %v108, %v108
  %v125 = vpack.c.bf16 %v109, %v109
  %v126 = vpack.c.bf16 %v110, %v110
  %v127 = vpack.c.bf16 %v111, %v111
  %v128 = vpack.c.bf16 %v112, %v112
  %v129 = vpack.c.bf16 %v113, %v113
  %v130 = vpack.c.bf16 %v114, %v114
  %v131 = vpack.c.bf16 %v115, %v115
  %v132 = vpack.c.bf16 %v116, %v116
  %v133 = vpack.c.bf16 %v117, %v117
  %p134 = scmp.eq.s32.totalorder 0, 0
  // Predicated region
  $region22: #{downsample_forward.4} parent=0 // pred_check
    %p135 = pneg %p134
  $region23: #{downsample_forward.4} parent=0 // pred_check_branch
    %137 = sbr.rel (%p135) target = $region25
  $region24: #{downsample_forward.4} parent=0 // pred_region
    %vm138 = vcmask 519168
    %139 = vst.msk [vmem:[#allocation2] sm:$0xf] %vm138, 0
    %vm140 = vcmask 516096
    %141 = vst.msk [vmem:[#allocation2 + $0x4] sm:$0x1] %vm140, 0
    %142 = vst.msk [vmem:[#allocation2 + $0x8] sm:$0xf] %vm138, 0
    %143 = vst.msk [vmem:[#allocation2 + $0xc] sm:$0x1] %vm140, 0
    %144 = vst.msk [vmem:[#allocation2 + $0x10] sm:$0xf] %vm138, 0
    %145 = vst.msk [vmem:[#allocation2 + $0x14] sm:$0x1] %vm140, 0
    %146 = vst.msk [vmem:[#allocation2 + $0x18] sm:$0xf] %vm138, 0
    %147 = vst.msk [vmem:[#allocation2 + $0x1c] sm:$0x1] %vm140, 0
    %148 = vst.msk [vmem:[#allocation2 + $0x20] sm:$0xf] %vm138, 0
    %149 = vst.msk [vmem:[#allocation2 + $0x24] sm:$0x1] %vm140, 0
    %150 = vst.msk [vmem:[#allocation2 + $0x28] sm:$0xf] %vm138, 0
    %151 = vst.msk [vmem:[#allocation2 + $0x2c] sm:$0x1] %vm140, 0
    %152 = vst.msk [vmem:[#allocation2 + $0x30] sm:$0xf] %vm138, 0
    %153 = vst.msk [vmem:[#allocation2 + $0x34] sm:$0x1] %vm140, 0
    %154 = vst.msk [vmem:[#allocation2 + $0x38] sm:$0xf] %vm138, 0
    %155 = vst.msk [vmem:[#allocation2 + $0x3c] sm:$0x1] %vm140, 0
    %156 = vst.msk [vmem:[#allocation2 + $0x40] sm:$0xf] %vm138, 0
    %157 = vst.msk [vmem:[#allocation2 + $0x44] sm:$0x1] %vm140, 0
    %158 = vst.msk [vmem:[#allocation2 + $0x48] sm:$0xf] %vm138, 0
    %159 = vst.msk [vmem:[#allocation2 + $0x4c] sm:$0x1] %vm140, 0
    %160 = vst.msk [vmem:[#allocation2 + $0x50] sm:$0xf] %vm138, 0
    %161 = vst.msk [vmem:[#allocation2 + $0x54] sm:$0x1] %vm140, 0
    %162 = vst.msk [vmem:[#allocation2 + $0x58] sm:$0xf] %vm138, 0
    %163 = vst.msk [vmem:[#allocation2 + $0x5c] sm:$0x1] %vm140, 0
    %164 = vst.msk [vmem:[#allocation2 + $0x60] sm:$0xf] %vm138, 0
    %165 = vst.msk [vmem:[#allocation2 + $0x64] sm:$0x1] %vm140, 0
    %166 = vst.msk [vmem:[#allocation2 + $0x68] sm:$0xf] %vm138, 0
    %167 = vst.msk [vmem:[#allocation2 + $0x6c] sm:$0x1] %vm140, 0
    %168 = vst.msk [vmem:[#allocation2 + $0x70] sm:$0xf] %vm138, 0
    %169 = vst.msk [vmem:[#allocation2 + $0x74] sm:$0x1] %vm140, 0
    %170 = vst.msk [vmem:[#allocation2 + $0x78] sm:$0xf] %vm138, 0
    %171 = vst.msk [vmem:[#allocation2 + $0x7c] sm:$0x1] %vm140, 0
    %172 = vst.msk [vmem:[#allocation2 + $0x80] sm:$0xf] %vm138, 0
    %173 = vst.msk [vmem:[#allocation2 + $0x84] sm:$0x1] %vm140, 0
    %174 = vst.msk [vmem:[#allocation2 + $0x88] sm:$0xf] %vm138, 0
    %175 = vst.msk [vmem:[#allocation2 + $0x8c] sm:$0x1] %vm140, 0
    %176 = vst.msk [vmem:[#allocation2 + $0x90] sm:$0xf] %vm138, 0
    %177 = vst.msk [vmem:[#allocation2 + $0x94] sm:$0x1] %vm140, 0
    %178 = vst.msk [vmem:[#allocation2 + $0x98] sm:$0xf] %vm138, 0
    %179 = vst.msk [vmem:[#allocation2 + $0x9c] sm:$0x1] %vm140, 0
  $region25: #{downsample_forward.4} parent=0 // pred_fallthru
    _
  %v196 = vunpack.c.l.b16 %v118
  %v197 = vunpack.c.l.b16 %v119
  %v198 = vunpack.c.l.b16 %v120
  %v199 = vunpack.c.l.b16 %v121
  %v200 = vunpack.c.l.b16 %v122
  %v201 = vunpack.c.l.b16 %v123
  %v202 = vunpack.c.l.b16 %v124
  %v203 = vunpack.c.l.b16 %v125
  %v204 = vunpack.c.l.b16 %v126
  %v205 = vunpack.c.l.b16 %v127
  %v206 = vunpack.c.l.b16 %v128
  %v207 = vunpack.c.l.b16 %v129
  %v208 = vunpack.c.l.b16 %v130
  %v209 = vunpack.c.l.b16 %v131
  %v210 = vunpack.c.l.b16 %v132
  %v211 = vunpack.c.l.b16 %v133
  %v212 = vpack.c.b16 %v196, %v196
  %v213 = vpack.c.b16 %v197, %v197
  %v214 = vpack.c.b16 %v198, %v198
  %v215 = vpack.c.b16 %v199, %v199
  %v216 = vpack.c.b16 %v200, %v200
  %v217 = vpack.c.b16 %v201, %v201
  %v218 = vpack.c.b16 %v202, %v202
  %v219 = vpack.c.b16 %v203, %v203
  %v220 = vpack.c.b16 %v204, %v204
  %v221 = vpack.c.b16 %v205, %v205
  %v222 = vpack.c.b16 %v206, %v206
  %v223 = vpack.c.b16 %v207, %v207
  %v224 = vpack.c.b16 %v208, %v208
  %v225 = vpack.c.b16 %v209, %v209
  %v226 = vpack.c.b16 %v210, %v210
  %v227 = vpack.c.b16 %v211, %v211
  %v229 = vshrl.u32 %v212, 16
  %v231 = vrot.slane %v229, 7
  %v232 = vshll.u32 %v212, 16
  %v234 = vor.u32 %v231, %v232
  %v235 = vrot.slane %v231, 4
  %v237 = vshrl.u32 %v213, 16
  %v239 = vrot.slane %v237, 7
  %v240 = vshll.u32 %v213, 16
  %v242 = vor.u32 %v239, %v240
  %v243 = vrot.slane %v239, 4
  %v245 = vshrl.u32 %v214, 16
  %v247 = vrot.slane %v245, 7
  %v248 = vshll.u32 %v214, 16
  %v250 = vor.u32 %v247, %v248
  %v251 = vrot.slane %v247, 4
  %v253 = vshrl.u32 %v215, 16
  %v255 = vrot.slane %v253, 7
  %v256 = vshll.u32 %v215, 16
  %v258 = vor.u32 %v255, %v256
  %v259 = vrot.slane %v255, 4
  %v261 = vshrl.u32 %v216, 16
  %v263 = vrot.slane %v261, 7
  %v264 = vshll.u32 %v216, 16
  %v266 = vor.u32 %v263, %v264
  %v267 = vrot.slane %v263, 4
  %v269 = vshrl.u32 %v217, 16
  %v271 = vrot.slane %v269, 7
  %v272 = vshll.u32 %v217, 16
  %v274 = vor.u32 %v271, %v272
  %v275 = vrot.slane %v271, 4
  %v277 = vshrl.u32 %v218, 16
  %v279 = vrot.slane %v277, 7
  %v280 = vshll.u32 %v218, 16
  %v282 = vor.u32 %v279, %v280
  %v283 = vrot.slane %v279, 4
  %v285 = vshrl.u32 %v219, 16
  %v287 = vrot.slane %v285, 7
  %v288 = vshll.u32 %v219, 16
  %v290 = vor.u32 %v287, %v288
  %v291 = vrot.slane %v287, 4
  %v293 = vshrl.u32 %v220, 16
  %v295 = vrot.slane %v293, 7
  %v296 = vshll.u32 %v220, 16
  %v298 = vor.u32 %v295, %v296
  %v299 = vrot.slane %v295, 4
  %v301 = vshrl.u32 %v221, 16
  %v303 = vrot.slane %v301, 7
  %v304 = vshll.u32 %v221, 16
  %v306 = vor.u32 %v303, %v304
  %v307 = vrot.slane %v303, 4
  %v309 = vshrl.u32 %v222, 16
  %v311 = vrot.slane %v309, 7
  %v312 = vshll.u32 %v222, 16
  %v314 = vor.u32 %v311, %v312
  %v315 = vrot.slane %v311, 4
  %v317 = vshrl.u32 %v223, 16
  %v319 = vrot.slane %v317, 7
  %v320 = vshll.u32 %v223, 16
  %v322 = vor.u32 %v319, %v320
  %v323 = vrot.slane %v319, 4
  %v325 = vshrl.u32 %v224, 16
  %v327 = vrot.slane %v325, 7
  %v328 = vshll.u32 %v224, 16
  %v330 = vor.u32 %v327, %v328
  %v331 = vrot.slane %v327, 4
  %v333 = vshrl.u32 %v225, 16
  %v335 = vrot.slane %v333, 7
  %v336 = vshll.u32 %v225, 16
  %v338 = vor.u32 %v335, %v336
  %v339 = vrot.slane %v335, 4
  %v341 = vshrl.u32 %v226, 16
  %v343 = vrot.slane %v341, 7
  %v344 = vshll.u32 %v226, 16
  %v346 = vor.u32 %v343, %v344
  %v347 = vrot.slane %v343, 4
  %v349 = vshrl.u32 %v227, 16
  %v351 = vrot.slane %v349, 7
  %v352 = vshll.u32 %v227, 16
  %v354 = vor.u32 %v351, %v352
  %v355 = vrot.slane %v351, 4
  %s388 = scalar_lea.vmem [#allocation2], 8
  %vm389 = vcmask 519168
  %vm390 = vsmask.f32 7938
  %vm391 = vmand %vm389, %vm390
  %v392 = vld [vmem:[%s388] sm:$0xf]
  %v393 = vsel %vm391, %v234, %v392
  %394 = vst [vmem:[%s388] sm:$0xf] %v393
  %vm395 = vcmask 516096
  %vm396 = vsmask.f32 256
  %vm397 = vmand %vm395, %vm396
  %v398 = vld [vmem:[%s388 + $0x4] sm:$0x1]
  %v399 = vsel %vm397, %v235, %v398
  %400 = vst [vmem:[%s388 + $0x4] sm:$0x1] %v399
  %v401 = vld [vmem:[%s388 + $0x8] sm:$0xf]
  %v402 = vsel %vm391, %v242, %v401
  %403 = vst [vmem:[%s388 + $0x8] sm:$0xf] %v402
  %v404 = vld [vmem:[%s388 + $0xc] sm:$0x1]
  %v405 = vsel %vm397, %v243, %v404
  %406 = vst [vmem:[%s388 + $0xc] sm:$0x1] %v405
  %v407 = vld [vmem:[%s388 + $0x10] sm:$0xf]
  %v408 = vsel %vm391, %v250, %v407
  %409 = vst [vmem:[%s388 + $0x10] sm:$0xf] %v408
  %v410 = vld [vmem:[%s388 + $0x14] sm:$0x1]
  %v411 = vsel %vm397, %v251, %v410
  %412 = vst [vmem:[%s388 + $0x14] sm:$0x1] %v411
  %v413 = vld [vmem:[%s388 + $0x18] sm:$0xf]
  %v414 = vsel %vm391, %v258, %v413
  %415 = vst [vmem:[%s388 + $0x18] sm:$0xf] %v414
  %v416 = vld [vmem:[%s388 + $0x1c] sm:$0x1]
  %v417 = vsel %vm397, %v259, %v416
  %418 = vst [vmem:[%s388 + $0x1c] sm:$0x1] %v417
  %v419 = vld [vmem:[%s388 + $0x20] sm:$0xf]
  %v420 = vsel %vm391, %v266, %v419
  %421 = vst [vmem:[%s388 + $0x20] sm:$0xf] %v420
  %v422 = vld [vmem:[%s388 + $0x24] sm:$0x1]
  %v423 = vsel %vm397, %v267, %v422
  %424 = vst [vmem:[%s388 + $0x24] sm:$0x1] %v423
  %v425 = vld [vmem:[%s388 + $0x28] sm:$0xf]
  %v426 = vsel %vm391, %v274, %v425
  %427 = vst [vmem:[%s388 + $0x28] sm:$0xf] %v426
  %v428 = vld [vmem:[%s388 + $0x2c] sm:$0x1]
  %v429 = vsel %vm397, %v275, %v428
  %430 = vst [vmem:[%s388 + $0x2c] sm:$0x1] %v429
  %v431 = vld [vmem:[%s388 + $0x30] sm:$0xf]
  %v432 = vsel %vm391, %v282, %v431
  %433 = vst [vmem:[%s388 + $0x30] sm:$0xf] %v432
  %v434 = vld [vmem:[%s388 + $0x34] sm:$0x1]
  %v435 = vsel %vm397, %v283, %v434
  %436 = vst [vmem:[%s388 + $0x34] sm:$0x1] %v435
  %v437 = vld [vmem:[%s388 + $0x38] sm:$0xf]
  %v438 = vsel %vm391, %v290, %v437
  %439 = vst [vmem:[%s388 + $0x38] sm:$0xf] %v438
  %v440 = vld [vmem:[%s388 + $0x3c] sm:$0x1]
  %v441 = vsel %vm397, %v291, %v440
  %442 = vst [vmem:[%s388 + $0x3c] sm:$0x1] %v441
  %v443 = vld [vmem:[%s388 + $0x50] sm:$0xf]
  %v444 = vsel %vm391, %v298, %v443
  %445 = vst [vmem:[%s388 + $0x50] sm:$0xf] %v444
  %v446 = vld [vmem:[%s388 + $0x54] sm:$0x1]
  %v447 = vsel %vm397, %v299, %v446
  %448 = vst [vmem:[%s388 + $0x54] sm:$0x1] %v447
  %v449 = vld [vmem:[%s388 + $0x58] sm:$0xf]
  %v450 = vsel %vm391, %v306, %v449
  %451 = vst [vmem:[%s388 + $0x58] sm:$0xf] %v450
  %v452 = vld [vmem:[%s388 + $0x5c] sm:$0x1]
  %v453 = vsel %vm397, %v307, %v452
  %454 = vst [vmem:[%s388 + $0x5c] sm:$0x1] %v453
  %v455 = vld [vmem:[%s388 + $0x60] sm:$0xf]
  %v456 = vsel %vm391, %v314, %v455
  %457 = vst [vmem:[%s388 + $0x60] sm:$0xf] %v456
  %v458 = vld [vmem:[%s388 + $0x64] sm:$0x1]
  %v459 = vsel %vm397, %v315, %v458
  %460 = vst [vmem:[%s388 + $0x64] sm:$0x1] %v459
  %v461 = vld [vmem:[%s388 + $0x68] sm:$0xf]
  %v462 = vsel %vm391, %v322, %v461
  %463 = vst [vmem:[%s388 + $0x68] sm:$0xf] %v462
  %v464 = vld [vmem:[%s388 + $0x6c] sm:$0x1]
  %v465 = vsel %vm397, %v323, %v464
  %466 = vst [vmem:[%s388 + $0x6c] sm:$0x1] %v465
  %v467 = vld [vmem:[%s388 + $0x70] sm:$0xf]
  %v468 = vsel %vm391, %v330, %v467
  %469 = vst [vmem:[%s388 + $0x70] sm:$0xf] %v468
  %v470 = vld [vmem:[%s388 + $0x74] sm:$0x1]
  %v471 = vsel %vm397, %v331, %v470
  %472 = vst [vmem:[%s388 + $0x74] sm:$0x1] %v471
  %v473 = vld [vmem:[%s388 + $0x78] sm:$0xf]
  %v474 = vsel %vm391, %v338, %v473
  %475 = vst [vmem:[%s388 + $0x78] sm:$0xf] %v474
  %v476 = vld [vmem:[%s388 + $0x7c] sm:$0x1]
  %v477 = vsel %vm397, %v339, %v476
  %478 = vst [vmem:[%s388 + $0x7c] sm:$0x1] %v477
  %v479 = vld [vmem:[%s388 + $0x80] sm:$0xf]
  %v480 = vsel %vm391, %v346, %v479
  %481 = vst [vmem:[%s388 + $0x80] sm:$0xf] %v480
  %v482 = vld [vmem:[%s388 + $0x84] sm:$0x1]
  %v483 = vsel %vm397, %v347, %v482
  %484 = vst [vmem:[%s388 + $0x84] sm:$0x1] %v483
  %v485 = vld [vmem:[%s388 + $0x88] sm:$0xf]
  %v486 = vsel %vm391, %v354, %v485
  %487 = vst [vmem:[%s388 + $0x88] sm:$0xf] %v486
  %v488 = vld [vmem:[%s388 + $0x8c] sm:$0x1]
  %v489 = vsel %vm397, %v355, %v488
  %490 = vst [vmem:[%s388 + $0x8c] sm:$0x1] %v489
  %v491 = vld [vmem:[#allocation2] sm:$0xf]
  %v492 = vld [vmem:[#allocation2 + $0x8] sm:$0xf]
  %v493 = vld [vmem:[#allocation2 + $0x10] sm:$0xf]
  %v494 = vld [vmem:[#allocation2 + $0x18] sm:$0xf]
  %v495 = vld [vmem:[#allocation2 + $0x20] sm:$0xf]
  %v496 = vld [vmem:[#allocation2 + $0x28] sm:$0xf]
  %v497 = vld [vmem:[#allocation2 + $0x30] sm:$0xf]
  %v498 = vld [vmem:[#allocation2 + $0x38] sm:$0xf]
  %v499 = vld [vmem:[#allocation2 + $0x50] sm:$0xf]
  %v500 = vld [vmem:[#allocation2 + $0x58] sm:$0xf]
  %v501 = vld [vmem:[#allocation2 + $0x60] sm:$0xf]
  %v502 = vld [vmem:[#allocation2 + $0x68] sm:$0xf]
  %v503 = vld [vmem:[#allocation2 + $0x70] sm:$0xf]
  %v504 = vld [vmem:[#allocation2 + $0x78] sm:$0xf]
  %v505 = vld [vmem:[#allocation2 + $0x80] sm:$0xf]
  %v506 = vld [vmem:[#allocation2 + $0x88] sm:$0xf]
  %v507 = vld [vmem:[#allocation2 + $0x4] sm:$0x1]
  %v508 = vld [vmem:[#allocation2 + $0xc] sm:$0x1]
  %v509 = vld [vmem:[#allocation2 + $0x14] sm:$0x1]
  %v510 = vld [vmem:[#allocation2 + $0x1c] sm:$0x1]
  %v511 = vld [vmem:[#allocation2 + $0x24] sm:$0x1]
  %v512 = vld [vmem:[#allocation2 + $0x2c] sm:$0x1]
  %v513 = vld [vmem:[#allocation2 + $0x34] sm:$0x1]
  %v514 = vld [vmem:[#allocation2 + $0x3c] sm:$0x1]
  %v515 = vld [vmem:[#allocation2 + $0x54] sm:$0x1]
  %v516 = vld [vmem:[#allocation2 + $0x5c] sm:$0x1]
  %v517 = vld [vmem:[#allocation2 + $0x64] sm:$0x1]
  %v518 = vld [vmem:[#allocation2 + $0x6c] sm:$0x1]
  %v519 = vld [vmem:[#allocation2 + $0x74] sm:$0x1]
  %v520 = vld [vmem:[#allocation2 + $0x7c] sm:$0x1]
  %v521 = vld [vmem:[#allocation2 + $0x84] sm:$0x1]
  %v522 = vld [vmem:[#allocation2 + $0x8c] sm:$0x1]
  %vm523 = vsmask.f32 3328
  %vm524 = vsmask.f32 7440
  %vm525 = vmor %vm523, %vm524
  %v527 = vshrl.u32 %v491, 16
  %v529 = vrot.slane %v527, 4
  %v530 = vshll.u32 %v491, 16
  %v532 = vrot.slane %v530, 5
  %v533 = vor.u32 %v529, %v532
  %v534 = vrot.slane %v533, 4
  %v536 = vshll.u32 %v507, 16
  %v538 = vrot.slane %v536, 5
  %v539 = vsel %vm525, %v534, %v538
  %v541 = vshrl.u32 %v492, 16
  %v543 = vrot.slane %v541, 4
  %v544 = vshll.u32 %v492, 16
  %v546 = vrot.slane %v544, 5
  %v547 = vor.u32 %v543, %v546
  %v548 = vrot.slane %v547, 4
  %v550 = vshll.u32 %v508, 16
  %v552 = vrot.slane %v550, 5
  %v553 = vsel %vm525, %v548, %v552
  %v555 = vshrl.u32 %v493, 16
  %v557 = vrot.slane %v555, 4
  %v558 = vshll.u32 %v493, 16
  %v560 = vrot.slane %v558, 5
  %v561 = vor.u32 %v557, %v560
  %v562 = vrot.slane %v561, 4
  %v564 = vshll.u32 %v509, 16
  %v566 = vrot.slane %v564, 5
  %v567 = vsel %vm525, %v562, %v566
  %v569 = vshrl.u32 %v494, 16
  %v571 = vrot.slane %v569, 4
  %v572 = vshll.u32 %v494, 16
  %v574 = vrot.slane %v572, 5
  %v575 = vor.u32 %v571, %v574
  %v576 = vrot.slane %v575, 4
  %v578 = vshll.u32 %v510, 16
  %v580 = vrot.slane %v578, 5
  %v581 = vsel %vm525, %v576, %v580
  %v583 = vshrl.u32 %v495, 16
  %v585 = vrot.slane %v583, 4
  %v586 = vshll.u32 %v495, 16
  %v588 = vrot.slane %v586, 5
  %v589 = vor.u32 %v585, %v588
  %v590 = vrot.slane %v589, 4
  %v592 = vshll.u32 %v511, 16
  %v594 = vrot.slane %v592, 5
  %v595 = vsel %vm525, %v590, %v594
  %v597 = vshrl.u32 %v496, 16
  %v599 = vrot.slane %v597, 4
  %v600 = vshll.u32 %v496, 16
  %v602 = vrot.slane %v600, 5
  %v603 = vor.u32 %v599, %v602
  %v604 = vrot.slane %v603, 4
  %v606 = vshll.u32 %v512, 16
  %v608 = vrot.slane %v606, 5
  %v609 = vsel %vm525, %v604, %v608
  %v611 = vshrl.u32 %v497, 16
  %v613 = vrot.slane %v611, 4
  %v614 = vshll.u32 %v497, 16
  %v616 = vrot.slane %v614, 5
  %v617 = vor.u32 %v613, %v616
  %v618 = vrot.slane %v617, 4
  %v620 = vshll.u32 %v513, 16
  %v622 = vrot.slane %v620, 5
  %v623 = vsel %vm525, %v618, %v622
  %v625 = vshrl.u32 %v498, 16
  %v627 = vrot.slane %v625, 4
  %v628 = vshll.u32 %v498, 16
  %v630 = vrot.slane %v628, 5
  %v631 = vor.u32 %v627, %v630
  %v632 = vrot.slane %v631, 4
  %v634 = vshll.u32 %v514, 16
  %v636 = vrot.slane %v634, 5
  %v637 = vsel %vm525, %v632, %v636
  %v639 = vshrl.u32 %v499, 16
  %v641 = vrot.slane %v639, 4
  %v642 = vshll.u32 %v499, 16
  %v644 = vrot.slane %v642, 5
  %v645 = vor.u32 %v641, %v644
  %v646 = vrot.slane %v645, 4
  %v648 = vshll.u32 %v515, 16
  %v650 = vrot.slane %v648, 5
  %v651 = vsel %vm525, %v646, %v650
  %v653 = vshrl.u32 %v500, 16
  %v655 = vrot.slane %v653, 4
  %v656 = vshll.u32 %v500, 16
  %v658 = vrot.slane %v656, 5
  %v659 = vor.u32 %v655, %v658
  %v660 = vrot.slane %v659, 4
  %v662 = vshll.u32 %v516, 16
  %v664 = vrot.slane %v662, 5
  %v665 = vsel %vm525, %v660, %v664
  %v667 = vshrl.u32 %v501, 16
  %v669 = vrot.slane %v667, 4
  %v670 = vshll.u32 %v501, 16
  %v672 = vrot.slane %v670, 5
  %v673 = vor.u32 %v669, %v672
  %v674 = vrot.slane %v673, 4
  %v676 = vshll.u32 %v517, 16
  %v678 = vrot.slane %v676, 5
  %v679 = vsel %vm525, %v674, %v678
  %v681 = vshrl.u32 %v502, 16
  %v683 = vrot.slane %v681, 4
  %v684 = vshll.u32 %v502, 16
  %v686 = vrot.slane %v684, 5
  %v687 = vor.u32 %v683, %v686
  %v688 = vrot.slane %v687, 4
  %v690 = vshll.u32 %v518, 16
  %v692 = vrot.slane %v690, 5
  %v693 = vsel %vm525, %v688, %v692
  %v695 = vshrl.u32 %v503, 16
  %v697 = vrot.slane %v695, 4
  %v698 = vshll.u32 %v503, 16
  %v700 = vrot.slane %v698, 5
  %v701 = vor.u32 %v697, %v700
  %v702 = vrot.slane %v701, 4
  %v704 = vshll.u32 %v519, 16
  %v706 = vrot.slane %v704, 5
  %v707 = vsel %vm525, %v702, %v706
  %v709 = vshrl.u32 %v504, 16
  %v711 = vrot.slane %v709, 4
  %v712 = vshll.u32 %v504, 16
  %v714 = vrot.slane %v712, 5
  %v715 = vor.u32 %v711, %v714
  %v716 = vrot.slane %v715, 4
  %v718 = vshll.u32 %v520, 16
  %v720 = vrot.slane %v718, 5
  %v721 = vsel %vm525, %v716, %v720
  %v723 = vshrl.u32 %v505, 16
  %v725 = vrot.slane %v723, 4
  %v726 = vshll.u32 %v505, 16
  %v728 = vrot.slane %v726, 5
  %v729 = vor.u32 %v725, %v728
  %v730 = vrot.slane %v729, 4
  %v732 = vshll.u32 %v521, 16
  %v734 = vrot.slane %v732, 5
  %v735 = vsel %vm525, %v730, %v734
  %v737 = vshrl.u32 %v506, 16
  %v739 = vrot.slane %v737, 4
  %v740 = vshll.u32 %v506, 16
  %v742 = vrot.slane %v740, 5
  %v743 = vor.u32 %v739, %v742
  %v744 = vrot.slane %v743, 4
  %v746 = vshll.u32 %v522, 16
  %v748 = vrot.slane %v746, 5
  %v749 = vsel %vm525, %v744, %v748
  %v750 = vld [vmem:[#allocation2] sm:$0xe]
  %v751 = vld [vmem:[#allocation2 + $0x8] sm:$0xe]
  %v752 = vld [vmem:[#allocation2 + $0x10] sm:$0xe]
  %v753 = vld [vmem:[#allocation2 + $0x18] sm:$0xe]
  %v754 = vld [vmem:[#allocation2 + $0x20] sm:$0xe]
  %v755 = vld [vmem:[#allocation2 + $0x28] sm:$0xe]
  %v756 = vld [vmem:[#allocation2 + $0x30] sm:$0xe]
  %v757 = vld [vmem:[#allocation2 + $0x38] sm:$0xe]
  %v758 = vld [vmem:[#allocation2 + $0x50] sm:$0xe]
  %v759 = vld [vmem:[#allocation2 + $0x58] sm:$0xe]
  %v760 = vld [vmem:[#allocation2 + $0x60] sm:$0xe]
  %v761 = vld [vmem:[#allocation2 + $0x68] sm:$0xe]
  %v762 = vld [vmem:[#allocation2 + $0x70] sm:$0xe]
  %v763 = vld [vmem:[#allocation2 + $0x78] sm:$0xe]
  %v764 = vld [vmem:[#allocation2 + $0x80] sm:$0xe]
  %v765 = vld [vmem:[#allocation2 + $0x88] sm:$0xe]
  %vm798 = vcmask 1042432
  %vm799 = vcmask 1046532
  %vm800 = vmor %vm798, %vm799
  %v801 = vrot.slane %v750, 5
  %v802 = vrot.slane %v801, 4
  %v803 = vrot.slane %v507, 5
  %v804 = vsel %vm800, %v802, %v803
  %v805 = vrot.slane %v751, 5
  %v806 = vrot.slane %v805, 4
  %v807 = vrot.slane %v508, 5
  %v808 = vsel %vm800, %v806, %v807
  %v809 = vrot.slane %v752, 5
  %v810 = vrot.slane %v809, 4
  %v811 = vrot.slane %v509, 5
  %v812 = vsel %vm800, %v810, %v811
  %v813 = vrot.slane %v753, 5
  %v814 = vrot.slane %v813, 4
  %v815 = vrot.slane %v510, 5
  %v816 = vsel %vm800, %v814, %v815
  %v817 = vrot.slane %v754, 5
  %v818 = vrot.slane %v817, 4
  %v819 = vrot.slane %v511, 5
  %v820 = vsel %vm800, %v818, %v819
  %v821 = vrot.slane %v755, 5
  %v822 = vrot.slane %v821, 4
  %v823 = vrot.slane %v512, 5
  %v824 = vsel %vm800, %v822, %v823
  %v825 = vrot.slane %v756, 5
  %v826 = vrot.slane %v825, 4
  %v827 = vrot.slane %v513, 5
  %v828 = vsel %vm800, %v826, %v827
  %v829 = vrot.slane %v757, 5
  %v830 = vrot.slane %v829, 4
  %v831 = vrot.slane %v514, 5
  %v832 = vsel %vm800, %v830, %v831
  %v833 = vrot.slane %v758, 5
  %v834 = vrot.slane %v833, 4
  %v835 = vrot.slane %v515, 5
  %v836 = vsel %vm800, %v834, %v835
  %v837 = vrot.slane %v759, 5
  %v838 = vrot.slane %v837, 4
  %v839 = vrot.slane %v516, 5
  %v840 = vsel %vm800, %v838, %v839
  %v841 = vrot.slane %v760, 5
  %v842 = vrot.slane %v841, 4
  %v843 = vrot.slane %v517, 5
  %v844 = vsel %vm800, %v842, %v843
  %v845 = vrot.slane %v761, 5
  %v846 = vrot.slane %v845, 4
  %v847 = vrot.slane %v518, 5
  %v848 = vsel %vm800, %v846, %v847
  %v849 = vrot.slane %v762, 5
  %v850 = vrot.slane %v849, 4
  %v851 = vrot.slane %v519, 5
  %v852 = vsel %vm800, %v850, %v851
  %v853 = vrot.slane %v763, 5
  %v854 = vrot.slane %v853, 4
  %v855 = vrot.slane %v520, 5
  %v856 = vsel %vm800, %v854, %v855
  %v857 = vrot.slane %v764, 5
  %v858 = vrot.slane %v857, 4
  %v859 = vrot.slane %v521, 5
  %v860 = vsel %vm800, %v858, %v859
  %v861 = vrot.slane %v765, 5
  %v862 = vrot.slane %v861, 4
  %v863 = vrot.slane %v522, 5
  %v864 = vsel %vm800, %v862, %v863
  %v865 = vld [vmem:[%s388] sm:$0xf]
  %v866 = vld [vmem:[%s388 + $0x8] sm:$0xf]
  %v867 = vld [vmem:[%s388 + $0x10] sm:$0xf]
  %v868 = vld [vmem:[%s388 + $0x18] sm:$0xf]
  %v869 = vld [vmem:[%s388 + $0x20] sm:$0xf]
  %v870 = vld [vmem:[%s388 + $0x28] sm:$0xf]
  %v871 = vld [vmem:[%s388 + $0x30] sm:$0xf]
  %v872 = vld [vmem:[%s388 + $0x38] sm:$0xf]
  %v873 = vld [vmem:[%s388 + $0x50] sm:$0xf]
  %v874 = vld [vmem:[%s388 + $0x58] sm:$0xf]
  %v875 = vld [vmem:[%s388 + $0x60] sm:$0xf]
  %v876 = vld [vmem:[%s388 + $0x68] sm:$0xf]
  %v877 = vld [vmem:[%s388 + $0x70] sm:$0xf]
  %v878 = vld [vmem:[%s388 + $0x78] sm:$0xf]
  %v879 = vld [vmem:[%s388 + $0x80] sm:$0xf]
  %v880 = vld [vmem:[%s388 + $0x88] sm:$0xf]
  %v881 = vld [vmem:[%s388 + $0x4] sm:$0x1]
  %v882 = vld [vmem:[%s388 + $0xc] sm:$0x1]
  %v883 = vld [vmem:[%s388 + $0x14] sm:$0x1]
  %v884 = vld [vmem:[%s388 + $0x1c] sm:$0x1]
  %v885 = vld [vmem:[%s388 + $0x24] sm:$0x1]
  %v886 = vld [vmem:[%s388 + $0x2c] sm:$0x1]
  %v887 = vld [vmem:[%s388 + $0x34] sm:$0x1]
  %v888 = vld [vmem:[%s388 + $0x3c] sm:$0x1]
  %v889 = vld [vmem:[%s388 + $0x54] sm:$0x1]
  %v890 = vld [vmem:[%s388 + $0x5c] sm:$0x1]
  %v891 = vld [vmem:[%s388 + $0x64] sm:$0x1]
  %v892 = vld [vmem:[%s388 + $0x6c] sm:$0x1]
  %v893 = vld [vmem:[%s388 + $0x74] sm:$0x1]
  %v894 = vld [vmem:[%s388 + $0x7c] sm:$0x1]
  %v895 = vld [vmem:[%s388 + $0x84] sm:$0x1]
  %v896 = vld [vmem:[%s388 + $0x8c] sm:$0x1]
  %v898 = vshrl.u32 %v865, 16
  %v900 = vrot.slane %v898, 4
  %v901 = vshll.u32 %v865, 16
  %v903 = vrot.slane %v901, 5
  %v904 = vor.u32 %v900, %v903
  %v905 = vrot.slane %v904, 4
  %v907 = vshll.u32 %v881, 16
  %v909 = vrot.slane %v907, 5
  %v910 = vsel %vm525, %v905, %v909
  %v912 = vshrl.u32 %v866, 16
  %v914 = vrot.slane %v912, 4
  %v915 = vshll.u32 %v866, 16
  %v917 = vrot.slane %v915, 5
  %v918 = vor.u32 %v914, %v917
  %v919 = vrot.slane %v918, 4
  %v921 = vshll.u32 %v882, 16
  %v923 = vrot.slane %v921, 5
  %v924 = vsel %vm525, %v919, %v923
  %v926 = vshrl.u32 %v867, 16
  %v928 = vrot.slane %v926, 4
  %v929 = vshll.u32 %v867, 16
  %v931 = vrot.slane %v929, 5
  %v932 = vor.u32 %v928, %v931
  %v933 = vrot.slane %v932, 4
  %v935 = vshll.u32 %v883, 16
  %v937 = vrot.slane %v935, 5
  %v938 = vsel %vm525, %v933, %v937
  %v940 = vshrl.u32 %v868, 16
  %v942 = vrot.slane %v940, 4
  %v943 = vshll.u32 %v868, 16
  %v945 = vrot.slane %v943, 5
  %v946 = vor.u32 %v942, %v945
  %v947 = vrot.slane %v946, 4
  %v949 = vshll.u32 %v884, 16
  %v951 = vrot.slane %v949, 5
  %v952 = vsel %vm525, %v947, %v951
  %v954 = vshrl.u32 %v869, 16
  %v956 = vrot.slane %v954, 4
  %v957 = vshll.u32 %v869, 16
  %v959 = vrot.slane %v957, 5
  %v960 = vor.u32 %v956, %v959
  %v961 = vrot.slane %v960, 4
  %v963 = vshll.u32 %v885, 16
  %v965 = vrot.slane %v963, 5
  %v966 = vsel %vm525, %v961, %v965
  %v968 = vshrl.u32 %v870, 16
  %v970 = vrot.slane %v968, 4
  %v971 = vshll.u32 %v870, 16
  %v973 = vrot.slane %v971, 5
  %v974 = vor.u32 %v970, %v973
  %v975 = vrot.slane %v974, 4
  %v977 = vshll.u32 %v886, 16
  %v979 = vrot.slane %v977, 5
  %v980 = vsel %vm525, %v975, %v979
  %v982 = vshrl.u32 %v871, 16
  %v984 = vrot.slane %v982, 4
  %v985 = vshll.u32 %v871, 16
  %v987 = vrot.slane %v985, 5
  %v988 = vor.u32 %v984, %v987
  %v989 = vrot.slane %v988, 4
  %v991 = vshll.u32 %v887, 16
  %v993 = vrot.slane %v991, 5
  %v994 = vsel %vm525, %v989, %v993
  %v996 = vshrl.u32 %v872, 16
  %v998 = vrot.slane %v996, 4
  %v999 = vshll.u32 %v872, 16
  %v1001 = vrot.slane %v999, 5
  %v1002 = vor.u32 %v998, %v1001
  %v1003 = vrot.slane %v1002, 4
  %v1005 = vshll.u32 %v888, 16
  %v1007 = vrot.slane %v1005, 5
  %v1008 = vsel %vm525, %v1003, %v1007
  %v1010 = vshrl.u32 %v873, 16
  %v1012 = vrot.slane %v1010, 4
  %v1013 = vshll.u32 %v873, 16
  %v1015 = vrot.slane %v1013, 5
  %v1016 = vor.u32 %v1012, %v1015
  %v1017 = vrot.slane %v1016, 4
  %v1019 = vshll.u32 %v889, 16
  %v1021 = vrot.slane %v1019, 5
  %v1022 = vsel %vm525, %v1017, %v1021
  %v1024 = vshrl.u32 %v874, 16
  %v1026 = vrot.slane %v1024, 4
  %v1027 = vshll.u32 %v874, 16
  %v1029 = vrot.slane %v1027, 5
  %v1030 = vor.u32 %v1026, %v1029
  %v1031 = vrot.slane %v1030, 4
  %v1033 = vshll.u32 %v890, 16
  %v1035 = vrot.slane %v1033, 5
  %v1036 = vsel %vm525, %v1031, %v1035
  %v1038 = vshrl.u32 %v875, 16
  %v1040 = vrot.slane %v1038, 4
  %v1041 = vshll.u32 %v875, 16
  %v1043 = vrot.slane %v1041, 5
  %v1044 = vor.u32 %v1040, %v1043
  %v1045 = vrot.slane %v1044, 4
  %v1047 = vshll.u32 %v891, 16
  %v1049 = vrot.slane %v1047, 5
  %v1050 = vsel %vm525, %v1045, %v1049
  %v1052 = vshrl.u32 %v876, 16
  %v1054 = vrot.slane %v1052, 4
  %v1055 = vshll.u32 %v876, 16
  %v1057 = vrot.slane %v1055, 5
  %v1058 = vor.u32 %v1054, %v1057
  %v1059 = vrot.slane %v1058, 4
  %v1061 = vshll.u32 %v892, 16
  %v1063 = vrot.slane %v1061, 5
  %v1064 = vsel %vm525, %v1059, %v1063
  %v1066 = vshrl.u32 %v877, 16
  %v1068 = vrot.slane %v1066, 4
  %v1069 = vshll.u32 %v877, 16
  %v1071 = vrot.slane %v1069, 5
  %v1072 = vor.u32 %v1068, %v1071
  %v1073 = vrot.slane %v1072, 4
  %v1075 = vshll.u32 %v893, 16
  %v1077 = vrot.slane %v1075, 5
  %v1078 = vsel %vm525, %v1073, %v1077
  %v1080 = vshrl.u32 %v878, 16
  %v1082 = vrot.slane %v1080, 4
  %v1083 = vshll.u32 %v878, 16
  %v1085 = vrot.slane %v1083, 5
  %v1086 = vor.u32 %v1082, %v1085
  %v1087 = vrot.slane %v1086, 4
  %v1089 = vshll.u32 %v894, 16
  %v1091 = vrot.slane %v1089, 5
  %v1092 = vsel %vm525, %v1087, %v1091
  %v1094 = vshrl.u32 %v879, 16
  %v1096 = vrot.slane %v1094, 4
  %v1097 = vshll.u32 %v879, 16
  %v1099 = vrot.slane %v1097, 5
  %v1100 = vor.u32 %v1096, %v1099
  %v1101 = vrot.slane %v1100, 4
  %v1103 = vshll.u32 %v895, 16
  %v1105 = vrot.slane %v1103, 5
  %v1106 = vsel %vm525, %v1101, %v1105
  %v1108 = vshrl.u32 %v880, 16
  %v1110 = vrot.slane %v1108, 4
  %v1111 = vshll.u32 %v880, 16
  %v1113 = vrot.slane %v1111, 5
  %v1114 = vor.u32 %v1110, %v1113
  %v1115 = vrot.slane %v1114, 4
  %v1117 = vshll.u32 %v896, 16
  %v1119 = vrot.slane %v1117, 5
  %v1120 = vsel %vm525, %v1115, %v1119
  %v1121 = vld [vmem:[%s388] sm:$0xe]
  %v1122 = vld [vmem:[%s388 + $0x8] sm:$0xe]
  %v1123 = vld [vmem:[%s388 + $0x10] sm:$0xe]
  %v1124 = vld [vmem:[%s388 + $0x18] sm:$0xe]
  %v1125 = vld [vmem:[%s388 + $0x20] sm:$0xe]
  %v1126 = vld [vmem:[%s388 + $0x28] sm:$0xe]
  %v1127 = vld [vmem:[%s388 + $0x30] sm:$0xe]
  %v1128 = vld [vmem:[%s388 + $0x38] sm:$0xe]
  %v1129 = vld [vmem:[%s388 + $0x50] sm:$0xe]
  %v1130 = vld [vmem:[%s388 + $0x58] sm:$0xe]
  %v1131 = vld [vmem:[%s388 + $0x60] sm:$0xe]
  %v1132 = vld [vmem:[%s388 + $0x68] sm:$0xe]
  %v1133 = vld [vmem:[%s388 + $0x70] sm:$0xe]
  %v1134 = vld [vmem:[%s388 + $0x78] sm:$0xe]
  %v1135 = vld [vmem:[%s388 + $0x80] sm:$0xe]
  %v1136 = vld [vmem:[%s388 + $0x88] sm:$0xe]
  %v1169 = vrot.slane %v1121, 5
  %v1170 = vrot.slane %v1169, 4
  %v1171 = vrot.slane %v881, 5
  %v1172 = vsel %vm800, %v1170, %v1171
  %v1173 = vrot.slane %v1122, 5
  %v1174 = vrot.slane %v1173, 4
  %v1175 = vrot.slane %v882, 5
  %v1176 = vsel %vm800, %v1174, %v1175
  %v1177 = vrot.slane %v1123, 5
  %v1178 = vrot.slane %v1177, 4
  %v1179 = vrot.slane %v883, 5
  %v1180 = vsel %vm800, %v1178, %v1179
  %v1181 = vrot.slane %v1124, 5
  %v1182 = vrot.slane %v1181, 4
  %v1183 = vrot.slane %v884, 5
  %v1184 = vsel %vm800, %v1182, %v1183
  %v1185 = vrot.slane %v1125, 5
  %v1186 = vrot.slane %v1185, 4
  %v1187 = vrot.slane %v885, 5
  %v1188 = vsel %vm800, %v1186, %v1187
  %v1189 = vrot.slane %v1126, 5
  %v1190 = vrot.slane %v1189, 4
  %v1191 = vrot.slane %v886, 5
  %v1192 = vsel %vm800, %v1190, %v1191
  %v1193 = vrot.slane %v1127, 5
  %v1194 = vrot.slane %v1193, 4
  %v1195 = vrot.slane %v887, 5
  %v1196 = vsel %vm800, %v1194, %v1195
  %v1197 = vrot.slane %v1128, 5
  %v1198 = vrot.slane %v1197, 4
  %v1199 = vrot.slane %v888, 5
  %v1200 = vsel %vm800, %v1198, %v1199
  %v1201 = vrot.slane %v1129, 5
  %v1202 = vrot.slane %v1201, 4
  %v1203 = vrot.slane %v889, 5
  %v1204 = vsel %vm800, %v1202, %v1203
  %v1205 = vrot.slane %v1130, 5
  %v1206 = vrot.slane %v1205, 4
  %v1207 = vrot.slane %v890, 5
  %v1208 = vsel %vm800, %v1206, %v1207
  %v1209 = vrot.slane %v1131, 5
  %v1210 = vrot.slane %v1209, 4
  %v1211 = vrot.slane %v891, 5
  %v1212 = vsel %vm800, %v1210, %v1211
  %v1213 = vrot.slane %v1132, 5
  %v1214 = vrot.slane %v1213, 4
  %v1215 = vrot.slane %v892, 5
  %v1216 = vsel %vm800, %v1214, %v1215
  %v1217 = vrot.slane %v1133, 5
  %v1218 = vrot.slane %v1217, 4
  %v1219 = vrot.slane %v893, 5
  %v1220 = vsel %vm800, %v1218, %v1219
  %v1221 = vrot.slane %v1134, 5
  %v1222 = vrot.slane %v1221, 4
  %v1223 = vrot.slane %v894, 5
  %v1224 = vsel %vm800, %v1222, %v1223
  %v1225 = vrot.slane %v1135, 5
  %v1226 = vrot.slane %v1225, 4
  %v1227 = vrot.slane %v895, 5
  %v1228 = vsel %vm800, %v1226, %v1227
  %v1229 = vrot.slane %v1136, 5
  %v1230 = vrot.slane %v1229, 4
  %v1231 = vrot.slane %v896, 5
  %v1232 = vsel %vm800, %v1230, %v1231
  %s1233 = scalar_lea.vmem [#allocation2], 16
  %v1234 = vld [vmem:[%s1233] sm:$0xf]
  %v1235 = vld [vmem:[%s1233 + $0x8] sm:$0xf]
  %v1236 = vld [vmem:[%s1233 + $0x10] sm:$0xf]
  %v1237 = vld [vmem:[%s1233 + $0x18] sm:$0xf]
  %v1238 = vld [vmem:[%s1233 + $0x20] sm:$0xf]
  %v1239 = vld [vmem:[%s1233 + $0x28] sm:$0xf]
  %v1240 = vld [vmem:[%s1233 + $0x30] sm:$0xf]
  %v1241 = vld [vmem:[%s1233 + $0x38] sm:$0xf]
  %v1242 = vld [vmem:[%s1233 + $0x50] sm:$0xf]
  %v1243 = vld [vmem:[%s1233 + $0x58] sm:$0xf]
  %v1244 = vld [vmem:[%s1233 + $0x60] sm:$0xf]
  %v1245 = vld [vmem:[%s1233 + $0x68] sm:$0xf]
  %v1246 = vld [vmem:[%s1233 + $0x70] sm:$0xf]
  %v1247 = vld [vmem:[%s1233 + $0x78] sm:$0xf]
  %v1248 = vld [vmem:[%s1233 + $0x80] sm:$0xf]
  %v1249 = vld [vmem:[%s1233 + $0x88] sm:$0xf]
  %v1250 = vld [vmem:[%s1233 + $0x4] sm:$0x1]
  %v1251 = vld [vmem:[%s1233 + $0xc] sm:$0x1]
  %v1252 = vld [vmem:[%s1233 + $0x14] sm:$0x1]
  %v1253 = vld [vmem:[%s1233 + $0x1c] sm:$0x1]
  %v1254 = vld [vmem:[%s1233 + $0x24] sm:$0x1]
  %v1255 = vld [vmem:[%s1233 + $0x2c] sm:$0x1]
  %v1256 = vld [vmem:[%s1233 + $0x34] sm:$0x1]
  %v1257 = vld [vmem:[%s1233 + $0x3c] sm:$0x1]
  %v1258 = vld [vmem:[%s1233 + $0x54] sm:$0x1]
  %v1259 = vld [vmem:[%s1233 + $0x5c] sm:$0x1]
  %v1260 = vld [vmem:[%s1233 + $0x64] sm:$0x1]
  %v1261 = vld [vmem:[%s1233 + $0x6c] sm:$0x1]
  %v1262 = vld [vmem:[%s1233 + $0x74] sm:$0x1]
  %v1263 = vld [vmem:[%s1233 + $0x7c] sm:$0x1]
  %v1264 = vld [vmem:[%s1233 + $0x84] sm:$0x1]
  %v1265 = vld [vmem:[%s1233 + $0x8c] sm:$0x1]
  %v1267 = vshrl.u32 %v1234, 16
  %v1269 = vrot.slane %v1267, 4
  %v1270 = vshll.u32 %v1234, 16
  %v1272 = vrot.slane %v1270, 5
  %v1273 = vor.u32 %v1269, %v1272
  %v1274 = vrot.slane %v1273, 4
  %v1276 = vshll.u32 %v1250, 16
  %v1278 = vrot.slane %v1276, 5
  %v1279 = vsel %vm525, %v1274, %v1278
  %v1281 = vshrl.u32 %v1235, 16
  %v1283 = vrot.slane %v1281, 4
  %v1284 = vshll.u32 %v1235, 16
  %v1286 = vrot.slane %v1284, 5
  %v1287 = vor.u32 %v1283, %v1286
  %v1288 = vrot.slane %v1287, 4
  %v1290 = vshll.u32 %v1251, 16
  %v1292 = vrot.slane %v1290, 5
  %v1293 = vsel %vm525, %v1288, %v1292
  %v1295 = vshrl.u32 %v1236, 16
  %v1297 = vrot.slane %v1295, 4
  %v1298 = vshll.u32 %v1236, 16
  %v1300 = vrot.slane %v1298, 5
  %v1301 = vor.u32 %v1297, %v1300
  %v1302 = vrot.slane %v1301, 4
  %v1304 = vshll.u32 %v1252, 16
  %v1306 = vrot.slane %v1304, 5
  %v1307 = vsel %vm525, %v1302, %v1306
  %v1309 = vshrl.u32 %v1237, 16
  %v1311 = vrot.slane %v1309, 4
  %v1312 = vshll.u32 %v1237, 16
  %v1314 = vrot.slane %v1312, 5
  %v1315 = vor.u32 %v1311, %v1314
  %v1316 = vrot.slane %v1315, 4
  %v1318 = vshll.u32 %v1253, 16
  %v1320 = vrot.slane %v1318, 5
  %v1321 = vsel %vm525, %v1316, %v1320
  %v1323 = vshrl.u32 %v1238, 16
  %v1325 = vrot.slane %v1323, 4
  %v1326 = vshll.u32 %v1238, 16
  %v1328 = vrot.slane %v1326, 5
  %v1329 = vor.u32 %v1325, %v1328
  %v1330 = vrot.slane %v1329, 4
  %v1332 = vshll.u32 %v1254, 16
  %v1334 = vrot.slane %v1332, 5
  %v1335 = vsel %vm525, %v1330, %v1334
  %v1337 = vshrl.u32 %v1239, 16
  %v1339 = vrot.slane %v1337, 4
  %v1340 = vshll.u32 %v1239, 16
  %v1342 = vrot.slane %v1340, 5
  %v1343 = vor.u32 %v1339, %v1342
  %v1344 = vrot.slane %v1343, 4
  %v1346 = vshll.u32 %v1255, 16
  %v1348 = vrot.slane %v1346, 5
  %v1349 = vsel %vm525, %v1344, %v1348
  %v1351 = vshrl.u32 %v1240, 16
  %v1353 = vrot.slane %v1351, 4
  %v1354 = vshll.u32 %v1240, 16
  %v1356 = vrot.slane %v1354, 5
  %v1357 = vor.u32 %v1353, %v1356
  %v1358 = vrot.slane %v1357, 4
  %v1360 = vshll.u32 %v1256, 16
  %v1362 = vrot.slane %v1360, 5
  %v1363 = vsel %vm525, %v1358, %v1362
  %v1365 = vshrl.u32 %v1241, 16
  %v1367 = vrot.slane %v1365, 4
  %v1368 = vshll.u32 %v1241, 16
  %v1370 = vrot.slane %v1368, 5
  %v1371 = vor.u32 %v1367, %v1370
  %v1372 = vrot.slane %v1371, 4
  %v1374 = vshll.u32 %v1257, 16
  %v1376 = vrot.slane %v1374, 5
  %v1377 = vsel %vm525, %v1372, %v1376
  %v1379 = vshrl.u32 %v1242, 16
  %v1381 = vrot.slane %v1379, 4
  %v1382 = vshll.u32 %v1242, 16
  %v1384 = vrot.slane %v1382, 5
  %v1385 = vor.u32 %v1381, %v1384
  %v1386 = vrot.slane %v1385, 4
  %v1388 = vshll.u32 %v1258, 16
  %v1390 = vrot.slane %v1388, 5
  %v1391 = vsel %vm525, %v1386, %v1390
  %v1393 = vshrl.u32 %v1243, 16
  %v1395 = vrot.slane %v1393, 4
  %v1396 = vshll.u32 %v1243, 16
  %v1398 = vrot.slane %v1396, 5
  %v1399 = vor.u32 %v1395, %v1398
  %v1400 = vrot.slane %v1399, 4
  %v1402 = vshll.u32 %v1259, 16
  %v1404 = vrot.slane %v1402, 5
  %v1405 = vsel %vm525, %v1400, %v1404
  %v1407 = vshrl.u32 %v1244, 16
  %v1409 = vrot.slane %v1407, 4
  %v1410 = vshll.u32 %v1244, 16
  %v1412 = vrot.slane %v1410, 5
  %v1413 = vor.u32 %v1409, %v1412
  %v1414 = vrot.slane %v1413, 4
  %v1416 = vshll.u32 %v1260, 16
  %v1418 = vrot.slane %v1416, 5
  %v1419 = vsel %vm525, %v1414, %v1418
  %v1421 = vshrl.u32 %v1245, 16
  %v1423 = vrot.slane %v1421, 4
  %v1424 = vshll.u32 %v1245, 16
  %v1426 = vrot.slane %v1424, 5
  %v1427 = vor.u32 %v1423, %v1426
  %v1428 = vrot.slane %v1427, 4
  %v1430 = vshll.u32 %v1261, 16
  %v1432 = vrot.slane %v1430, 5
  %v1433 = vsel %vm525, %v1428, %v1432
  %v1435 = vshrl.u32 %v1246, 16
  %v1437 = vrot.slane %v1435, 4
  %v1438 = vshll.u32 %v1246, 16
  %v1440 = vrot.slane %v1438, 5
  %v1441 = vor.u32 %v1437, %v1440
  %v1442 = vrot.slane %v1441, 4
  %v1444 = vshll.u32 %v1262, 16
  %v1446 = vrot.slane %v1444, 5
  %v1447 = vsel %vm525, %v1442, %v1446
  %v1449 = vshrl.u32 %v1247, 16
  %v1451 = vrot.slane %v1449, 4
  %v1452 = vshll.u32 %v1247, 16
  %v1454 = vrot.slane %v1452, 5
  %v1455 = vor.u32 %v1451, %v1454
  %v1456 = vrot.slane %v1455, 4
  %v1458 = vshll.u32 %v1263, 16
  %v1460 = vrot.slane %v1458, 5
  %v1461 = vsel %vm525, %v1456, %v1460
  %v1463 = vshrl.u32 %v1248, 16
  %v1465 = vrot.slane %v1463, 4
  %v1466 = vshll.u32 %v1248, 16
  %v1468 = vrot.slane %v1466, 5
  %v1469 = vor.u32 %v1465, %v1468
  %v1470 = vrot.slane %v1469, 4
  %v1472 = vshll.u32 %v1264, 16
  %v1474 = vrot.slane %v1472, 5
  %v1475 = vsel %vm525, %v1470, %v1474
  %v1477 = vshrl.u32 %v1249, 16
  %v1479 = vrot.slane %v1477, 4
  %v1480 = vshll.u32 %v1249, 16
  %v1482 = vrot.slane %v1480, 5
  %v1483 = vor.u32 %v1479, %v1482
  %v1484 = vrot.slane %v1483, 4
  %v1486 = vshll.u32 %v1265, 16
  %v1488 = vrot.slane %v1486, 5
  %v1489 = vsel %vm525, %v1484, %v1488
  %v1490 = vld [vmem:[%s1233] sm:$0xe]
  %v1491 = vld [vmem:[%s1233 + $0x8] sm:$0xe]
  %v1492 = vld [vmem:[%s1233 + $0x10] sm:$0xe]
  %v1493 = vld [vmem:[%s1233 + $0x18] sm:$0xe]
  %v1494 = vld [vmem:[%s1233 + $0x20] sm:$0xe]
  %v1495 = vld [vmem:[%s1233 + $0x28] sm:$0xe]
  %v1496 = vld [vmem:[%s1233 + $0x30] sm:$0xe]
  %v1497 = vld [vmem:[%s1233 + $0x38] sm:$0xe]
  %v1498 = vld [vmem:[%s1233 + $0x50] sm:$0xe]
  %v1499 = vld [vmem:[%s1233 + $0x58] sm:$0xe]
  %v1500 = vld [vmem:[%s1233 + $0x60] sm:$0xe]
  %v1501 = vld [vmem:[%s1233 + $0x68] sm:$0xe]
  %v1502 = vld [vmem:[%s1233 + $0x70] sm:$0xe]
  %v1503 = vld [vmem:[%s1233 + $0x78] sm:$0xe]
  %v1504 = vld [vmem:[%s1233 + $0x80] sm:$0xe]
  %v1505 = vld [vmem:[%s1233 + $0x88] sm:$0xe]
  %v1538 = vrot.slane %v1490, 5
  %v1539 = vrot.slane %v1538, 4
  %v1540 = vrot.slane %v1250, 5
  %v1541 = vsel %vm800, %v1539, %v1540
  %v1542 = vrot.slane %v1491, 5
  %v1543 = vrot.slane %v1542, 4
  %v1544 = vrot.slane %v1251, 5
  %v1545 = vsel %vm800, %v1543, %v1544
  %v1546 = vrot.slane %v1492, 5
  %v1547 = vrot.slane %v1546, 4
  %v1548 = vrot.slane %v1252, 5
  %v1549 = vsel %vm800, %v1547, %v1548
  %v1550 = vrot.slane %v1493, 5
  %v1551 = vrot.slane %v1550, 4
  %v1552 = vrot.slane %v1253, 5
  %v1553 = vsel %vm800, %v1551, %v1552
  %v1554 = vrot.slane %v1494, 5
  %v1555 = vrot.slane %v1554, 4
  %v1556 = vrot.slane %v1254, 5
  %v1557 = vsel %vm800, %v1555, %v1556
  %v1558 = vrot.slane %v1495, 5
  %v1559 = vrot.slane %v1558, 4
  %v1560 = vrot.slane %v1255, 5
  %v1561 = vsel %vm800, %v1559, %v1560
  %v1562 = vrot.slane %v1496, 5
  %v1563 = vrot.slane %v1562, 4
  %v1564 = vrot.slane %v1256, 5
  %v1565 = vsel %vm800, %v1563, %v1564
  %v1566 = vrot.slane %v1497, 5
  %v1567 = vrot.slane %v1566, 4
  %v1568 = vrot.slane %v1257, 5
  %v1569 = vsel %vm800, %v1567, %v1568
  %v1570 = vrot.slane %v1498, 5
  %v1571 = vrot.slane %v1570, 4
  %v1572 = vrot.slane %v1258, 5
  %v1573 = vsel %vm800, %v1571, %v1572
  %v1574 = vrot.slane %v1499, 5
  %v1575 = vrot.slane %v1574, 4
  %v1576 = vrot.slane %v1259, 5
  %v1577 = vsel %vm800, %v1575, %v1576
  %v1578 = vrot.slane %v1500, 5
  %v1579 = vrot.slane %v1578, 4
  %v1580 = vrot.slane %v1260, 5
  %v1581 = vsel %vm800, %v1579, %v1580
  %v1582 = vrot.slane %v1501, 5
  %v1583 = vrot.slane %v1582, 4
  %v1584 = vrot.slane %v1261, 5
  %v1585 = vsel %vm800, %v1583, %v1584
  %v1586 = vrot.slane %v1502, 5
  %v1587 = vrot.slane %v1586, 4
  %v1588 = vrot.slane %v1262, 5
  %v1589 = vsel %vm800, %v1587, %v1588
  %v1590 = vrot.slane %v1503, 5
  %v1591 = vrot.slane %v1590, 4
  %v1592 = vrot.slane %v1263, 5
  %v1593 = vsel %vm800, %v1591, %v1592
  %v1594 = vrot.slane %v1504, 5
  %v1595 = vrot.slane %v1594, 4
  %v1596 = vrot.slane %v1264, 5
  %v1597 = vsel %vm800, %v1595, %v1596
  %v1598 = vrot.slane %v1505, 5
  %v1599 = vrot.slane %v1598, 4
  %v1600 = vrot.slane %v1265, 5
  %v1601 = vsel %vm800, %v1599, %v1600
  %v1618 = vunpack.c.l.b16 %v491
  %v1619 = vunpack.c.l.b16 %v492
  %v1620 = vunpack.c.l.b16 %v493
  %v1621 = vunpack.c.l.b16 %v494
  %v1622 = vunpack.c.l.b16 %v495
  %v1623 = vunpack.c.l.b16 %v496
  %v1624 = vunpack.c.l.b16 %v497
  %v1625 = vunpack.c.l.b16 %v498
  %v1626 = vunpack.c.l.b16 %v499
  %v1627 = vunpack.c.l.b16 %v500
  %v1628 = vunpack.c.l.b16 %v501
  %v1629 = vunpack.c.l.b16 %v502
  %v1630 = vunpack.c.l.b16 %v503
  %v1631 = vunpack.c.l.b16 %v504
  %v1632 = vunpack.c.l.b16 %v505
  %v1633 = vunpack.c.l.b16 %v506
  %v1634 = vpack.c.b16 %v1619, %v1618
  %v1635 = vpack.c.b16 %v1621, %v1620
  %v1636 = vpack.c.b16 %v1623, %v1622
  %v1637 = vpack.c.b16 %v1625, %v1624
  %v1638 = vpack.c.b16 %v1627, %v1626
  %v1639 = vpack.c.b16 %v1629, %v1628
  %v1640 = vpack.c.b16 %v1631, %v1630
  %v1641 = vpack.c.b16 %v1633, %v1632
  %v1642 = vunpack.c.l.b16 %v539
  %v1643 = vunpack.c.l.b16 %v553
  %v1644 = vunpack.c.l.b16 %v567
  %v1645 = vunpack.c.l.b16 %v581
  %v1646 = vunpack.c.l.b16 %v595
  %v1647 = vunpack.c.l.b16 %v609
  %v1648 = vunpack.c.l.b16 %v623
  %v1649 = vunpack.c.l.b16 %v637
  %v1650 = vunpack.c.l.b16 %v651
  %v1651 = vunpack.c.l.b16 %v665
  %v1652 = vunpack.c.l.b16 %v679
  %v1653 = vunpack.c.l.b16 %v693
  %v1654 = vunpack.c.l.b16 %v707
  %v1655 = vunpack.c.l.b16 %v721
  %v1656 = vunpack.c.l.b16 %v735
  %v1657 = vunpack.c.l.b16 %v749
  %v1658 = vpack.c.b16 %v1643, %v1642
  %v1659 = vpack.c.b16 %v1645, %v1644
  %v1660 = vpack.c.b16 %v1647, %v1646
  %v1661 = vpack.c.b16 %v1649, %v1648
  %v1662 = vpack.c.b16 %v1651, %v1650
  %v1663 = vpack.c.b16 %v1653, %v1652
  %v1664 = vpack.c.b16 %v1655, %v1654
  %v1665 = vpack.c.b16 %v1657, %v1656
  %1666 = vrot.lane.b32.xlu0 %v1658, 64
  %v1667 = vpop.permute.xlu0 %1666
  %1668 = vrot.lane.b32.xlu0 %v1659, 64
  %v1669 = vpop.permute.xlu0 %1668
  %1670 = vrot.lane.b32.xlu0 %v1660, 64
  %v1671 = vpop.permute.xlu0 %1670
  %1672 = vrot.lane.b32.xlu0 %v1661, 64
  %v1673 = vpop.permute.xlu0 %1672
  %1674 = vrot.lane.b32.xlu0 %v1662, 64
  %v1675 = vpop.permute.xlu0 %1674
  %1676 = vrot.lane.b32.xlu0 %v1663, 64
  %v1677 = vpop.permute.xlu0 %1676
  %1678 = vrot.lane.b32.xlu0 %v1664, 64
  %v1679 = vpop.permute.xlu0 %1678
  %1680 = vrot.lane.b32.xlu0 %v1665, 64
  %v1681 = vpop.permute.xlu0 %1680
  %v1682 = vunpack.c.l.b16 %v804
  %v1683 = vunpack.c.l.b16 %v808
  %v1684 = vunpack.c.l.b16 %v812
  %v1685 = vunpack.c.l.b16 %v816
  %v1686 = vunpack.c.l.b16 %v820
  %v1687 = vunpack.c.l.b16 %v824
  %v1688 = vunpack.c.l.b16 %v828
  %v1689 = vunpack.c.l.b16 %v832
  %v1690 = vunpack.c.l.b16 %v836
  %v1691 = vunpack.c.l.b16 %v840
  %v1692 = vunpack.c.l.b16 %v844
  %v1693 = vunpack.c.l.b16 %v848
  %v1694 = vunpack.c.l.b16 %v852
  %v1695 = vunpack.c.l.b16 %v856
  %v1696 = vunpack.c.l.b16 %v860
  %v1697 = vunpack.c.l.b16 %v864
  %v1698 = vpack.c.b16 %v1683, %v1682
  %v1699 = vpack.c.b16 %v1685, %v1684
  %v1700 = vpack.c.b16 %v1687, %v1686
  %v1701 = vpack.c.b16 %v1689, %v1688
  %v1702 = vpack.c.b16 %v1691, %v1690
  %v1703 = vpack.c.b16 %v1693, %v1692
  %v1704 = vpack.c.b16 %v1695, %v1694
  %v1705 = vpack.c.b16 %v1697, %v1696
  %v1722 = vunpack.c.l.b16 %v865
  %v1723 = vunpack.c.l.b16 %v866
  %v1724 = vunpack.c.l.b16 %v867
  %v1725 = vunpack.c.l.b16 %v868
  %v1726 = vunpack.c.l.b16 %v869
  %v1727 = vunpack.c.l.b16 %v870
  %v1728 = vunpack.c.l.b16 %v871
  %v1729 = vunpack.c.l.b16 %v872
  %v1730 = vunpack.c.l.b16 %v873
  %v1731 = vunpack.c.l.b16 %v874
  %v1732 = vunpack.c.l.b16 %v875
  %v1733 = vunpack.c.l.b16 %v876
  %v1734 = vunpack.c.l.b16 %v877
  %v1735 = vunpack.c.l.b16 %v878
  %v1736 = vunpack.c.l.b16 %v879
  %v1737 = vunpack.c.l.b16 %v880
  %v1738 = vpack.c.b16 %v1723, %v1722
  %v1739 = vpack.c.b16 %v1725, %v1724
  %v1740 = vpack.c.b16 %v1727, %v1726
  %v1741 = vpack.c.b16 %v1729, %v1728
  %v1742 = vpack.c.b16 %v1731, %v1730
  %v1743 = vpack.c.b16 %v1733, %v1732
  %v1744 = vpack.c.b16 %v1735, %v1734
  %v1745 = vpack.c.b16 %v1737, %v1736
  %1746 = vrot.lane.b32.xlu0 %v1738, 64
  %v1747 = vpop.permute.xlu0 %1746
  %1748 = vrot.lane.b32.xlu0 %v1739, 64
  %v1749 = vpop.permute.xlu0 %1748
  %1750 = vrot.lane.b32.xlu0 %v1740, 64
  %v1751 = vpop.permute.xlu0 %1750
  %1752 = vrot.lane.b32.xlu0 %v1741, 64
  %v1753 = vpop.permute.xlu0 %1752
  %1754 = vrot.lane.b32.xlu0 %v1742, 64
  %v1755 = vpop.permute.xlu0 %1754
  %1756 = vrot.lane.b32.xlu0 %v1743, 64
  %v1757 = vpop.permute.xlu0 %1756
  %1758 = vrot.lane.b32.xlu0 %v1744, 64
  %v1759 = vpop.permute.xlu0 %1758
  %1760 = vrot.lane.b32.xlu0 %v1745, 64
  %v1761 = vpop.permute.xlu0 %1760
  %v1762 = vunpack.c.l.b16 %v910
  %v1763 = vunpack.c.l.b16 %v924
  %v1764 = vunpack.c.l.b16 %v938
  %v1765 = vunpack.c.l.b16 %v952
  %v1766 = vunpack.c.l.b16 %v966
  %v1767 = vunpack.c.l.b16 %v980
  %v1768 = vunpack.c.l.b16 %v994
  %v1769 = vunpack.c.l.b16 %v1008
  %v1770 = vunpack.c.l.b16 %v1022
  %v1771 = vunpack.c.l.b16 %v1036
  %v1772 = vunpack.c.l.b16 %v1050
  %v1773 = vunpack.c.l.b16 %v1064
  %v1774 = vunpack.c.l.b16 %v1078
  %v1775 = vunpack.c.l.b16 %v1092
  %v1776 = vunpack.c.l.b16 %v1106
  %v1777 = vunpack.c.l.b16 %v1120
  %v1778 = vpack.c.b16 %v1763, %v1762
  %v1779 = vpack.c.b16 %v1765, %v1764
  %v1780 = vpack.c.b16 %v1767, %v1766
  %v1781 = vpack.c.b16 %v1769, %v1768
  %v1782 = vpack.c.b16 %v1771, %v1770
  %v1783 = vpack.c.b16 %v1773, %v1772
  %v1784 = vpack.c.b16 %v1775, %v1774
  %v1785 = vpack.c.b16 %v1777, %v1776
  %v1786 = vunpack.c.l.b16 %v1172
  %v1787 = vunpack.c.l.b16 %v1176
  %v1788 = vunpack.c.l.b16 %v1180
  %v1789 = vunpack.c.l.b16 %v1184
  %v1790 = vunpack.c.l.b16 %v1188
  %v1791 = vunpack.c.l.b16 %v1192
  %v1792 = vunpack.c.l.b16 %v1196
  %v1793 = vunpack.c.l.b16 %v1200
  %v1794 = vunpack.c.l.b16 %v1204
  %v1795 = vunpack.c.l.b16 %v1208
  %v1796 = vunpack.c.l.b16 %v1212
  %v1797 = vunpack.c.l.b16 %v1216
  %v1798 = vunpack.c.l.b16 %v1220
  %v1799 = vunpack.c.l.b16 %v1224
  %v1800 = vunpack.c.l.b16 %v1228
  %v1801 = vunpack.c.l.b16 %v1232
  %v1802 = vpack.c.b16 %v1787, %v1786
  %v1803 = vpack.c.b16 %v1789, %v1788
  %v1804 = vpack.c.b16 %v1791, %v1790
  %v1805 = vpack.c.b16 %v1793, %v1792
  %v1806 = vpack.c.b16 %v1795, %v1794
  %v1807 = vpack.c.b16 %v1797, %v1796
  %v1808 = vpack.c.b16 %v1799, %v1798
  %v1809 = vpack.c.b16 %v1801, %v1800
  %1810 = vrot.lane.b32.xlu0 %v1802, 64
  %v1811 = vpop.permute.xlu0 %1810
  %1812 = vrot.lane.b32.xlu0 %v1803, 64
  %v1813 = vpop.permute.xlu0 %1812
  %1814 = vrot.lane.b32.xlu0 %v1804, 64
  %v1815 = vpop.permute.xlu0 %1814
  %1816 = vrot.lane.b32.xlu0 %v1805, 64
  %v1817 = vpop.permute.xlu0 %1816
  %1818 = vrot.lane.b32.xlu0 %v1806, 64
  %v1819 = vpop.permute.xlu0 %1818
  %1820 = vrot.lane.b32.xlu0 %v1807, 64
  %v1821 = vpop.permute.xlu0 %1820
  %1822 = vrot.lane.b32.xlu0 %v1808, 64
  %v1823 = vpop.permute.xlu0 %1822
  %1824 = vrot.lane.b32.xlu0 %v1809, 64
  %v1825 = vpop.permute.xlu0 %1824
  %v1842 = vunpack.c.l.b16 %v1234
  %v1843 = vunpack.c.l.b16 %v1235
  %v1844 = vunpack.c.l.b16 %v1236
  %v1845 = vunpack.c.l.b16 %v1237
  %v1846 = vunpack.c.l.b16 %v1238
  %v1847 = vunpack.c.l.b16 %v1239
  %v1848 = vunpack.c.l.b16 %v1240
  %v1849 = vunpack.c.l.b16 %v1241
  %v1850 = vunpack.c.l.b16 %v1242
  %v1851 = vunpack.c.l.b16 %v1243
  %v1852 = vunpack.c.l.b16 %v1244
  %v1853 = vunpack.c.l.b16 %v1245
  %v1854 = vunpack.c.l.b16 %v1246
  %v1855 = vunpack.c.l.b16 %v1247
  %v1856 = vunpack.c.l.b16 %v1248
  %v1857 = vunpack.c.l.b16 %v1249
  %v1858 = vpack.c.b16 %v1843, %v1842
  %v1859 = vpack.c.b16 %v1845, %v1844
  %v1860 = vpack.c.b16 %v1847, %v1846
  %v1861 = vpack.c.b16 %v1849, %v1848
  %v1862 = vpack.c.b16 %v1851, %v1850
  %v1863 = vpack.c.b16 %v1853, %v1852
  %v1864 = vpack.c.b16 %v1855, %v1854
  %v1865 = vpack.c.b16 %v1857, %v1856
  %v1866 = vunpack.c.l.b16 %v1279
  %v1867 = vunpack.c.l.b16 %v1293
  %v1868 = vunpack.c.l.b16 %v1307
  %v1869 = vunpack.c.l.b16 %v1321
  %v1870 = vunpack.c.l.b16 %v1335
  %v1871 = vunpack.c.l.b16 %v1349
  %v1872 = vunpack.c.l.b16 %v1363
  %v1873 = vunpack.c.l.b16 %v1377
  %v1874 = vunpack.c.l.b16 %v1391
  %v1875 = vunpack.c.l.b16 %v1405
  %v1876 = vunpack.c.l.b16 %v1419
  %v1877 = vunpack.c.l.b16 %v1433
  %v1878 = vunpack.c.l.b16 %v1447
  %v1879 = vunpack.c.l.b16 %v1461
  %v1880 = vunpack.c.l.b16 %v1475
  %v1881 = vunpack.c.l.b16 %v1489
  %v1882 = vpack.c.b16 %v1867, %v1866
  %v1883 = vpack.c.b16 %v1869, %v1868
  %v1884 = vpack.c.b16 %v1871, %v1870
  %v1885 = vpack.c.b16 %v1873, %v1872
  %v1886 = vpack.c.b16 %v1875, %v1874
  %v1887 = vpack.c.b16 %v1877, %v1876
  %v1888 = vpack.c.b16 %v1879, %v1878
  %v1889 = vpack.c.b16 %v1881, %v1880
  %1890 = vrot.lane.b32.xlu0 %v1882, 64
  %v1891 = vpop.permute.xlu0 %1890
  %1892 = vrot.lane.b32.xlu0 %v1883, 64
  %v1893 = vpop.permute.xlu0 %1892
  %1894 = vrot.lane.b32.xlu0 %v1884, 64
  %v1895 = vpop.permute.xlu0 %1894
  %1896 = vrot.lane.b32.xlu0 %v1885, 64
  %v1897 = vpop.permute.xlu0 %1896
  %1898 = vrot.lane.b32.xlu0 %v1886, 64
  %v1899 = vpop.permute.xlu0 %1898
  %1900 = vrot.lane.b32.xlu0 %v1887, 64
  %v1901 = vpop.permute.xlu0 %1900
  %1902 = vrot.lane.b32.xlu0 %v1888, 64
  %v1903 = vpop.permute.xlu0 %1902
  %1904 = vrot.lane.b32.xlu0 %v1889, 64
  %v1905 = vpop.permute.xlu0 %1904
  %v1906 = vunpack.c.l.b16 %v1541
  %v1907 = vunpack.c.l.b16 %v1545
  %v1908 = vunpack.c.l.b16 %v1549
  %v1909 = vunpack.c.l.b16 %v1553
  %v1910 = vunpack.c.l.b16 %v1557
  %v1911 = vunpack.c.l.b16 %v1561
  %v1912 = vunpack.c.l.b16 %v1565
  %v1913 = vunpack.c.l.b16 %v1569
  %v1914 = vunpack.c.l.b16 %v1573
  %v1915 = vunpack.c.l.b16 %v1577
  %v1916 = vunpack.c.l.b16 %v1581
  %v1917 = vunpack.c.l.b16 %v1585
  %v1918 = vunpack.c.l.b16 %v1589
  %v1919 = vunpack.c.l.b16 %v1593
  %v1920 = vunpack.c.l.b16 %v1597
  %v1921 = vunpack.c.l.b16 %v1601
  %v1922 = vpack.c.b16 %v1907, %v1906
  %v1923 = vpack.c.b16 %v1909, %v1908
  %v1924 = vpack.c.b16 %v1911, %v1910
  %v1925 = vpack.c.b16 %v1913, %v1912
  %v1926 = vpack.c.b16 %v1915, %v1914
  %v1927 = vpack.c.b16 %v1917, %v1916
  %v1928 = vpack.c.b16 %v1919, %v1918
  %v1929 = vpack.c.b16 %v1921, %v1920
  %vm1930 = vcmask 523264
  %v1933 = vsel %vm1930, %v1634, %v1667
  %v1937 = vsel %vm1930, %v1635, %v1669
  %v1941 = vsel %vm1930, %v1636, %v1671
  %v1945 = vsel %vm1930, %v1637, %v1673
  %v1949 = vsel %vm1930, %v1638, %v1675
  %v1953 = vsel %vm1930, %v1639, %v1677
  %v1957 = vsel %vm1930, %v1640, %v1679
  %v1961 = vsel %vm1930, %v1641, %v1681
  %v1965 = vsel %vm1930, %v1698, %v1747
  %v1969 = vsel %vm1930, %v1699, %v1749
  %v1973 = vsel %vm1930, %v1700, %v1751
  %v1977 = vsel %vm1930, %v1701, %v1753
  %v1981 = vsel %vm1930, %v1702, %v1755
  %v1985 = vsel %vm1930, %v1703, %v1757
  %v1989 = vsel %vm1930, %v1704, %v1759
  %v1993 = vsel %vm1930, %v1705, %v1761
  %v1997 = vsel %vm1930, %v1778, %v1811
  %v2001 = vsel %vm1930, %v1779, %v1813
  %v2005 = vsel %vm1930, %v1780, %v1815
  %v2009 = vsel %vm1930, %v1781, %v1817
  %v2013 = vsel %vm1930, %v1782, %v1819
  %v2017 = vsel %vm1930, %v1783, %v1821
  %v2021 = vsel %vm1930, %v1784, %v1823
  %v2025 = vsel %vm1930, %v1785, %v1825
  %v2029 = vsel %vm1930, %v1858, %v1891
  %v2033 = vsel %vm1930, %v1859, %v1893
  %v2037 = vsel %vm1930, %v1860, %v1895
  %v2041 = vsel %vm1930, %v1861, %v1897
  %v2045 = vsel %vm1930, %v1862, %v1899
  %v2049 = vsel %vm1930, %v1863, %v1901
  %v2053 = vsel %vm1930, %v1864, %v1903
  %v2057 = vsel %vm1930, %v1865, %v1905
  %v2059 = vld [vmem:[%s3] sm:$0xf]
  %v2060 = vld [vmem:[%s3 + $0x4] sm:$0xf]
  %v2061 = vld [vmem:[%s3 + $0x8] sm:$0xf]
  %v2062 = vld [vmem:[%s3 + $0xc] sm:$0xf]
  %v2063 = vld [vmem:[%s3 + $0x10] sm:$0xf]
  %v2064 = vld [vmem:[%s3 + $0x14] sm:$0xf]
  %v2065 = vld [vmem:[%s3 + $0x18] sm:$0xf]
  %v2066 = vld [vmem:[%s3 + $0x1c] sm:$0xf]
  %v2067 = vld [vmem:[%s3 + $0x20] sm:$0xf]
  %v2068 = vld [vmem:[%s3 + $0x24] sm:$0xf]
  %v2069 = vld [vmem:[%s3 + $0x28] sm:$0xf]
  %v2070 = vld [vmem:[%s3 + $0x2c] sm:$0xf]
  %v2071 = vld [vmem:[%s3 + $0x30] sm:$0xf]
  %v2072 = vld [vmem:[%s3 + $0x34] sm:$0xf]
  %v2073 = vld [vmem:[%s3 + $0x38] sm:$0xf]
  %v2074 = vld [vmem:[%s3 + $0x3c] sm:$0xf]
  %v2075 = vld [vmem:[%s3 + $0x40] sm:$0xf]
  %v2076 = vld [vmem:[%s3 + $0x44] sm:$0xf]
  %v2077 = vld [vmem:[%s3 + $0x48] sm:$0xf]
  %v2078 = vld [vmem:[%s3 + $0x4c] sm:$0xf]
  %v2079 = vld [vmem:[%s3 + $0x50] sm:$0xf]
  %v2080 = vld [vmem:[%s3 + $0x54] sm:$0xf]
  %v2081 = vld [vmem:[%s3 + $0x58] sm:$0xf]
  %v2082 = vld [vmem:[%s3 + $0x5c] sm:$0xf]
  %v2083 = vld [vmem:[%s3 + $0x60] sm:$0xf]
  %v2084 = vld [vmem:[%s3 + $0x64] sm:$0xf]
  %v2085 = vld [vmem:[%s3 + $0x68] sm:$0xf]
  %v2086 = vld [vmem:[%s3 + $0x6c] sm:$0xf]
  %v2087 = vld [vmem:[%s3 + $0x70] sm:$0xf]
  %v2088 = vld [vmem:[%s3 + $0x74] sm:$0xf]
  %v2089 = vld [vmem:[%s3 + $0x78] sm:$0xf]
  %v2090 = vld [vmem:[%s3 + $0x7c] sm:$0xf]
  %v2091 = vld [vmem:[%s3 + $0x80] sm:$0xf]
  %v2092 = vld [vmem:[%s3 + $0x84] sm:$0xf]
  %v2093 = vld [vmem:[%s3 + $0x88] sm:$0xf]
  %v2094 = vld [vmem:[%s3 + $0x8c] sm:$0xf]
  %v2095 = vld [vmem:[%s3 + $0x90] sm:$0xf]
  %v2096 = vld [vmem:[%s3 + $0x94] sm:$0xf]
  %v2097 = vld [vmem:[%s3 + $0x98] sm:$0xf]
  %v2098 = vld [vmem:[%s3 + $0x9c] sm:$0xf]
  %v2099 = vld [vmem:[%s3 + $0xa0] sm:$0xf]
  %v2100 = vld [vmem:[%s3 + $0xa4] sm:$0xf]
  %v2101 = vld [vmem:[%s3 + $0xa8] sm:$0xf]
  %v2102 = vld [vmem:[%s3 + $0xac] sm:$0xf]
  %v2103 = vld [vmem:[%s3 + $0xb0] sm:$0xf]
  %v2104 = vld [vmem:[%s3 + $0xb4] sm:$0xf]
  %v2105 = vld [vmem:[%s3 + $0xb8] sm:$0xf]
  %v2106 = vld [vmem:[%s3 + $0xbc] sm:$0xf]
  %v2107 = vld [vmem:[%s3 + $0xc0] sm:$0xf]
  %v2108 = vld [vmem:[%s3 + $0xc4] sm:$0xf]
  %v2109 = vld [vmem:[%s3 + $0xc8] sm:$0xf]
  %v2110 = vld [vmem:[%s3 + $0xcc] sm:$0xf]
  %v2111 = vld [vmem:[%s3 + $0xd0] sm:$0xf]
  %v2112 = vld [vmem:[%s3 + $0xd4] sm:$0xf]
  %v2113 = vld [vmem:[%s3 + $0xd8] sm:$0xf]
  %v2114 = vld [vmem:[%s3 + $0xdc] sm:$0xf]
  %v2115 = vld [vmem:[%s3 + $0xe0] sm:$0xf]
  %v2116 = vld [vmem:[%s3 + $0xe4] sm:$0xf]
  %v2117 = vld [vmem:[%s3 + $0xe8] sm:$0xf]
  %v2118 = vld [vmem:[%s3 + $0xec] sm:$0xf]
  %v2119 = vld [vmem:[%s3 + $0xf0] sm:$0xf]
  %v2120 = vld [vmem:[%s3 + $0xf4] sm:$0xf]
  %v2121 = vld [vmem:[%s3 + $0xf8] sm:$0xf]
  %v2122 = vld [vmem:[%s3 + $0xfc] sm:$0xf]
  %v2123 = vld [vmem:[%s3 + $0x100] sm:$0xf]
  %v2124 = vld [vmem:[%s3 + $0x104] sm:$0xf]
  %v2125 = vld [vmem:[%s3 + $0x108] sm:$0xf]
  %v2126 = vld [vmem:[%s3 + $0x10c] sm:$0xf]
  %v2127 = vld [vmem:[%s3 + $0x110] sm:$0xf]
  %v2128 = vld [vmem:[%s3 + $0x114] sm:$0xf]
  %v2129 = vld [vmem:[%s3 + $0x118] sm:$0xf]
  %v2130 = vld [vmem:[%s3 + $0x11c] sm:$0xf]
  %v2203 = vunpack.c.l.b16 %v2059
  %v2204 = vunpack.c.l.b16 %v2060
  %v2205 = vunpack.c.l.b16 %v2061
  %v2206 = vunpack.c.l.b16 %v2062
  %v2207 = vunpack.c.l.b16 %v2063
  %v2208 = vunpack.c.l.b16 %v2064
  %v2209 = vunpack.c.l.b16 %v2065
  %v2210 = vunpack.c.l.b16 %v2066
  %v2211 = vunpack.c.l.b16 %v2067
  %v2212 = vunpack.c.l.b16 %v2068
  %v2213 = vunpack.c.l.b16 %v2069
  %v2214 = vunpack.c.l.b16 %v2070
  %v2215 = vunpack.c.l.b16 %v2071
  %v2216 = vunpack.c.l.b16 %v2072
  %v2217 = vunpack.c.l.b16 %v2073
  %v2218 = vunpack.c.l.b16 %v2074
  %v2219 = vunpack.c.l.b16 %v2075
  %v2220 = vunpack.c.l.b16 %v2076
  %v2221 = vunpack.c.l.b16 %v2077
  %v2222 = vunpack.c.l.b16 %v2078
  %v2223 = vunpack.c.l.b16 %v2079
  %v2224 = vunpack.c.l.b16 %v2080
  %v2225 = vunpack.c.l.b16 %v2081
  %v2226 = vunpack.c.l.b16 %v2082
  %v2227 = vunpack.c.l.b16 %v2083
  %v2228 = vunpack.c.l.b16 %v2084
  %v2229 = vunpack.c.l.b16 %v2085
  %v2230 = vunpack.c.l.b16 %v2086
  %v2231 = vunpack.c.l.b16 %v2087
  %v2232 = vunpack.c.l.b16 %v2088
  %v2233 = vunpack.c.l.b16 %v2089
  %v2234 = vunpack.c.l.b16 %v2090
  %v2235 = vunpack.c.l.b16 %v2091
  %v2236 = vunpack.c.l.b16 %v2092
  %v2237 = vunpack.c.l.b16 %v2093
  %v2238 = vunpack.c.l.b16 %v2094
  %v2239 = vunpack.c.l.b16 %v2095
  %v2240 = vunpack.c.l.b16 %v2096
  %v2241 = vunpack.c.l.b16 %v2097
  %v2242 = vunpack.c.l.b16 %v2098
  %v2243 = vunpack.c.l.b16 %v2099
  %v2244 = vunpack.c.l.b16 %v2100
  %v2245 = vunpack.c.l.b16 %v2101
  %v2246 = vunpack.c.l.b16 %v2102
  %v2247 = vunpack.c.l.b16 %v2103
  %v2248 = vunpack.c.l.b16 %v2104
  %v2249 = vunpack.c.l.b16 %v2105
  %v2250 = vunpack.c.l.b16 %v2106
  %v2251 = vunpack.c.l.b16 %v2107
  %v2252 = vunpack.c.l.b16 %v2108
  %v2253 = vunpack.c.l.b16 %v2109
  %v2254 = vunpack.c.l.b16 %v2110
  %v2255 = vunpack.c.l.b16 %v2111
  %v2256 = vunpack.c.l.b16 %v2112
  %v2257 = vunpack.c.l.b16 %v2113
  %v2258 = vunpack.c.l.b16 %v2114
  %v2259 = vunpack.c.l.b16 %v2115
  %v2260 = vunpack.c.l.b16 %v2116
  %v2261 = vunpack.c.l.b16 %v2117
  %v2262 = vunpack.c.l.b16 %v2118
  %v2263 = vunpack.c.l.b16 %v2119
  %v2264 = vunpack.c.l.b16 %v2120
  %v2265 = vunpack.c.l.b16 %v2121
  %v2266 = vunpack.c.l.b16 %v2122
  %v2267 = vunpack.c.l.b16 %v2123
  %v2268 = vunpack.c.l.b16 %v2124
  %v2269 = vunpack.c.l.b16 %v2125
  %v2270 = vunpack.c.l.b16 %v2126
  %v2271 = vunpack.c.l.b16 %v2127
  %v2272 = vunpack.c.l.b16 %v2128
  %v2273 = vunpack.c.l.b16 %v2129
  %v2274 = vunpack.c.l.b16 %v2130
  %v2275 = vpack.c.b16 %v2204, %v2203
  %v2276 = vpack.c.b16 %v2206, %v2205
  %v2277 = vpack.c.b16 %v2208, %v2207
  %v2278 = vpack.c.b16 %v2210, %v2209
  %v2279 = vpack.c.b16 %v2212, %v2211
  %v2280 = vpack.c.b16 %v2214, %v2213
  %v2281 = vpack.c.b16 %v2216, %v2215
  %v2282 = vpack.c.b16 %v2218, %v2217
  %v2283 = vpack.c.b16 %v2220, %v2219
  %v2284 = vpack.c.b16 %v2222, %v2221
  %v2285 = vpack.c.b16 %v2224, %v2223
  %v2286 = vpack.c.b16 %v2226, %v2225
  %v2287 = vpack.c.b16 %v2228, %v2227
  %v2288 = vpack.c.b16 %v2230, %v2229
  %v2289 = vpack.c.b16 %v2232, %v2231
  %v2290 = vpack.c.b16 %v2234, %v2233
  %v2291 = vpack.c.b16 %v2236, %v2235
  %v2292 = vpack.c.b16 %v2238, %v2237
  %v2293 = vpack.c.b16 %v2240, %v2239
  %v2294 = vpack.c.b16 %v2242, %v2241
  %v2295 = vpack.c.b16 %v2244, %v2243
  %v2296 = vpack.c.b16 %v2246, %v2245
  %v2297 = vpack.c.b16 %v2248, %v2247
  %v2298 = vpack.c.b16 %v2250, %v2249
  %v2299 = vpack.c.b16 %v2252, %v2251
  %v2300 = vpack.c.b16 %v2254, %v2253
  %v2301 = vpack.c.b16 %v2256, %v2255
  %v2302 = vpack.c.b16 %v2258, %v2257
  %v2303 = vpack.c.b16 %v2260, %v2259
  %v2304 = vpack.c.b16 %v2262, %v2261
  %v2305 = vpack.c.b16 %v2264, %v2263
  %v2306 = vpack.c.b16 %v2266, %v2265
  %v2307 = vpack.c.b16 %v2268, %v2267
  %v2308 = vpack.c.b16 %v2270, %v2269
  %v2309 = vpack.c.b16 %v2272, %v2271
  %v2310 = vpack.c.b16 %v2274, %v2273
  %v2348 = vsel %vm1930, %v1922, 0
  %v2351 = vsel %vm1930, %v1923, 0
  %v2354 = vsel %vm1930, %v1924, 0
  %v2357 = vsel %vm1930, %v1925, 0
  %v2360 = vsel %vm1930, %v1926, 0
  %v2363 = vsel %vm1930, %v1927, 0
  %v2366 = vsel %vm1930, %v1928, 0
  %v2369 = vsel %vm1930, %v1929, 0
  %2371 = vmatprep.subr.bf16.mxu0 0
  %2372 = vmatpush1.bf16.msra.mxu0 %v2282
  %2373 = vmatprep.subr.bf16.mxu0 0
  %2374 = vmatpush1.bf16.msra.mxu0 %v2281
  %2375 = vmatprep.subr.bf16.mxu0 0
  %2376 = vmatpush1.bf16.msra.mxu0 %v2280
  %2377 = vmatprep.subr.bf16.mxu0 0
  %2378 = vmatpush1.bf16.msra.mxu0 %v2279
  %2379 = vmatprep.subr.bf16.mxu0 0
  %2380 = vmatpush1.bf16.msra.mxu0 %v2278
  %2381 = vmatprep.subr.bf16.mxu0 0
  %2382 = vmatpush1.bf16.msra.mxu0 %v2277
  %2383 = vmatprep.subr.bf16.mxu0 0
  %2384 = vmatpush1.bf16.msra.mxu0 %v2276
  %2385 = vmatprep.subr.bf16.mxu0 0
  %2386 = vmatpush1.bf16.msra.mxu0 %v2275
  %2387 = vmatprep.subr.bf16.mxu0 0
  %2388 = vmatpush2.bf16.msra.mxu0 %v2290
  %2389 = vmatprep.subr.bf16.mxu0 0
  %2390 = vmatpush2.bf16.msra.mxu0 %v2289
  %2391 = vmatprep.subr.bf16.mxu0 0
  %2392 = vmatpush2.bf16.msra.mxu0 %v2288
  %2393 = vmatprep.subr.bf16.mxu0 0
  %2394 = vmatpush2.bf16.msra.mxu0 %v2287
  %2395 = vmatprep.subr.bf16.mxu0 0
  %2396 = vmatpush2.bf16.msra.mxu0 %v2286
  %2397 = vmatprep.subr.bf16.mxu0 0
  %2398 = vmatpush2.bf16.msra.mxu0 %v2285
  %2399 = vmatprep.subr.bf16.mxu0 0
  %2400 = vmatpush2.bf16.msra.mxu0 %v2284
  %2401 = vmatprep.subr.bf16.mxu0 0
  %2402 = vmatpush2.bf16.msra.mxu0 %v2283
  %2403 = vmatprep.mubr.bf16.mxu0 %v1965
  %2404 = vmatmul.mubr.bf16.gmra.mxu0 %v1933
  %v2405 = vpop.f32.mrf.mxu0
  %v2406 = vadd.f32 0.0, %v2405
  %v2407 = vpop.f32.mrf.mxu0
  %v2408 = vpop.f32.mrf.mxu0
  %v2409 = vadd.f32 0.0, %v2408
  %v2410 = vpop.f32.mrf.mxu0
  %2411 = vmatprep.mubr.bf16.mxu0 %v1969
  %2412 = vmatmul.mubr.bf16.gmra.mxu0 %v1937
  %v2413 = vpop.f32.mrf.mxu0
  %v2414 = vadd.f32 0.0, %v2413
  %v2415 = vpop.f32.mrf.mxu0
  %v2416 = vpop.f32.mrf.mxu0
  %v2417 = vadd.f32 0.0, %v2416
  %v2418 = vpop.f32.mrf.mxu0
  %2419 = vmatprep.mubr.bf16.mxu0 %v1973
  %2420 = vmatmul.mubr.bf16.gmra.mxu0 %v1941
  %v2421 = vpop.f32.mrf.mxu0
  %v2422 = vadd.f32 0.0, %v2421
  %v2423 = vpop.f32.mrf.mxu0
  %v2424 = vpop.f32.mrf.mxu0
  %v2425 = vadd.f32 0.0, %v2424
  %v2426 = vpop.f32.mrf.mxu0
  %2427 = vmatprep.mubr.bf16.mxu0 %v1977
  %2428 = vmatmul.mubr.bf16.gmra.mxu0 %v1945
  %v2429 = vpop.f32.mrf.mxu0
  %v2430 = vadd.f32 0.0, %v2429
  %v2431 = vpop.f32.mrf.mxu0
  %v2432 = vpop.f32.mrf.mxu0
  %v2433 = vadd.f32 0.0, %v2432
  %v2434 = vpop.f32.mrf.mxu0
  %2435 = vmatprep.mubr.bf16.mxu0 %v1981
  %2436 = vmatmul.mubr.bf16.gmra.mxu0 %v1949
  %v2437 = vpop.f32.mrf.mxu0
  %v2438 = vadd.f32 0.0, %v2437
  %v2439 = vpop.f32.mrf.mxu0
  %v2440 = vpop.f32.mrf.mxu0
  %v2441 = vadd.f32 0.0, %v2440
  %v2442 = vpop.f32.mrf.mxu0
  %2443 = vmatprep.mubr.bf16.mxu0 %v1985
  %2444 = vmatmul.mubr.bf16.gmra.mxu0 %v1953
  %v2445 = vpop.f32.mrf.mxu0
  %v2446 = vadd.f32 0.0, %v2445
  %v2447 = vpop.f32.mrf.mxu0
  %v2448 = vpop.f32.mrf.mxu0
  %v2449 = vadd.f32 0.0, %v2448
  %v2450 = vpop.f32.mrf.mxu0
  %2451 = vmatprep.mubr.bf16.mxu0 %v1989
  %2452 = vmatmul.mubr.bf16.gmra.mxu0 %v1957
  %v2453 = vpop.f32.mrf.mxu0
  %v2454 = vadd.f32 0.0, %v2453
  %v2455 = vpop.f32.mrf.mxu0
  %v2456 = vpop.f32.mrf.mxu0
  %v2457 = vadd.f32 0.0, %v2456
  %v2458 = vpop.f32.mrf.mxu0
  %2459 = vmatprep.mubr.bf16.mxu0 %v1993
  %2460 = vmatmul.mubr.bf16.gmra.mxu0 %v1961
  %v2461 = vpop.f32.mrf.mxu0
  %v2462 = vadd.f32 0.0, %v2461
  %v2463 = vpop.f32.mrf.mxu0
  %v2464 = vpop.f32.mrf.mxu0
  %v2465 = vadd.f32 0.0, %v2464
  %v2466 = vpop.f32.mrf.mxu0
  %2467 = vdwg.mxu0
  %2468 = vmatprep.subr.bf16.mxu0 0
  %2469 = vmatpush1.bf16.msra.mxu0 %v2298
  %2470 = vmatprep.subr.bf16.mxu0 0
  %2471 = vmatpush1.bf16.msra.mxu0 %v2297
  %2472 = vmatprep.subr.bf16.mxu0 0
  %2473 = vmatpush1.bf16.msra.mxu0 %v2296
  %2474 = vmatprep.subr.bf16.mxu0 0
  %2475 = vmatpush1.bf16.msra.mxu0 %v2295
  %2476 = vmatprep.subr.bf16.mxu0 0
  %2477 = vmatpush1.bf16.msra.mxu0 %v2294
  %2478 = vmatprep.subr.bf16.mxu0 0
  %2479 = vmatpush1.bf16.msra.mxu0 %v2293
  %2480 = vmatprep.subr.bf16.mxu0 0
  %2481 = vmatpush1.bf16.msra.mxu0 %v2292
  %2482 = vmatprep.subr.bf16.mxu0 0
  %2483 = vmatpush1.bf16.msra.mxu0 %v2291
  %2484 = vmatprep.subr.bf16.mxu0 0
  %2485 = vmatpush2.bf16.msra.mxu0 %v2306
  %2486 = vmatprep.subr.bf16.mxu0 0
  %2487 = vmatpush2.bf16.msra.mxu0 %v2305
  %2488 = vmatprep.subr.bf16.mxu0 0
  %2489 = vmatpush2.bf16.msra.mxu0 %v2304
  %2490 = vmatprep.subr.bf16.mxu0 0
  %2491 = vmatpush2.bf16.msra.mxu0 %v2303
  %2492 = vmatprep.subr.bf16.mxu0 0
  %2493 = vmatpush2.bf16.msra.mxu0 %v2302
  %2494 = vmatprep.subr.bf16.mxu0 0
  %2495 = vmatpush2.bf16.msra.mxu0 %v2301
  %2496 = vmatprep.subr.bf16.mxu0 0
  %2497 = vmatpush2.bf16.msra.mxu0 %v2300
  %2498 = vmatprep.subr.bf16.mxu0 0
  %2499 = vmatpush2.bf16.msra.mxu0 %v2299
  %2500 = vmatprep.mubr.bf16.mxu0 %v2029
  %2501 = vmatmul.mubr.bf16.gmra.mxu0 %v1997
  %v2502 = vpop.f32.mrf.mxu0
  %v2503 = vadd.f32 %v2406, %v2502
  %v2504 = vpop.f32.mrf.mxu0
  %v2505 = vpop.f32.mrf.mxu0
  %v2506 = vadd.f32 %v2409, %v2505
  %v2507 = vpop.f32.mrf.mxu0
  %2508 = vmatprep.mubr.bf16.mxu0 %v2033
  %2509 = vmatmul.mubr.bf16.gmra.mxu0 %v2001
  %v2510 = vpop.f32.mrf.mxu0
  %v2511 = vadd.f32 %v2414, %v2510
  %v2512 = vpop.f32.mrf.mxu0
  %v2513 = vpop.f32.mrf.mxu0
  %v2514 = vadd.f32 %v2417, %v2513
  %v2515 = vpop.f32.mrf.mxu0
  %2516 = vmatprep.mubr.bf16.mxu0 %v2037
  %2517 = vmatmul.mubr.bf16.gmra.mxu0 %v2005
  %v2518 = vpop.f32.mrf.mxu0
  %v2519 = vadd.f32 %v2422, %v2518
  %v2520 = vpop.f32.mrf.mxu0
  %v2521 = vpop.f32.mrf.mxu0
  %v2522 = vadd.f32 %v2425, %v2521
  %v2523 = vpop.f32.mrf.mxu0
  %2524 = vmatprep.mubr.bf16.mxu0 %v2041
  %2525 = vmatmul.mubr.bf16.gmra.mxu0 %v2009
  %v2526 = vpop.f32.mrf.mxu0
  %v2527 = vadd.f32 %v2430, %v2526
  %v2528 = vpop.f32.mrf.mxu0
  %v2529 = vpop.f32.mrf.mxu0
  %v2530 = vadd.f32 %v2433, %v2529
  %v2531 = vpop.f32.mrf.mxu0
  %2532 = vmatprep.mubr.bf16.mxu0 %v2045
  %2533 = vmatmul.mubr.bf16.gmra.mxu0 %v2013
  %v2534 = vpop.f32.mrf.mxu0
  %v2535 = vadd.f32 %v2438, %v2534
  %v2536 = vpop.f32.mrf.mxu0
  %v2537 = vpop.f32.mrf.mxu0
  %v2538 = vadd.f32 %v2441, %v2537
  %v2539 = vpop.f32.mrf.mxu0
  %2540 = vmatprep.mubr.bf16.mxu0 %v2049
  %2541 = vmatmul.mubr.bf16.gmra.mxu0 %v2017
  %v2542 = vpop.f32.mrf.mxu0
  %v2543 = vadd.f32 %v2446, %v2542
  %v2544 = vpop.f32.mrf.mxu0
  %v2545 = vpop.f32.mrf.mxu0
  %v2546 = vadd.f32 %v2449, %v2545
  %v2547 = vpop.f32.mrf.mxu0
  %2548 = vmatprep.mubr.bf16.mxu0 %v2053
  %2549 = vmatmul.mubr.bf16.gmra.mxu0 %v2021
  %v2550 = vpop.f32.mrf.mxu0
  %v2551 = vadd.f32 %v2454, %v2550
  %v2552 = vpop.f32.mrf.mxu0
  %v2553 = vpop.f32.mrf.mxu0
  %v2554 = vadd.f32 %v2457, %v2553
  %v2555 = vpop.f32.mrf.mxu0
  %2556 = vmatprep.mubr.bf16.mxu0 %v2057
  %2557 = vmatmul.mubr.bf16.gmra.mxu0 %v2025
  %v2558 = vpop.f32.mrf.mxu0
  %v2559 = vadd.f32 %v2462, %v2558
  %v2560 = vpop.f32.mrf.mxu0
  %v2561 = vpop.f32.mrf.mxu0
  %v2562 = vadd.f32 %v2465, %v2561
  %v2563 = vpop.f32.mrf.mxu0
  %2564 = vdwg.mxu0
  %2565 = vmatprep.subr.bf16.mxu0 0
  %2566 = vmatpush1.bf16.msra.mxu0 0
  %2567 = vmatprep.subr.bf16.mxu0 0
  %2568 = vmatpush1.bf16.msra.mxu0 0
  %2569 = vmatprep.subr.bf16.mxu0 0
  %2570 = vmatpush1.bf16.msra.mxu0 0
  %2571 = vmatprep.subr.bf16.mxu0 0
  %2572 = vmatpush1.bf16.msra.mxu0 0
  %2573 = vmatprep.subr.bf16.mxu0 0
  %2574 = vmatpush1.bf16.msra.mxu0 %v2310
  %2575 = vmatprep.subr.bf16.mxu0 0
  %2576 = vmatpush1.bf16.msra.mxu0 %v2309
  %2577 = vmatprep.subr.bf16.mxu0 0
  %2578 = vmatpush1.bf16.msra.mxu0 %v2308
  %2579 = vmatprep.subr.bf16.mxu0 0
  %2580 = vmatpush1.bf16.msra.mxu0 %v2307
  %2581 = vmatprep.subr.bf16.mxu0 0
  %2582 = vmatpush2.bf16.msra.mxu0 0
  %2583 = vmatprep.subr.bf16.mxu0 0
  %2584 = vmatpush2.bf16.msra.mxu0 0
  %2585 = vmatprep.subr.bf16.mxu0 0
  %2586 = vmatpush2.bf16.msra.mxu0 0
  %2587 = vmatprep.subr.bf16.mxu0 0
  %2588 = vmatpush2.bf16.msra.mxu0 0
  %2589 = vmatprep.subr.bf16.mxu0 0
  %2590 = vmatpush2.bf16.msra.mxu0 0
  %2591 = vmatprep.subr.bf16.mxu0 0
  %2592 = vmatpush2.bf16.msra.mxu0 0
  %2593 = vmatprep.subr.bf16.mxu0 0
  %2594 = vmatpush2.bf16.msra.mxu0 0
  %2595 = vmatprep.subr.bf16.mxu0 0
  %2596 = vmatpush2.bf16.msra.mxu0 0
  %2597 = vmatprep.mubr.bf16.mxu0 0
  %2598 = vmatmul.mubr.bf16.gmra.mxu0 %v2348
  %v2599 = vpop.f32.mrf.mxu0
  %v2600 = vadd.f32 %v2503, %v2599
  %v2601 = vpop.f32.mrf.mxu0
  %v2602 = vpop.f32.mrf.mxu0
  %v2603 = vadd.f32 %v2506, %v2602
  %v2604 = vpop.f32.mrf.mxu0
  %2605 = vmatprep.mubr.bf16.mxu0 0
  %2606 = vmatmul.mubr.bf16.gmra.mxu0 %v2351
  %v2607 = vpop.f32.mrf.mxu0
  %v2608 = vadd.f32 %v2511, %v2607
  %v2609 = vpop.f32.mrf.mxu0
  %v2610 = vpop.f32.mrf.mxu0
  %v2611 = vadd.f32 %v2514, %v2610
  %v2612 = vpop.f32.mrf.mxu0
  %2613 = vmatprep.mubr.bf16.mxu0 0
  %2614 = vmatmul.mubr.bf16.gmra.mxu0 %v2354
  %v2615 = vpop.f32.mrf.mxu0
  %v2616 = vadd.f32 %v2519, %v2615
  %v2617 = vpop.f32.mrf.mxu0
  %v2618 = vpop.f32.mrf.mxu0
  %v2619 = vadd.f32 %v2522, %v2618
  %v2620 = vpop.f32.mrf.mxu0
  %2621 = vmatprep.mubr.bf16.mxu0 0
  %2622 = vmatmul.mubr.bf16.gmra.mxu0 %v2357
  %v2623 = vpop.f32.mrf.mxu0
  %v2624 = vadd.f32 %v2527, %v2623
  %v2625 = vpop.f32.mrf.mxu0
  %v2626 = vpop.f32.mrf.mxu0
  %v2627 = vadd.f32 %v2530, %v2626
  %v2628 = vpop.f32.mrf.mxu0
  %2629 = vmatprep.mubr.bf16.mxu0 0
  %2630 = vmatmul.mubr.bf16.gmra.mxu0 %v2360
  %v2631 = vpop.f32.mrf.mxu0
  %v2632 = vadd.f32 %v2535, %v2631
  %v2633 = vpop.f32.mrf.mxu0
  %v2634 = vpop.f32.mrf.mxu0
  %v2635 = vadd.f32 %v2538, %v2634
  %v2636 = vpop.f32.mrf.mxu0
  %2637 = vmatprep.mubr.bf16.mxu0 0
  %2638 = vmatmul.mubr.bf16.gmra.mxu0 %v2363
  %v2639 = vpop.f32.mrf.mxu0
  %v2640 = vadd.f32 %v2543, %v2639
  %v2641 = vpop.f32.mrf.mxu0
  %v2642 = vpop.f32.mrf.mxu0
  %v2643 = vadd.f32 %v2546, %v2642
  %v2644 = vpop.f32.mrf.mxu0
  %2645 = vmatprep.mubr.bf16.mxu0 0
  %2646 = vmatmul.mubr.bf16.gmra.mxu0 %v2366
  %v2647 = vpop.f32.mrf.mxu0
  %v2648 = vadd.f32 %v2551, %v2647
  %v2649 = vpop.f32.mrf.mxu0
  %v2650 = vpop.f32.mrf.mxu0
  %v2651 = vadd.f32 %v2554, %v2650
  %v2652 = vpop.f32.mrf.mxu0
  %2653 = vmatprep.mubr.bf16.mxu0 0
  %2654 = vmatmul.mubr.bf16.gmra.mxu0 %v2369
  %v2655 = vpop.f32.mrf.mxu0
  %v2656 = vadd.f32 %v2559, %v2655
  %v2657 = vpop.f32.mrf.mxu0
  %v2658 = vpop.f32.mrf.mxu0
  %v2659 = vadd.f32 %v2562, %v2658
  %v2660 = vpop.f32.mrf.mxu0
  %2661 = vdwg.mxu0
  %v2662 = vld [vmem:[%s4] sm:$0x1]
  %v2664 = vlaneseq
  %v2665 = vshrl.u32 %v2664, 7
  %v2666 = vsub.s32 0, %v2665
  %v2667 = vrot.slane %v2662, %v2666
  %v2669 = vadd.f32 %v2600, %v2667
  %v2670 = vadd.f32 %v2603, %v2667
  %v2671 = vadd.f32 %v2608, %v2667
  %v2672 = vadd.f32 %v2611, %v2667
  %v2673 = vadd.f32 %v2616, %v2667
  %v2674 = vadd.f32 %v2619, %v2667
  %v2675 = vadd.f32 %v2624, %v2667
  %v2676 = vadd.f32 %v2627, %v2667
  %v2677 = vadd.f32 %v2632, %v2667
  %v2678 = vadd.f32 %v2635, %v2667
  %v2679 = vadd.f32 %v2640, %v2667
  %v2680 = vadd.f32 %v2643, %v2667
  %v2681 = vadd.f32 %v2648, %v2667
  %v2682 = vadd.f32 %v2651, %v2667
  %v2683 = vadd.f32 %v2656, %v2667
  %v2684 = vadd.f32 %v2659, %v2667
  %v2685 = vpack.c.bf16 %v2670, %v2669
  %v2686 = vpack.c.bf16 %v2672, %v2671
  %v2687 = vpack.c.bf16 %v2674, %v2673
  %v2688 = vpack.c.bf16 %v2676, %v2675
  %v2689 = vpack.c.bf16 %v2678, %v2677
  %v2690 = vpack.c.bf16 %v2680, %v2679
  %v2691 = vpack.c.bf16 %v2682, %v2681
  %v2692 = vpack.c.bf16 %v2684, %v2683
  %v2701 = vunpack.c.l.b16 %v2685
  %v2702 = vunpack.c.h.b16 %v2685
  %v2703 = vunpack.c.l.b16 %v2686
  %v2704 = vunpack.c.h.b16 %v2686
  %v2705 = vunpack.c.l.b16 %v2687
  %v2706 = vunpack.c.h.b16 %v2687
  %v2707 = vunpack.c.l.b16 %v2688
  %v2708 = vunpack.c.h.b16 %v2688
  %v2709 = vunpack.c.l.b16 %v2689
  %v2710 = vunpack.c.h.b16 %v2689
  %v2711 = vunpack.c.l.b16 %v2690
  %v2712 = vunpack.c.h.b16 %v2690
  %v2713 = vunpack.c.l.b16 %v2691
  %v2714 = vunpack.c.h.b16 %v2691
  %v2715 = vunpack.c.l.b16 %v2692
  %v2716 = vunpack.c.h.b16 %v2692
  %v2717 = vpack.c.b16 %v2701, %v2701
  %v2718 = vpack.c.b16 %v2702, %v2702
  %v2719 = vpack.c.b16 %v2703, %v2703
  %v2720 = vpack.c.b16 %v2704, %v2704
  %v2721 = vpack.c.b16 %v2705, %v2705
  %v2722 = vpack.c.b16 %v2706, %v2706
  %v2723 = vpack.c.b16 %v2707, %v2707
  %v2724 = vpack.c.b16 %v2708, %v2708
  %v2725 = vpack.c.b16 %v2709, %v2709
  %v2726 = vpack.c.b16 %v2710, %v2710
  %v2727 = vpack.c.b16 %v2711, %v2711
  %v2728 = vpack.c.b16 %v2712, %v2712
  %v2729 = vpack.c.b16 %v2713, %v2713
  %v2730 = vpack.c.b16 %v2714, %v2714
  %v2731 = vpack.c.b16 %v2715, %v2715
  %v2732 = vpack.c.b16 %v2716, %v2716
  %vm2749 = vcmask 519168
  %2750 = vst.msk [vmem:[%s5] sm:$0xf] %vm2749, %v2717
  %2751 = vst.msk [vmem:[%s5 + $0x4] sm:$0xf] %vm2749, %v2718
  %2752 = vst.msk [vmem:[%s5 + $0x8] sm:$0xf] %vm2749, %v2719
  %2753 = vst.msk [vmem:[%s5 + $0xc] sm:$0xf] %vm2749, %v2720
  %2754 = vst.msk [vmem:[%s5 + $0x10] sm:$0xf] %vm2749, %v2721
  %2755 = vst.msk [vmem:[%s5 + $0x14] sm:$0xf] %vm2749, %v2722
  %2756 = vst.msk [vmem:[%s5 + $0x18] sm:$0xf] %vm2749, %v2723
  %2757 = vst.msk [vmem:[%s5 + $0x1c] sm:$0xf] %vm2749, %v2724
  %2758 = vst.msk [vmem:[%s5 + $0x20] sm:$0xf] %vm2749, %v2725
  %2759 = vst.msk [vmem:[%s5 + $0x24] sm:$0xf] %vm2749, %v2726
  %2760 = vst.msk [vmem:[%s5 + $0x28] sm:$0xf] %vm2749, %v2727
  %2761 = vst.msk [vmem:[%s5 + $0x2c] sm:$0xf] %vm2749, %v2728
  %2762 = vst.msk [vmem:[%s5 + $0x30] sm:$0xf] %vm2749, %v2729
  %2763 = vst.msk [vmem:[%s5 + $0x34] sm:$0xf] %vm2749, %v2730
  %2764 = vst.msk [vmem:[%s5 + $0x38] sm:$0xf] %vm2749, %v2731
  %2765 = vst.msk [vmem:[%s5 + $0x3c] sm:$0xf] %vm2749, %v2732
  // Predicated region
  $region26: #{downsample_forward.4} parent=0 // pred_check
    %p2766 = pneg %p134
  $region27: #{downsample_forward.4} parent=0 // pred_check_branch
    %2768 = sbr.rel (%p2766) target = $region29
  $region28: #{downsample_forward.4} parent=0 // pred_region
    %vm2769 = vcmask 516096
    %2770 = vst.msk [vmem:[%s6] sm:$0x1] %vm2769, 0.0
    %2771 = vst.msk [vmem:[%s7] sm:$0x1] %vm2769, 0.0
  $region29: #{downsample_forward.4} parent=0 // pred_fallthru
    _
  %v2772 = vld [vmem:[%s6] sm:$0x1]
  %v2773 = vsel %vm1930, %v2600, 0.0
  %v2774 = vsel %vm1930, %v2603, 0.0
  %v2775 = vadd.f32 %v2773, %v2774
  %v2776 = vsel %vm1930, %v2608, 0.0
  %v2777 = vadd.f32 %v2775, %v2776
  %v2778 = vsel %vm1930, %v2611, 0.0
  %v2779 = vadd.f32 %v2777, %v2778
  %v2780 = vsel %vm1930, %v2616, 0.0
  %v2781 = vadd.f32 %v2779, %v2780
  %v2782 = vsel %vm1930, %v2619, 0.0
  %v2783 = vadd.f32 %v2781, %v2782
  %v2784 = vsel %vm1930, %v2624, 0.0
  %v2785 = vadd.f32 %v2783, %v2784
  %v2786 = vsel %vm1930, %v2627, 0.0
  %v2787 = vadd.f32 %v2785, %v2786
  %v2788 = vsel %vm1930, %v2632, 0.0
  %v2789 = vadd.f32 %v2787, %v2788
  %v2790 = vsel %vm1930, %v2635, 0.0
  %v2791 = vadd.f32 %v2789, %v2790
  %v2792 = vsel %vm1930, %v2640, 0.0
  %v2793 = vadd.f32 %v2791, %v2792
  %v2794 = vsel %vm1930, %v2643, 0.0
  %v2795 = vadd.f32 %v2793, %v2794
  %v2796 = vsel %vm1930, %v2648, 0.0
  %v2797 = vadd.f32 %v2795, %v2796
  %v2798 = vsel %vm1930, %v2651, 0.0
  %v2799 = vadd.f32 %v2797, %v2798
  %v2800 = vsel %vm1930, %v2656, 0.0
  %v2801 = vadd.f32 %v2799, %v2800
  %v2802 = vsel %vm1930, %v2659, 0.0
  %v2803 = vadd.f32 %v2801, %v2802
  %v2804 = vrot.slane %v2803, 4
  %v2805 = vadd.f32 %v2803, %v2804
  %v2806 = vrot.slane %v2805, 2
  %v2807 = vadd.f32 %v2805, %v2806
  %v2808 = vrot.slane %v2807, 1
  %v2809 = vadd.f32 %v2807, %v2808
  %v2810 = vadd.f32 %v2772, %v2809
  %vm2811 = vcmask 516096
  %2812 = vst.msk [vmem:[%s6] sm:$0x1] %vm2811, %v2810
  %v2813 = vld [vmem:[%s7] sm:$0x1]
  %v2814 = vmul.f32 %v2600, %v2600
  %v2815 = vmul.f32 %v2603, %v2603
  %v2816 = vmul.f32 %v2608, %v2608
  %v2817 = vmul.f32 %v2611, %v2611
  %v2818 = vmul.f32 %v2616, %v2616
  %v2819 = vmul.f32 %v2619, %v2619
  %v2820 = vmul.f32 %v2624, %v2624
  %v2821 = vmul.f32 %v2627, %v2627
  %v2822 = vmul.f32 %v2632, %v2632
  %v2823 = vmul.f32 %v2635, %v2635
  %v2824 = vmul.f32 %v2640, %v2640
  %v2825 = vmul.f32 %v2643, %v2643
  %v2826 = vmul.f32 %v2648, %v2648
  %v2827 = vmul.f32 %v2651, %v2651
  %v2828 = vmul.f32 %v2656, %v2656
  %v2829 = vmul.f32 %v2659, %v2659
  %v2830 = vsel %vm1930, %v2814, 0.0
  %v2831 = vsel %vm1930, %v2815, 0.0
  %v2832 = vadd.f32 %v2830, %v2831
  %v2833 = vsel %vm1930, %v2816, 0.0
  %v2834 = vadd.f32 %v2832, %v2833
  %v2835 = vsel %vm1930, %v2817, 0.0
  %v2836 = vadd.f32 %v2834, %v2835
  %v2837 = vsel %vm1930, %v2818, 0.0
  %v2838 = vadd.f32 %v2836, %v2837
  %v2839 = vsel %vm1930, %v2819, 0.0
  %v2840 = vadd.f32 %v2838, %v2839
  %v2841 = vsel %vm1930, %v2820, 0.0
  %v2842 = vadd.f32 %v2840, %v2841
  %v2843 = vsel %vm1930, %v2821, 0.0
  %v2844 = vadd.f32 %v2842, %v2843
  %v2845 = vsel %vm1930, %v2822, 0.0
  %v2846 = vadd.f32 %v2844, %v2845
  %v2847 = vsel %vm1930, %v2823, 0.0
  %v2848 = vadd.f32 %v2846, %v2847
  %v2849 = vsel %vm1930, %v2824, 0.0
  %v2850 = vadd.f32 %v2848, %v2849
  %v2851 = vsel %vm1930, %v2825, 0.0
  %v2852 = vadd.f32 %v2850, %v2851
  %v2853 = vsel %vm1930, %v2826, 0.0
  %v2854 = vadd.f32 %v2852, %v2853
  %v2855 = vsel %vm1930, %v2827, 0.0
  %v2856 = vadd.f32 %v2854, %v2855
  %v2857 = vsel %vm1930, %v2828, 0.0
  %v2858 = vadd.f32 %v2856, %v2857
  %v2859 = vsel %vm1930, %v2829, 0.0
  %v2860 = vadd.f32 %v2858, %v2859
  %v2861 = vrot.slane %v2860, 4
  %v2862 = vadd.f32 %v2860, %v2861
  %v2863 = vrot.slane %v2862, 2
  %v2864 = vadd.f32 %v2862, %v2863
  %v2865 = vrot.slane %v2864, 1
  %v2866 = vadd.f32 %v2864, %v2865
  %v2867 = vadd.f32 %v2813, %v2866
  %2868 = vst.msk [vmem:[%s7] sm:$0x1] %vm2811, %v2867
  // Predicated region
  $region30: #{downsample_forward.4} parent=0 // pred_check
    _
  $region31: #{downsample_forward.4} parent=0 // pred_check_branch
    %2870 = sbr.rel (0) target = $region33
  $region32: #{downsample_forward.4} parent=0 // pred_region
    _
  $region33: #{downsample_forward.4} parent=0 // pred_fallthru
    _
  // Predicated region
  $region34: #{downsample_forward.4} parent=0 // pred_check
    _
  $region35: #{downsample_forward.4} parent=0 // pred_check_branch
    %2872 = sbr.rel (0) target = $region37
  $region36: #{downsample_forward.4} parent=0 // pred_region
    _
  $region37: #{downsample_forward.4} parent=0 // pred_fallthru
    _
  // Predicated region
  $region38: #{downsample_forward.4} parent=0 // pred_check
    _
  $region39: #{downsample_forward.4} parent=0 // pred_check_branch
    %2874 = sbr.rel (0) target = $region41
  $region40: #{downsample_forward.4} parent=0 // pred_region
    _
  $region41: #{downsample_forward.4} parent=0 // pred_fallthru
    _
  // Predicated region
  $region42: #{downsample_forward.4} parent=0 // pred_check
    _
  $region43: #{downsample_forward.4} parent=0 // pred_check_branch
    %2876 = sbr.rel (0) target = $region45
  $region44: #{downsample_forward.4} parent=0 // pred_region
    _
  $region45: #{downsample_forward.4} parent=0 // pred_fallthru
    _
  // Predicated region
  $region46: #{downsample_forward.4} parent=0 // pred_check
    _
  $region47: #{downsample_forward.4} parent=0 // pred_check_branch
    %2878 = sbr.rel (0) target = $region49
  $region48: #{downsample_forward.4} parent=0 // pred_region
    _
  $region49: #{downsample_forward.4} parent=0 // pred_fallthru
    _
  // Predicated region
  $region50: #{downsample_forward.4} parent=0 // pred_check
    _
  $region51: #{downsample_forward.4} parent=0 // pred_check_branch
    %2880 = sbr.rel (0) target = $region53
  $region52: #{downsample_forward.4} parent=0 // pred_region
    _
  $region53: #{downsample_forward.4} parent=0 // pred_fallthru
    _

</llo_original>
